<compile_context>
chip_gen: v7x
topology: tpu7x:2x2x1
jax: 0.10.0
libtpu: 0.0.40
codegen_flags: <defaults>
</compile_context>

<pallas_src>
import functools

import jax
import jax.numpy as jnp
from jax.experimental import pallas as pl
from jax.experimental.pallas import tpu as pltpu


# ---------------------------------------------------------------------------
# LSTM cell gate math (PyTorch gate order: i, f, g, o).
# ---------------------------------------------------------------------------
def _lstm_cell(gates, c_prev, H):
    i_g = jax.nn.sigmoid(gates[:, 0 * H:1 * H])
    f_g = jax.nn.sigmoid(gates[:, 1 * H:2 * H])
    g_g = jnp.tanh(gates[:, 2 * H:3 * H])
    o_g = jax.nn.sigmoid(gates[:, 3 * H:4 * H])
    c_new = f_g * c_prev + i_g * g_g
    h_new = o_g * jnp.tanh(c_new)
    return h_new, c_new


# ---------------------------------------------------------------------------
# Fused kernel: all layers + both directions + fc head, fully VMEM-resident.
#
# refs layout:
#   inputs : x_flat, (wih_cat_l, whh_blk_l, bias_l) * num_layers, fc_wT, fc_b
#   outputs: out (Bp, 1)
#   scratch: gin_f, gin_b (T*Bp, 4H), seq_f, seq_b (T*Bp, H)
# ---------------------------------------------------------------------------
def _rnn_kernel(*refs, T, Bp, H, num_layers):
    n_in = 1 + 3 * num_layers + 2
    x_ref = refs[0]
    fcw_ref = refs[n_in - 2]
    fcb_ref = refs[n_in - 1]
    out_ref = refs[n_in]
    gin_f, gin_b, seq_f, seq_b = refs[n_in + 1:n_in + 5]

    G = 4 * H
    h_f_last = None       # last layer: forward hidden at time T-1
    h_b_at_T = None       # last layer: backward hidden aligned to time T-1

    for l in range(num_layers):
        wih_ref = refs[1 + 3 * l]     # (D_l, 8H)  [fwd gates | bwd gates]
        whh_ref = refs[2 + 3 * l]     # (2H, 8H)   block-diag(Whh_f^T, Whh_b^T)
        b_ref = refs[3 + 3 * l]       # (1, 8H)

        # ---- hoisted input projection for ALL timesteps (one big matmul) ----
        bias = b_ref[...]
        if l == 0:
            gin = jnp.dot(x_ref[...], wih_ref[...],
                          preferred_element_type=jnp.float32) + bias
        else:
            w = wih_ref[...]          # rows [:H] act on fwd half, [H:] on bwd
            gin = (jnp.dot(seq_f[...], w[:H, :],
                           preferred_element_type=jnp.float32)
                   + jnp.dot(seq_b[...], w[H:, :],
                             preferred_element_type=jnp.float32)
                   + bias)
        gin_f[...] = gin[:, :G]       # (T*Bp, 4H) forward pre-activations
        gin_b[...] = gin[:, G:]       # (T*Bp, 4H) backward pre-activations

        whh = whh_ref[...]            # hoisted weight load (block-diagonal)

        zeros = jnp.zeros((Bp, H), jnp.float32)
        h_f, c_f, h_b, c_b = zeros, zeros, zeros, zeros

        # Static (fully unrolled) time loop: fwd & bwd recurrences fused so the
        # recurrent update is a single (Bp, 2H) x (2H, 8H) MXU matmul per step.
        for t in range(T):
            rt = T - 1 - t
            hcat = jnp.concatenate([h_f, h_b], axis=1)          # (Bp, 2H)
            rec = jnp.dot(hcat, whh,
                          preferred_element_type=jnp.float32)   # (Bp, 8H)
            g_f = gin_f[t * Bp:(t + 1) * Bp, :] + rec[:, :G]
            g_b = gin_b[rt * Bp:(rt + 1) * Bp, :] + rec[:, G:]
            h_f, c_f = _lstm_cell(g_f, c_f, H)
            h_b, c_b = _lstm_cell(g_b, c_b, H)
            if t == 0:
                h_b_at_T = h_b        # backward output at original time T-1
            if l < num_layers - 1:    # only next layer needs the full sequence
                seq_f[t * Bp:(t + 1) * Bp, :] = h_f
                seq_b[rt * Bp:(rt + 1) * Bp, :] = h_b
        h_f_last = h_f

    # ---- fused fc head: out = [h_f(T-1) | h_b(T-1)] @ fc_w^T + fc_b ----
    fcw = fcw_ref[...]                # (2H, 1)
    out_ref[...] = (
        jnp.dot(h_f_last, fcw[:H, :], preferred_element_type=jnp.float32)
        + jnp.dot(h_b_at_T, fcw[H:, :], preferred_element_type=jnp.float32)
        + fcb_ref[...])


# ---------------------------------------------------------------------------
# Wrapper: prepares fused/transposed weights and calls the kernel once.
# ---------------------------------------------------------------------------
def rnn_base_forward(x_btd, params, hidden_size, num_layers):
    B, T, D = x_btd.shape
    H = hidden_size
    Bp = ((B + 7) // 8) * 8           # pad batch to a full sublane tile

    # (B, T, D) -> time-major, batch-padded, row-flattened (T*Bp, D)
    x_tbd = jnp.transpose(x_btd, (1, 0, 2)).astype(jnp.float32)
    x_tbd = jnp.pad(x_tbd, ((0, 0), (0, Bp - B), (0, 0)))
    x_flat = x_tbd.reshape(T * Bp, D)

    inputs = [x_flat]
    for l in range(num_layers):
        p = params[f"layer{l}"]
        # Input weights of both directions concatenated along the gate axis.
        wih_cat = jnp.concatenate(
            [jnp.transpose(p["w_ih_f"]), jnp.transpose(p["w_ih_b"])], axis=1)
        # Block-diagonal recurrent weights: [h_f | h_b] @ whh_blk does both
        # directions' hidden matmuls in one MXU op.
        zero = jnp.zeros((H, 4 * H), jnp.float32)
        whh_blk = jnp.concatenate([
            jnp.concatenate([jnp.transpose(p["w_hh_f"]), zero], axis=1),
            jnp.concatenate([zero, jnp.transpose(p["w_hh_b"])], axis=1),
        ], axis=0)                                     # (2H, 8H)
        bias = jnp.concatenate([p["b_ih_f"] + p["b_hh_f"],
                                p["b_ih_b"] + p["b_hh_b"]]).reshape(1, 8 * H)
        inputs += [wih_cat, whh_blk, bias]
    inputs += [jnp.transpose(params["fc_w"]),          # (2H, 1)
               params["fc_b"].reshape(1, 1)]           # (1, 1)

    kernel = functools.partial(_rnn_kernel, T=T, Bp=Bp, H=H,
                               num_layers=num_layers)
    out = pl.pallas_call(
        kernel,
        out_shape=jax.ShapeDtypeStruct((Bp, 1), jnp.float32),
        scratch_shapes=[
            pltpu.VMEM((T * Bp, 4 * H), jnp.float32),  # gin_f
            pltpu.VMEM((T * Bp, 4 * H), jnp.float32),  # gin_b
            pltpu.VMEM((T * Bp, H), jnp.float32),      # seq_f
            pltpu.VMEM((T * Bp, H), jnp.float32),      # seq_b
        ],
    )(*inputs)
    return out[:B]


# ---------------------------------------------------------------------------
# Deterministic parameter init (PyTorch-style U(-1/sqrt(H), 1/sqrt(H))).
# ---------------------------------------------------------------------------
def init_params(key, input_size, hidden_size, num_layers):
    params = {}
    H = hidden_size
    bound = 1.0 / jnp.sqrt(jnp.float32(H))

    def u(key, shape, b):
        return jax.random.uniform(key, shape, jnp.float32, -b, b)

    for l in range(num_layers):
        in_dim = input_size if l == 0 else 2 * H
        keys = jax.random.split(jax.random.fold_in(key, l), 8)
        params[f"layer{l}"] = {
            "w_ih_f": u(keys[0], (4 * H, in_dim), bound),
            "w_hh_f": u(keys[1], (4 * H, H), bound),
            "b_ih_f": u(keys[2], (4 * H,), bound),
            "b_hh_f": u(keys[3], (4 * H,), bound),
            "w_ih_b": u(keys[4], (4 * H, in_dim), bound),
            "w_hh_b": u(keys[5], (4 * H, H), bound),
            "b_ih_b": u(keys[6], (4 * H,), bound),
            "b_hh_b": u(keys[7], (4 * H,), bound),
        }
    kf = jax.random.split(jax.random.fold_in(key, 10_000), 2)
    fc_bound = 1.0 / jnp.sqrt(jnp.float32(2 * H))
    params["fc_w"] = u(kf[0], (1, 2 * H), fc_bound)
    params["fc_b"] = u(kf[1], (1,), fc_bound)
    return params


if __name__ == "__main__":
    # Small shapes consistent with the module.
    batch, seq_length, input_size, hidden_size, num_layers = 2, 8, 4, 32, 2

    key = jax.random.PRNGKey(0)
    k_x, k_p = jax.random.split(key)
    x = jax.random.normal(k_x, (batch, seq_length, input_size), jnp.float32)
    params = init_params(k_p, input_size, hidden_size, num_layers)

    fwd = jax.jit(functools.partial(rnn_base_forward,
                                    hidden_size=hidden_size,
                                    num_layers=num_layers))
    out = fwd(x, params)
    jax.block_until_ready(out)
    assert out.shape == (batch, 1)
    assert bool(jnp.all(jnp.isfinite(out)))
    print("KERNEL_OK")
</pallas_src>

<mosaic_0001>
module attributes {stable_mosaic.version = 11 : i64} {
  func.func @_rnn_kernel(%arg0: memref<64x4xf32, #tpu.memory_space<vmem>>, %arg1: memref<4x256xf32, #tpu.memory_space<vmem>>, %arg2: memref<64x256xf32, #tpu.memory_space<vmem>>, %arg3: memref<1x256xf32, #tpu.memory_space<vmem>>, %arg4: memref<64x256xf32, #tpu.memory_space<vmem>>, %arg5: memref<64x256xf32, #tpu.memory_space<vmem>>, %arg6: memref<1x256xf32, #tpu.memory_space<vmem>>, %arg7: memref<64x1xf32, #tpu.memory_space<vmem>>, %arg8: memref<1x1xf32, #tpu.memory_space<vmem>>, %arg9: memref<8x1xf32, #tpu.memory_space<vmem>>, %arg10: memref<64x128xf32, #tpu.memory_space<vmem>>, %arg11: memref<64x128xf32, #tpu.memory_space<vmem>>, %arg12: memref<64x32xf32, #tpu.memory_space<vmem>>, %arg13: memref<64x32xf32, #tpu.memory_space<vmem>>) attributes {dimension_semantics = [], scalar_prefetch = 0 : i64, scratch_operands = 4 : i64, tpu.core_type = #tpu.core_type<tc>} {
    %c0 = arith.constant 0 : index
    %c0_0 = arith.constant 0 : index
    %0 = vector.load %arg3[%c0, %c0_0] : memref<1x256xf32, #tpu.memory_space<vmem>>, vector<1x256xf32>
    %c0_1 = arith.constant 0 : index
    %c0_2 = arith.constant 0 : index
    %1 = vector.load %arg0[%c0_1, %c0_2] : memref<64x4xf32, #tpu.memory_space<vmem>>, vector<64x4xf32>
    %c0_3 = arith.constant 0 : index
    %c0_4 = arith.constant 0 : index
    %2 = vector.load %arg1[%c0_3, %c0_4] : memref<4x256xf32, #tpu.memory_space<vmem>>, vector<4x256xf32>
    %cst = arith.constant dense<0.000000e+00> : vector<64x256xf32>
    %3 = tpu.matmul %1, %2, %cst {dimension_numbers = #tpu.dot_dimension_numbers<[1], [0], [0], [1], [0, 0, 1, 1], [], []>} : vector<64x4xf32>, vector<4x256xf32>, vector<64x256xf32> -> vector<64x256xf32>
    %4 = vector.broadcast %0 : vector<1x256xf32> to vector<64x256xf32>
    %5 = arith.addf %3, %4 : vector<64x256xf32>
    %6 = vector.extract_strided_slice %5 {offsets = [0, 0], sizes = [64, 128], strides = [1, 1]} : vector<64x256xf32> to vector<64x128xf32>
    %c0_5 = arith.constant 0 : index
    %c0_6 = arith.constant 0 : index
    %7 = vector.load %arg10[%c0_5, %c0_6] : memref<64x128xf32, #tpu.memory_space<vmem>>, vector<64x128xf32>
    tpu.vector_store %arg10[%c0_5, %c0_6], %6 {strides = array<i32>} : memref<64x128xf32, #tpu.memory_space<vmem>>, vector<64x128xf32>,
    %8 = vector.extract_strided_slice %5 {offsets = [0, 128], sizes = [64, 128], strides = [1, 1]} : vector<64x256xf32> to vector<64x128xf32>
    %c0_7 = arith.constant 0 : index
    %c0_8 = arith.constant 0 : index
    %9 = vector.load %arg11[%c0_7, %c0_8] : memref<64x128xf32, #tpu.memory_space<vmem>>, vector<64x128xf32>
    tpu.vector_store %arg11[%c0_7, %c0_8], %8 {strides = array<i32>} : memref<64x128xf32, #tpu.memory_space<vmem>>, vector<64x128xf32>,
    %c0_9 = arith.constant 0 : index
    %c0_10 = arith.constant 0 : index
    %10 = vector.load %arg2[%c0_9, %c0_10] : memref<64x256xf32, #tpu.memory_space<vmem>>, vector<64x256xf32>
    %cst_11 = arith.constant 0.000000e+00 : f32
    %11 = vector.broadcast %cst_11 : f32 to vector<8x32xf32>
    %12 = tpu.concatenate %11, %11 in 1 : vector<8x32xf32>, vector<8x32xf32> -> vector<8x64xf32>
    %cst_12 = arith.constant dense<0.000000e+00> : vector<8x256xf32>
    %13 = tpu.matmul %12, %10, %cst_12 {dimension_numbers = #tpu.dot_dimension_numbers<[1], [0], [0], [1], [0, 0, 1, 1], [], []>} : vector<8x64xf32>, vector<64x256xf32>, vector<8x256xf32> -> vector<8x256xf32>
    %c0_13 = arith.constant 0 : index
    %c0_14 = arith.constant 0 : index
    %14 = vector.load %arg10[%c0_13, %c0_14] : memref<64x128xf32, #tpu.memory_space<vmem>>, vector<8x128xf32>
    %15 = vector.extract_strided_slice %13 {offsets = [0, 0], sizes = [8, 128], strides = [1, 1]} : vector<8x256xf32> to vector<8x128xf32>
    %16 = arith.addf %14, %15 : vector<8x128xf32>
    %c56 = arith.constant 56 : index
    %c0_15 = arith.constant 0 : index
    %17 = vector.load %arg11[%c56, %c0_15] : memref<64x128xf32, #tpu.memory_space<vmem>>, vector<8x128xf32>
    %18 = vector.extract_strided_slice %13 {offsets = [0, 128], sizes = [8, 128], strides = [1, 1]} : vector<8x256xf32> to vector<8x128xf32>
    %19 = arith.addf %17, %18 : vector<8x128xf32>
    %20 = vector.extract_strided_slice %16 {offsets = [0, 0], sizes = [8, 32], strides = [1, 1]} : vector<8x128xf32> to vector<8x32xf32>
    %21 = arith.negf %20 : vector<8x32xf32>
    %22 = math.exp %21 : vector<8x32xf32>
    %cst_16 = arith.constant 1.000000e+00 : f32
    %23 = vector.broadcast %cst_16 : f32 to vector<8x32xf32>
    %24 = arith.addf %23, %22 : vector<8x32xf32>
    %25 = arith.divf %23, %24 : vector<8x32xf32>
    %26 = vector.extract_strided_slice %16 {offsets = [0, 32], sizes = [8, 32], strides = [1, 1]} : vector<8x128xf32> to vector<8x32xf32>
    %27 = arith.negf %26 : vector<8x32xf32>
    %28 = math.exp %27 : vector<8x32xf32>
    %cst_17 = arith.constant 1.000000e+00 : f32
    %29 = vector.broadcast %cst_17 : f32 to vector<8x32xf32>
    %30 = arith.addf %29, %28 : vector<8x32xf32>
    %31 = arith.divf %29, %30 : vector<8x32xf32>
    %32 = vector.extract_strided_slice %16 {offsets = [0, 64], sizes = [8, 32], strides = [1, 1]} : vector<8x128xf32> to vector<8x32xf32>
    %33 = math.tanh %32 : vector<8x32xf32>
    %34 = vector.extract_strided_slice %16 {offsets = [0, 96], sizes = [8, 32], strides = [1, 1]} : vector<8x128xf32> to vector<8x32xf32>
    %35 = arith.negf %34 : vector<8x32xf32>
    %36 = math.exp %35 : vector<8x32xf32>
    %cst_18 = arith.constant 1.000000e+00 : f32
    %37 = vector.broadcast %cst_18 : f32 to vector<8x32xf32>
    %38 = arith.addf %37, %36 : vector<8x32xf32>
    %39 = arith.divf %37, %38 : vector<8x32xf32>
    %40 = arith.mulf %31, %11 : vector<8x32xf32>
    %41 = arith.mulf %25, %33 : vector<8x32xf32>
    %42 = arith.addf %40, %41 : vector<8x32xf32>
    %43 = math.tanh %42 : vector<8x32xf32>
    %44 = arith.mulf %39, %43 : vector<8x32xf32>
    %45 = vector.extract_strided_slice %19 {offsets = [0, 0], sizes = [8, 32], strides = [1, 1]} : vector<8x128xf32> to vector<8x32xf32>
    %46 = arith.negf %45 : vector<8x32xf32>
    %47 = math.exp %46 : vector<8x32xf32>
    %cst_19 = arith.constant 1.000000e+00 : f32
    %48 = vector.broadcast %cst_19 : f32 to vector<8x32xf32>
    %49 = arith.addf %48, %47 : vector<8x32xf32>
    %50 = arith.divf %48, %49 : vector<8x32xf32>
    %51 = vector.extract_strided_slice %19 {offsets = [0, 32], sizes = [8, 32], strides = [1, 1]} : vector<8x128xf32> to vector<8x32xf32>
    %52 = arith.negf %51 : vector<8x32xf32>
    %53 = math.exp %52 : vector<8x32xf32>
    %cst_20 = arith.constant 1.000000e+00 : f32
    %54 = vector.broadcast %cst_20 : f32 to vector<8x32xf32>
    %55 = arith.addf %54, %53 : vector<8x32xf32>
    %56 = arith.divf %54, %55 : vector<8x32xf32>
    %57 = vector.extract_strided_slice %19 {offsets = [0, 64], sizes = [8, 32], strides = [1, 1]} : vector<8x128xf32> to vector<8x32xf32>
    %58 = math.tanh %57 : vector<8x32xf32>
    %59 = vector.extract_strided_slice %19 {offsets = [0, 96], sizes = [8, 32], strides = [1, 1]} : vector<8x128xf32> to vector<8x32xf32>
    %60 = arith.negf %59 : vector<8x32xf32>
    %61 = math.exp %60 : vector<8x32xf32>
    %cst_21 = arith.constant 1.000000e+00 : f32
    %62 = vector.broadcast %cst_21 : f32 to vector<8x32xf32>
    %63 = arith.addf %62, %61 : vector<8x32xf32>
    %64 = arith.divf %62, %63 : vector<8x32xf32>
    %65 = arith.mulf %56, %11 : vector<8x32xf32>
    %66 = arith.mulf %50, %58 : vector<8x32xf32>
    %67 = arith.addf %65, %66 : vector<8x32xf32>
    %68 = math.tanh %67 : vector<8x32xf32>
    %69 = arith.mulf %64, %68 : vector<8x32xf32>
    %c0_22 = arith.constant 0 : index
    %c0_23 = arith.constant 0 : index
    %70 = vector.load %arg12[%c0_22, %c0_23] : memref<64x32xf32, #tpu.memory_space<vmem>>, vector<8x32xf32>
    tpu.vector_store %arg12[%c0_22, %c0_23], %44 {strides = array<i32>} : memref<64x32xf32, #tpu.memory_space<vmem>>, vector<8x32xf32>,
    %c56_24 = arith.constant 56 : index
    %c0_25 = arith.constant 0 : index
    %71 = vector.load %arg13[%c56_24, %c0_25] : memref<64x32xf32, #tpu.memory_space<vmem>>, vector<8x32xf32>
    tpu.vector_store %arg13[%c56_24, %c0_25], %69 {strides = array<i32>} : memref<64x32xf32, #tpu.memory_space<vmem>>, vector<8x32xf32>,
    %72 = tpu.concatenate %44, %69 in 1 : vector<8x32xf32>, vector<8x32xf32> -> vector<8x64xf32>
    %cst_26 = arith.constant dense<0.000000e+00> : vector<8x256xf32>
    %73 = tpu.matmul %72, %10, %cst_26 {dimension_numbers = #tpu.dot_dimension_numbers<[1], [0], [0], [1], [0, 0, 1, 1], [], []>} : vector<8x64xf32>, vector<64x256xf32>, vector<8x256xf32> -> vector<8x256xf32>
    %c8 = arith.constant 8 : index
    %c0_27 = arith.constant 0 : index
    %74 = vector.load %arg10[%c8, %c0_27] : memref<64x128xf32, #tpu.memory_space<vmem>>, vector<8x128xf32>
    %75 = vector.extract_strided_slice %73 {offsets = [0, 0], sizes = [8, 128], strides = [1, 1]} : vector<8x256xf32> to vector<8x128xf32>
    %76 = arith.addf %74, %75 : vector<8x128xf32>
    %c48 = arith.constant 48 : index
    %c0_28 = arith.constant 0 : index
    %77 = vector.load %arg11[%c48, %c0_28] : memref<64x128xf32, #tpu.memory_space<vmem>>, vector<8x128xf32>
    %78 = vector.extract_strided_slice %73 {offsets = [0, 128], sizes = [8, 128], strides = [1, 1]} : vector<8x256xf32> to vector<8x128xf32>
    %79 = arith.addf %77, %78 : vector<8x128xf32>
    %80 = vector.extract_strided_slice %76 {offsets = [0, 0], sizes = [8, 32], strides = [1, 1]} : vector<8x128xf32> to vector<8x32xf32>
    %81 = arith.negf %80 : vector<8x32xf32>
    %82 = math.exp %81 : vector<8x32xf32>
    %cst_29 = arith.constant 1.000000e+00 : f32
    %83 = vector.broadcast %cst_29 : f32 to vector<8x32xf32>
    %84 = arith.addf %83, %82 : vector<8x32xf32>
    %85 = arith.divf %83, %84 : vector<8x32xf32>
    %86 = vector.extract_strided_slice %76 {offsets = [0, 32], sizes = [8, 32], strides = [1, 1]} : vector<8x128xf32> to vector<8x32xf32>
    %87 = arith.negf %86 : vector<8x32xf32>
    %88 = math.exp %87 : vector<8x32xf32>
    %cst_30 = arith.constant 1.000000e+00 : f32
    %89 = vector.broadcast %cst_30 : f32 to vector<8x32xf32>
    %90 = arith.addf %89, %88 : vector<8x32xf32>
    %91 = arith.divf %89, %90 : vector<8x32xf32>
    %92 = vector.extract_strided_slice %76 {offsets = [0, 64], sizes = [8, 32], strides = [1, 1]} : vector<8x128xf32> to vector<8x32xf32>
    %93 = math.tanh %92 : vector<8x32xf32>
    %94 = vector.extract_strided_slice %76 {offsets = [0, 96], sizes = [8, 32], strides = [1, 1]} : vector<8x128xf32> to vector<8x32xf32>
    %95 = arith.negf %94 : vector<8x32xf32>
    %96 = math.exp %95 : vector<8x32xf32>
    %cst_31 = arith.constant 1.000000e+00 : f32
    %97 = vector.broadcast %cst_31 : f32 to vector<8x32xf32>
    %98 = arith.addf %97, %96 : vector<8x32xf32>
    %99 = arith.divf %97, %98 : vector<8x32xf32>
    %100 = arith.mulf %91, %42 : vector<8x32xf32>
    %101 = arith.mulf %85, %93 : vector<8x32xf32>
    %102 = arith.addf %100, %101 : vector<8x32xf32>
    %103 = math.tanh %102 : vector<8x32xf32>
    %104 = arith.mulf %99, %103 : vector<8x32xf32>
    %105 = vector.extract_strided_slice %79 {offsets = [0, 0], sizes = [8, 32], strides = [1, 1]} : vector<8x128xf32> to vector<8x32xf32>
    %106 = arith.negf %105 : vector<8x32xf32>
    %107 = math.exp %106 : vector<8x32xf32>
    %cst_32 = arith.constant 1.000000e+00 : f32
    %108 = vector.broadcast %cst_32 : f32 to vector<8x32xf32>
    %109 = arith.addf %108, %107 : vector<8x32xf32>
    %110 = arith.divf %108, %109 : vector<8x32xf32>
    %111 = vector.extract_strided_slice %79 {offsets = [0, 32], sizes = [8, 32], strides = [1, 1]} : vector<8x128xf32> to vector<8x32xf32>
    %112 = arith.negf %111 : vector<8x32xf32>
    %113 = math.exp %112 : vector<8x32xf32>
    %cst_33 = arith.constant 1.000000e+00 : f32
    %114 = vector.broadcast %cst_33 : f32 to vector<8x32xf32>
    %115 = arith.addf %114, %113 : vector<8x32xf32>
    %116 = arith.divf %114, %115 : vector<8x32xf32>
    %117 = vector.extract_strided_slice %79 {offsets = [0, 64], sizes = [8, 32], strides = [1, 1]} : vector<8x128xf32> to vector<8x32xf32>
    %118 = math.tanh %117 : vector<8x32xf32>
    %119 = vector.extract_strided_slice %79 {offsets = [0, 96], sizes = [8, 32], strides = [1, 1]} : vector<8x128xf32> to vector<8x32xf32>
    %120 = arith.negf %119 : vector<8x32xf32>
    %121 = math.exp %120 : vector<8x32xf32>
    %cst_34 = arith.constant 1.000000e+00 : f32
    %122 = vector.broadcast %cst_34 : f32 to vector<8x32xf32>
    %123 = arith.addf %122, %121 : vector<8x32xf32>
    %124 = arith.divf %122, %123 : vector<8x32xf32>
    %125 = arith.mulf %116, %67 : vector<8x32xf32>
    %126 = arith.mulf %110, %118 : vector<8x32xf32>
    %127 = arith.addf %125, %126 : vector<8x32xf32>
    %128 = math.tanh %127 : vector<8x32xf32>
    %129 = arith.mulf %124, %128 : vector<8x32xf32>
    %c8_35 = arith.constant 8 : index
    %c0_36 = arith.constant 0 : index
    %130 = vector.load %arg12[%c8_35, %c0_36] : memref<64x32xf32, #tpu.memory_space<vmem>>, vector<8x32xf32>
    tpu.vector_store %arg12[%c8_35, %c0_36], %104 {strides = array<i32>} : memref<64x32xf32, #tpu.memory_space<vmem>>, vector<8x32xf32>,
    %c48_37 = arith.constant 48 : index
    %c0_38 = arith.constant 0 : index
    %131 = vector.load %arg13[%c48_37, %c0_38] : memref<64x32xf32, #tpu.memory_space<vmem>>, vector<8x32xf32>
    tpu.vector_store %arg13[%c48_37, %c0_38], %129 {strides = array<i32>} : memref<64x32xf32, #tpu.memory_space<vmem>>, vector<8x32xf32>,
    %132 = tpu.concatenate %104, %129 in 1 : vector<8x32xf32>, vector<8x32xf32> -> vector<8x64xf32>
    %cst_39 = arith.constant dense<0.000000e+00> : vector<8x256xf32>
    %133 = tpu.matmul %132, %10, %cst_39 {dimension_numbers = #tpu.dot_dimension_numbers<[1], [0], [0], [1], [0, 0, 1, 1], [], []>} : vector<8x64xf32>, vector<64x256xf32>, vector<8x256xf32> -> vector<8x256xf32>
    %c16 = arith.constant 16 : index
    %c0_40 = arith.constant 0 : index
    %134 = vector.load %arg10[%c16, %c0_40] : memref<64x128xf32, #tpu.memory_space<vmem>>, vector<8x128xf32>
    %135 = vector.extract_strided_slice %133 {offsets = [0, 0], sizes = [8, 128], strides = [1, 1]} : vector<8x256xf32> to vector<8x128xf32>
    %136 = arith.addf %134, %135 : vector<8x128xf32>
    %c40 = arith.constant 40 : index
    %c0_41 = arith.constant 0 : index
    %137 = vector.load %arg11[%c40, %c0_41] : memref<64x128xf32, #tpu.memory_space<vmem>>, vector<8x128xf32>
    %138 = vector.extract_strided_slice %133 {offsets = [0, 128], sizes = [8, 128], strides = [1, 1]} : vector<8x256xf32> to vector<8x128xf32>
    %139 = arith.addf %137, %138 : vector<8x128xf32>
    %140 = vector.extract_strided_slice %136 {offsets = [0, 0], sizes = [8, 32], strides = [1, 1]} : vector<8x128xf32> to vector<8x32xf32>
    %141 = arith.negf %140 : vector<8x32xf32>
    %142 = math.exp %141 : vector<8x32xf32>
    %cst_42 = arith.constant 1.000000e+00 : f32
    %143 = vector.broadcast %cst_42 : f32 to vector<8x32xf32>
    %144 = arith.addf %143, %142 : vector<8x32xf32>
    %145 = arith.divf %143, %144 : vector<8x32xf32>
    %146 = vector.extract_strided_slice %136 {offsets = [0, 32], sizes = [8, 32], strides = [1, 1]} : vector<8x128xf32> to vector<8x32xf32>
    %147 = arith.negf %146 : vector<8x32xf32>
    %148 = math.exp %147 : vector<8x32xf32>
    %cst_43 = arith.constant 1.000000e+00 : f32
    %149 = vector.broadcast %cst_43 : f32 to vector<8x32xf32>
    %150 = arith.addf %149, %148 : vector<8x32xf32>
    %151 = arith.divf %149, %150 : vector<8x32xf32>
    %152 = vector.extract_strided_slice %136 {offsets = [0, 64], sizes = [8, 32], strides = [1, 1]} : vector<8x128xf32> to vector<8x32xf32>
    %153 = math.tanh %152 : vector<8x32xf32>
    %154 = vector.extract_strided_slice %136 {offsets = [0, 96], sizes = [8, 32], strides = [1, 1]} : vector<8x128xf32> to vector<8x32xf32>
    %155 = arith.negf %154 : vector<8x32xf32>
    %156 = math.exp %155 : vector<8x32xf32>
    %cst_44 = arith.constant 1.000000e+00 : f32
    %157 = vector.broadcast %cst_44 : f32 to vector<8x32xf32>
    %158 = arith.addf %157, %156 : vector<8x32xf32>
    %159 = arith.divf %157, %158 : vector<8x32xf32>
    %160 = arith.mulf %151, %102 : vector<8x32xf32>
    %161 = arith.mulf %145, %153 : vector<8x32xf32>
    %162 = arith.addf %160, %161 : vector<8x32xf32>
    %163 = math.tanh %162 : vector<8x32xf32>
    %164 = arith.mulf %159, %163 : vector<8x32xf32>
    %165 = vector.extract_strided_slice %139 {offsets = [0, 0], sizes = [8, 32], strides = [1, 1]} : vector<8x128xf32> to vector<8x32xf32>
    %166 = arith.negf %165 : vector<8x32xf32>
    %167 = math.exp %166 : vector<8x32xf32>
    %cst_45 = arith.constant 1.000000e+00 : f32
    %168 = vector.broadcast %cst_45 : f32 to vector<8x32xf32>
    %169 = arith.addf %168, %167 : vector<8x32xf32>
    %170 = arith.divf %168, %169 : vector<8x32xf32>
    %171 = vector.extract_strided_slice %139 {offsets = [0, 32], sizes = [8, 32], strides = [1, 1]} : vector<8x128xf32> to vector<8x32xf32>
    %172 = arith.negf %171 : vector<8x32xf32>
    %173 = math.exp %172 : vector<8x32xf32>
    %cst_46 = arith.constant 1.000000e+00 : f32
    %174 = vector.broadcast %cst_46 : f32 to vector<8x32xf32>
    %175 = arith.addf %174, %173 : vector<8x32xf32>
    %176 = arith.divf %174, %175 : vector<8x32xf32>
    %177 = vector.extract_strided_slice %139 {offsets = [0, 64], sizes = [8, 32], strides = [1, 1]} : vector<8x128xf32> to vector<8x32xf32>
    %178 = math.tanh %177 : vector<8x32xf32>
    %179 = vector.extract_strided_slice %139 {offsets = [0, 96], sizes = [8, 32], strides = [1, 1]} : vector<8x128xf32> to vector<8x32xf32>
    %180 = arith.negf %179 : vector<8x32xf32>
    %181 = math.exp %180 : vector<8x32xf32>
    %cst_47 = arith.constant 1.000000e+00 : f32
    %182 = vector.broadcast %cst_47 : f32 to vector<8x32xf32>
    %183 = arith.addf %182, %181 : vector<8x32xf32>
    %184 = arith.divf %182, %183 : vector<8x32xf32>
    %185 = arith.mulf %176, %127 : vector<8x32xf32>
    %186 = arith.mulf %170, %178 : vector<8x32xf32>
    %187 = arith.addf %185, %186 : vector<8x32xf32>
    %188 = math.tanh %187 : vector<8x32xf32>
    %189 = arith.mulf %184, %188 : vector<8x32xf32>
    %c16_48 = arith.constant 16 : index
    %c0_49 = arith.constant 0 : index
    %190 = vector.load %arg12[%c16_48, %c0_49] : memref<64x32xf32, #tpu.memory_space<vmem>>, vector<8x32xf32>
    tpu.vector_store %arg12[%c16_48, %c0_49], %164 {strides = array<i32>} : memref<64x32xf32, #tpu.memory_space<vmem>>, vector<8x32xf32>,
    %c40_50 = arith.constant 40 : index
    %c0_51 = arith.constant 0 : index
    %191 = vector.load %arg13[%c40_50, %c0_51] : memref<64x32xf32, #tpu.memory_space<vmem>>, vector<8x32xf32>
    tpu.vector_store %arg13[%c40_50, %c0_51], %189 {strides = array<i32>} : memref<64x32xf32, #tpu.memory_space<vmem>>, vector<8x32xf32>,
    %192 = tpu.concatenate %164, %189 in 1 : vector<8x32xf32>, vector<8x32xf32> -> vector<8x64xf32>
    %cst_52 = arith.constant dense<0.000000e+00> : vector<8x256xf32>
    %193 = tpu.matmul %192, %10, %cst_52 {dimension_numbers = #tpu.dot_dimension_numbers<[1], [0], [0], [1], [0, 0, 1, 1], [], []>} : vector<8x64xf32>, vector<64x256xf32>, vector<8x256xf32> -> vector<8x256xf32>
    %c24 = arith.constant 24 : index
    %c0_53 = arith.constant 0 : index
    %194 = vector.load %arg10[%c24, %c0_53] : memref<64x128xf32, #tpu.memory_space<vmem>>, vector<8x128xf32>
    %195 = vector.extract_strided_slice %193 {offsets = [0, 0], sizes = [8, 128], strides = [1, 1]} : vector<8x256xf32> to vector<8x128xf32>
    %196 = arith.addf %194, %195 : vector<8x128xf32>
    %c32 = arith.constant 32 : index
    %c0_54 = arith.constant 0 : index
    %197 = vector.load %arg11[%c32, %c0_54] : memref<64x128xf32, #tpu.memory_space<vmem>>, vector<8x128xf32>
    %198 = vector.extract_strided_slice %193 {offsets = [0, 128], sizes = [8, 128], strides = [1, 1]} : vector<8x256xf32> to vector<8x128xf32>
    %199 = arith.addf %197, %198 : vector<8x128xf32>
    %200 = vector.extract_strided_slice %196 {offsets = [0, 0], sizes = [8, 32], strides = [1, 1]} : vector<8x128xf32> to vector<8x32xf32>
    %201 = arith.negf %200 : vector<8x32xf32>
    %202 = math.exp %201 : vector<8x32xf32>
    %cst_55 = arith.constant 1.000000e+00 : f32
    %203 = vector.broadcast %cst_55 : f32 to vector<8x32xf32>
    %204 = arith.addf %203, %202 : vector<8x32xf32>
    %205 = arith.divf %203, %204 : vector<8x32xf32>
    %206 = vector.extract_strided_slice %196 {offsets = [0, 32], sizes = [8, 32], strides = [1, 1]} : vector<8x128xf32> to vector<8x32xf32>
    %207 = arith.negf %206 : vector<8x32xf32>
    %208 = math.exp %207 : vector<8x32xf32>
    %cst_56 = arith.constant 1.000000e+00 : f32
    %209 = vector.broadcast %cst_56 : f32 to vector<8x32xf32>
    %210 = arith.addf %209, %208 : vector<8x32xf32>
    %211 = arith.divf %209, %210 : vector<8x32xf32>
    %212 = vector.extract_strided_slice %196 {offsets = [0, 64], sizes = [8, 32], strides = [1, 1]} : vector<8x128xf32> to vector<8x32xf32>
    %213 = math.tanh %212 : vector<8x32xf32>
    %214 = vector.extract_strided_slice %196 {offsets = [0, 96], sizes = [8, 32], strides = [1, 1]} : vector<8x128xf32> to vector<8x32xf32>
    %215 = arith.negf %214 : vector<8x32xf32>
    %216 = math.exp %215 : vector<8x32xf32>
    %cst_57 = arith.constant 1.000000e+00 : f32
    %217 = vector.broadcast %cst_57 : f32 to vector<8x32xf32>
    %218 = arith.addf %217, %216 : vector<8x32xf32>
    %219 = arith.divf %217, %218 : vector<8x32xf32>
    %220 = arith.mulf %211, %162 : vector<8x32xf32>
    %221 = arith.mulf %205, %213 : vector<8x32xf32>
    %222 = arith.addf %220, %221 : vector<8x32xf32>
    %223 = math.tanh %222 : vector<8x32xf32>
    %224 = arith.mulf %219, %223 : vector<8x32xf32>
    %225 = vector.extract_strided_slice %199 {offsets = [0, 0], sizes = [8, 32], strides = [1, 1]} : vector<8x128xf32> to vector<8x32xf32>
    %226 = arith.negf %225 : vector<8x32xf32>
    %227 = math.exp %226 : vector<8x32xf32>
    %cst_58 = arith.constant 1.000000e+00 : f32
    %228 = vector.broadcast %cst_58 : f32 to vector<8x32xf32>
    %229 = arith.addf %228, %227 : vector<8x32xf32>
    %230 = arith.divf %228, %229 : vector<8x32xf32>
    %231 = vector.extract_strided_slice %199 {offsets = [0, 32], sizes = [8, 32], strides = [1, 1]} : vector<8x128xf32> to vector<8x32xf32>
    %232 = arith.negf %231 : vector<8x32xf32>
    %233 = math.exp %232 : vector<8x32xf32>
    %cst_59 = arith.constant 1.000000e+00 : f32
    %234 = vector.broadcast %cst_59 : f32 to vector<8x32xf32>
    %235 = arith.addf %234, %233 : vector<8x32xf32>
    %236 = arith.divf %234, %235 : vector<8x32xf32>
    %237 = vector.extract_strided_slice %199 {offsets = [0, 64], sizes = [8, 32], strides = [1, 1]} : vector<8x128xf32> to vector<8x32xf32>
    %238 = math.tanh %237 : vector<8x32xf32>
    %239 = vector.extract_strided_slice %199 {offsets = [0, 96], sizes = [8, 32], strides = [1, 1]} : vector<8x128xf32> to vector<8x32xf32>
    %240 = arith.negf %239 : vector<8x32xf32>
    %241 = math.exp %240 : vector<8x32xf32>
    %cst_60 = arith.constant 1.000000e+00 : f32
    %242 = vector.broadcast %cst_60 : f32 to vector<8x32xf32>
    %243 = arith.addf %242, %241 : vector<8x32xf32>
    %244 = arith.divf %242, %243 : vector<8x32xf32>
    %245 = arith.mulf %236, %187 : vector<8x32xf32>
    %246 = arith.mulf %230, %238 : vector<8x32xf32>
    %247 = arith.addf %245, %246 : vector<8x32xf32>
    %248 = math.tanh %247 : vector<8x32xf32>
    %249 = arith.mulf %244, %248 : vector<8x32xf32>
    %c24_61 = arith.constant 24 : index
    %c0_62 = arith.constant 0 : index
    %250 = vector.load %arg12[%c24_61, %c0_62] : memref<64x32xf32, #tpu.memory_space<vmem>>, vector<8x32xf32>
    tpu.vector_store %arg12[%c24_61, %c0_62], %224 {strides = array<i32>} : memref<64x32xf32, #tpu.memory_space<vmem>>, vector<8x32xf32>,
    %c32_63 = arith.constant 32 : index
    %c0_64 = arith.constant 0 : index
    %251 = vector.load %arg13[%c32_63, %c0_64] : memref<64x32xf32, #tpu.memory_space<vmem>>, vector<8x32xf32>
    tpu.vector_store %arg13[%c32_63, %c0_64], %249 {strides = array<i32>} : memref<64x32xf32, #tpu.memory_space<vmem>>, vector<8x32xf32>,
    %252 = tpu.concatenate %224, %249 in 1 : vector<8x32xf32>, vector<8x32xf32> -> vector<8x64xf32>
    %cst_65 = arith.constant dense<0.000000e+00> : vector<8x256xf32>
    %253 = tpu.matmul %252, %10, %cst_65 {dimension_numbers = #tpu.dot_dimension_numbers<[1], [0], [0], [1], [0, 0, 1, 1], [], []>} : vector<8x64xf32>, vector<64x256xf32>, vector<8x256xf32> -> vector<8x256xf32>
    %c32_66 = arith.constant 32 : index
    %c0_67 = arith.constant 0 : index
    %254 = vector.load %arg10[%c32_66, %c0_67] : memref<64x128xf32, #tpu.memory_space<vmem>>, vector<8x128xf32>
    %255 = vector.extract_strided_slice %253 {offsets = [0, 0], sizes = [8, 128], strides = [1, 1]} : vector<8x256xf32> to vector<8x128xf32>
    %256 = arith.addf %254, %255 : vector<8x128xf32>
    %c24_68 = arith.constant 24 : index
    %c0_69 = arith.constant 0 : index
    %257 = vector.load %arg11[%c24_68, %c0_69] : memref<64x128xf32, #tpu.memory_space<vmem>>, vector<8x128xf32>
    %258 = vector.extract_strided_slice %253 {offsets = [0, 128], sizes = [8, 128], strides = [1, 1]} : vector<8x256xf32> to vector<8x128xf32>
    %259 = arith.addf %257, %258 : vector<8x128xf32>
    %260 = vector.extract_strided_slice %256 {offsets = [0, 0], sizes = [8, 32], strides = [1, 1]} : vector<8x128xf32> to vector<8x32xf32>
    %261 = arith.negf %260 : vector<8x32xf32>
    %262 = math.exp %261 : vector<8x32xf32>
    %cst_70 = arith.constant 1.000000e+00 : f32
    %263 = vector.broadcast %cst_70 : f32 to vector<8x32xf32>
    %264 = arith.addf %263, %262 : vector<8x32xf32>
    %265 = arith.divf %263, %264 : vector<8x32xf32>
    %266 = vector.extract_strided_slice %256 {offsets = [0, 32], sizes = [8, 32], strides = [1, 1]} : vector<8x128xf32> to vector<8x32xf32>
    %267 = arith.negf %266 : vector<8x32xf32>
    %268 = math.exp %267 : vector<8x32xf32>
    %cst_71 = arith.constant 1.000000e+00 : f32
    %269 = vector.broadcast %cst_71 : f32 to vector<8x32xf32>
    %270 = arith.addf %269, %268 : vector<8x32xf32>
    %271 = arith.divf %269, %270 : vector<8x32xf32>
    %272 = vector.extract_strided_slice %256 {offsets = [0, 64], sizes = [8, 32], strides = [1, 1]} : vector<8x128xf32> to vector<8x32xf32>
    %273 = math.tanh %272 : vector<8x32xf32>
    %274 = vector.extract_strided_slice %256 {offsets = [0, 96], sizes = [8, 32], strides = [1, 1]} : vector<8x128xf32> to vector<8x32xf32>
    %275 = arith.negf %274 : vector<8x32xf32>
    %276 = math.exp %275 : vector<8x32xf32>
    %cst_72 = arith.constant 1.000000e+00 : f32
    %277 = vector.broadcast %cst_72 : f32 to vector<8x32xf32>
    %278 = arith.addf %277, %276 : vector<8x32xf32>
    %279 = arith.divf %277, %278 : vector<8x32xf32>
    %280 = arith.mulf %271, %222 : vector<8x32xf32>
    %281 = arith.mulf %265, %273 : vector<8x32xf32>
    %282 = arith.addf %280, %281 : vector<8x32xf32>
    %283 = math.tanh %282 : vector<8x32xf32>
    %284 = arith.mulf %279, %283 : vector<8x32xf32>
    %285 = vector.extract_strided_slice %259 {offsets = [0, 0], sizes = [8, 32], strides = [1, 1]} : vector<8x128xf32> to vector<8x32xf32>
    %286 = arith.negf %285 : vector<8x32xf32>
    %287 = math.exp %286 : vector<8x32xf32>
    %cst_73 = arith.constant 1.000000e+00 : f32
    %288 = vector.broadcast %cst_73 : f32 to vector<8x32xf32>
    %289 = arith.addf %288, %287 : vector<8x32xf32>
    %290 = arith.divf %288, %289 : vector<8x32xf32>
    %291 = vector.extract_strided_slice %259 {offsets = [0, 32], sizes = [8, 32], strides = [1, 1]} : vector<8x128xf32> to vector<8x32xf32>
    %292 = arith.negf %291 : vector<8x32xf32>
    %293 = math.exp %292 : vector<8x32xf32>
    %cst_74 = arith.constant 1.000000e+00 : f32
    %294 = vector.broadcast %cst_74 : f32 to vector<8x32xf32>
    %295 = arith.addf %294, %293 : vector<8x32xf32>
    %296 = arith.divf %294, %295 : vector<8x32xf32>
    %297 = vector.extract_strided_slice %259 {offsets = [0, 64], sizes = [8, 32], strides = [1, 1]} : vector<8x128xf32> to vector<8x32xf32>
    %298 = math.tanh %297 : vector<8x32xf32>
    %299 = vector.extract_strided_slice %259 {offsets = [0, 96], sizes = [8, 32], strides = [1, 1]} : vector<8x128xf32> to vector<8x32xf32>
    %300 = arith.negf %299 : vector<8x32xf32>
    %301 = math.exp %300 : vector<8x32xf32>
    %cst_75 = arith.constant 1.000000e+00 : f32
    %302 = vector.broadcast %cst_75 : f32 to vector<8x32xf32>
    %303 = arith.addf %302, %301 : vector<8x32xf32>
    %304 = arith.divf %302, %303 : vector<8x32xf32>
    %305 = arith.mulf %296, %247 : vector<8x32xf32>
    %306 = arith.mulf %290, %298 : vector<8x32xf32>
    %307 = arith.addf %305, %306 : vector<8x32xf32>
    %308 = math.tanh %307 : vector<8x32xf32>
    %309 = arith.mulf %304, %308 : vector<8x32xf32>
    %c32_76 = arith.constant 32 : index
    %c0_77 = arith.constant 0 : index
    %310 = vector.load %arg12[%c32_76, %c0_77] : memref<64x32xf32, #tpu.memory_space<vmem>>, vector<8x32xf32>
    tpu.vector_store %arg12[%c32_76, %c0_77], %284 {strides = array<i32>} : memref<64x32xf32, #tpu.memory_space<vmem>>, vector<8x32xf32>,
    %c24_78 = arith.constant 24 : index
    %c0_79 = arith.constant 0 : index
    %311 = vector.load %arg13[%c24_78, %c0_79] : memref<64x32xf32, #tpu.memory_space<vmem>>, vector<8x32xf32>
    tpu.vector_store %arg13[%c24_78, %c0_79], %309 {strides = array<i32>} : memref<64x32xf32, #tpu.memory_space<vmem>>, vector<8x32xf32>,
    %312 = tpu.concatenate %284, %309 in 1 : vector<8x32xf32>, vector<8x32xf32> -> vector<8x64xf32>
    %cst_80 = arith.constant dense<0.000000e+00> : vector<8x256xf32>
    %313 = tpu.matmul %312, %10, %cst_80 {dimension_numbers = #tpu.dot_dimension_numbers<[1], [0], [0], [1], [0, 0, 1, 1], [], []>} : vector<8x64xf32>, vector<64x256xf32>, vector<8x256xf32> -> vector<8x256xf32>
    %c40_81 = arith.constant 40 : index
    %c0_82 = arith.constant 0 : index
    %314 = vector.load %arg10[%c40_81, %c0_82] : memref<64x128xf32, #tpu.memory_space<vmem>>, vector<8x128xf32>
    %315 = vector.extract_strided_slice %313 {offsets = [0, 0], sizes = [8, 128], strides = [1, 1]} : vector<8x256xf32> to vector<8x128xf32>
    %316 = arith.addf %314, %315 : vector<8x128xf32>
    %c16_83 = arith.constant 16 : index
    %c0_84 = arith.constant 0 : index
    %317 = vector.load %arg11[%c16_83, %c0_84] : memref<64x128xf32, #tpu.memory_space<vmem>>, vector<8x128xf32>
    %318 = vector.extract_strided_slice %313 {offsets = [0, 128], sizes = [8, 128], strides = [1, 1]} : vector<8x256xf32> to vector<8x128xf32>
    %319 = arith.addf %317, %318 : vector<8x128xf32>
    %320 = vector.extract_strided_slice %316 {offsets = [0, 0], sizes = [8, 32], strides = [1, 1]} : vector<8x128xf32> to vector<8x32xf32>
    %321 = arith.negf %320 : vector<8x32xf32>
    %322 = math.exp %321 : vector<8x32xf32>
    %cst_85 = arith.constant 1.000000e+00 : f32
    %323 = vector.broadcast %cst_85 : f32 to vector<8x32xf32>
    %324 = arith.addf %323, %322 : vector<8x32xf32>
    %325 = arith.divf %323, %324 : vector<8x32xf32>
    %326 = vector.extract_strided_slice %316 {offsets = [0, 32], sizes = [8, 32], strides = [1, 1]} : vector<8x128xf32> to vector<8x32xf32>
    %327 = arith.negf %326 : vector<8x32xf32>
    %328 = math.exp %327 : vector<8x32xf32>
    %cst_86 = arith.constant 1.000000e+00 : f32
    %329 = vector.broadcast %cst_86 : f32 to vector<8x32xf32>
    %330 = arith.addf %329, %328 : vector<8x32xf32>
    %331 = arith.divf %329, %330 : vector<8x32xf32>
    %332 = vector.extract_strided_slice %316 {offsets = [0, 64], sizes = [8, 32], strides = [1, 1]} : vector<8x128xf32> to vector<8x32xf32>
    %333 = math.tanh %332 : vector<8x32xf32>
    %334 = vector.extract_strided_slice %316 {offsets = [0, 96], sizes = [8, 32], strides = [1, 1]} : vector<8x128xf32> to vector<8x32xf32>
    %335 = arith.negf %334 : vector<8x32xf32>
    %336 = math.exp %335 : vector<8x32xf32>
    %cst_87 = arith.constant 1.000000e+00 : f32
    %337 = vector.broadcast %cst_87 : f32 to vector<8x32xf32>
    %338 = arith.addf %337, %336 : vector<8x32xf32>
    %339 = arith.divf %337, %338 : vector<8x32xf32>
    %340 = arith.mulf %331, %282 : vector<8x32xf32>
    %341 = arith.mulf %325, %333 : vector<8x32xf32>
    %342 = arith.addf %340, %341 : vector<8x32xf32>
    %343 = math.tanh %342 : vector<8x32xf32>
    %344 = arith.mulf %339, %343 : vector<8x32xf32>
    %345 = vector.extract_strided_slice %319 {offsets = [0, 0], sizes = [8, 32], strides = [1, 1]} : vector<8x128xf32> to vector<8x32xf32>
    %346 = arith.negf %345 : vector<8x32xf32>
    %347 = math.exp %346 : vector<8x32xf32>
    %cst_88 = arith.constant 1.000000e+00 : f32
    %348 = vector.broadcast %cst_88 : f32 to vector<8x32xf32>
    %349 = arith.addf %348, %347 : vector<8x32xf32>
    %350 = arith.divf %348, %349 : vector<8x32xf32>
    %351 = vector.extract_strided_slice %319 {offsets = [0, 32], sizes = [8, 32], strides = [1, 1]} : vector<8x128xf32> to vector<8x32xf32>
    %352 = arith.negf %351 : vector<8x32xf32>
    %353 = math.exp %352 : vector<8x32xf32>
    %cst_89 = arith.constant 1.000000e+00 : f32
    %354 = vector.broadcast %cst_89 : f32 to vector<8x32xf32>
    %355 = arith.addf %354, %353 : vector<8x32xf32>
    %356 = arith.divf %354, %355 : vector<8x32xf32>
    %357 = vector.extract_strided_slice %319 {offsets = [0, 64], sizes = [8, 32], strides = [1, 1]} : vector<8x128xf32> to vector<8x32xf32>
    %358 = math.tanh %357 : vector<8x32xf32>
    %359 = vector.extract_strided_slice %319 {offsets = [0, 96], sizes = [8, 32], strides = [1, 1]} : vector<8x128xf32> to vector<8x32xf32>
    %360 = arith.negf %359 : vector<8x32xf32>
    %361 = math.exp %360 : vector<8x32xf32>
    %cst_90 = arith.constant 1.000000e+00 : f32
    %362 = vector.broadcast %cst_90 : f32 to vector<8x32xf32>
    %363 = arith.addf %362, %361 : vector<8x32xf32>
    %364 = arith.divf %362, %363 : vector<8x32xf32>
    %365 = arith.mulf %356, %307 : vector<8x32xf32>
    %366 = arith.mulf %350, %358 : vector<8x32xf32>
    %367 = arith.addf %365, %366 : vector<8x32xf32>
    %368 = math.tanh %367 : vector<8x32xf32>
    %369 = arith.mulf %364, %368 : vector<8x32xf32>
    %c40_91 = arith.constant 40 : index
    %c0_92 = arith.constant 0 : index
    %370 = vector.load %arg12[%c40_91, %c0_92] : memref<64x32xf32, #tpu.memory_space<vmem>>, vector<8x32xf32>
    tpu.vector_store %arg12[%c40_91, %c0_92], %344 {strides = array<i32>} : memref<64x32xf32, #tpu.memory_space<vmem>>, vector<8x32xf32>,
    %c16_93 = arith.constant 16 : index
    %c0_94 = arith.constant 0 : index
    %371 = vector.load %arg13[%c16_93, %c0_94] : memref<64x32xf32, #tpu.memory_space<vmem>>, vector<8x32xf32>
    tpu.vector_store %arg13[%c16_93, %c0_94], %369 {strides = array<i32>} : memref<64x32xf32, #tpu.memory_space<vmem>>, vector<8x32xf32>,
    %372 = tpu.concatenate %344, %369 in 1 : vector<8x32xf32>, vector<8x32xf32> -> vector<8x64xf32>
    %cst_95 = arith.constant dense<0.000000e+00> : vector<8x256xf32>
    %373 = tpu.matmul %372, %10, %cst_95 {dimension_numbers = #tpu.dot_dimension_numbers<[1], [0], [0], [1], [0, 0, 1, 1], [], []>} : vector<8x64xf32>, vector<64x256xf32>, vector<8x256xf32> -> vector<8x256xf32>
    %c48_96 = arith.constant 48 : index
    %c0_97 = arith.constant 0 : index
    %374 = vector.load %arg10[%c48_96, %c0_97] : memref<64x128xf32, #tpu.memory_space<vmem>>, vector<8x128xf32>
    %375 = vector.extract_strided_slice %373 {offsets = [0, 0], sizes = [8, 128], strides = [1, 1]} : vector<8x256xf32> to vector<8x128xf32>
    %376 = arith.addf %374, %375 : vector<8x128xf32>
    %c8_98 = arith.constant 8 : index
    %c0_99 = arith.constant 0 : index
    %377 = vector.load %arg11[%c8_98, %c0_99] : memref<64x128xf32, #tpu.memory_space<vmem>>, vector<8x128xf32>
    %378 = vector.extract_strided_slice %373 {offsets = [0, 128], sizes = [8, 128], strides = [1, 1]} : vector<8x256xf32> to vector<8x128xf32>
    %379 = arith.addf %377, %378 : vector<8x128xf32>
    %380 = vector.extract_strided_slice %376 {offsets = [0, 0], sizes = [8, 32], strides = [1, 1]} : vector<8x128xf32> to vector<8x32xf32>
    %381 = arith.negf %380 : vector<8x32xf32>
    %382 = math.exp %381 : vector<8x32xf32>
    %cst_100 = arith.constant 1.000000e+00 : f32
    %383 = vector.broadcast %cst_100 : f32 to vector<8x32xf32>
    %384 = arith.addf %383, %382 : vector<8x32xf32>
    %385 = arith.divf %383, %384 : vector<8x32xf32>
    %386 = vector.extract_strided_slice %376 {offsets = [0, 32], sizes = [8, 32], strides = [1, 1]} : vector<8x128xf32> to vector<8x32xf32>
    %387 = arith.negf %386 : vector<8x32xf32>
    %388 = math.exp %387 : vector<8x32xf32>
    %cst_101 = arith.constant 1.000000e+00 : f32
    %389 = vector.broadcast %cst_101 : f32 to vector<8x32xf32>
    %390 = arith.addf %389, %388 : vector<8x32xf32>
    %391 = arith.divf %389, %390 : vector<8x32xf32>
    %392 = vector.extract_strided_slice %376 {offsets = [0, 64], sizes = [8, 32], strides = [1, 1]} : vector<8x128xf32> to vector<8x32xf32>
    %393 = math.tanh %392 : vector<8x32xf32>
    %394 = vector.extract_strided_slice %376 {offsets = [0, 96], sizes = [8, 32], strides = [1, 1]} : vector<8x128xf32> to vector<8x32xf32>
    %395 = arith.negf %394 : vector<8x32xf32>
    %396 = math.exp %395 : vector<8x32xf32>
    %cst_102 = arith.constant 1.000000e+00 : f32
    %397 = vector.broadcast %cst_102 : f32 to vector<8x32xf32>
    %398 = arith.addf %397, %396 : vector<8x32xf32>
    %399 = arith.divf %397, %398 : vector<8x32xf32>
    %400 = arith.mulf %391, %342 : vector<8x32xf32>
    %401 = arith.mulf %385, %393 : vector<8x32xf32>
    %402 = arith.addf %400, %401 : vector<8x32xf32>
    %403 = math.tanh %402 : vector<8x32xf32>
    %404 = arith.mulf %399, %403 : vector<8x32xf32>
    %405 = vector.extract_strided_slice %379 {offsets = [0, 0], sizes = [8, 32], strides = [1, 1]} : vector<8x128xf32> to vector<8x32xf32>
    %406 = arith.negf %405 : vector<8x32xf32>
    %407 = math.exp %406 : vector<8x32xf32>
    %cst_103 = arith.constant 1.000000e+00 : f32
    %408 = vector.broadcast %cst_103 : f32 to vector<8x32xf32>
    %409 = arith.addf %408, %407 : vector<8x32xf32>
    %410 = arith.divf %408, %409 : vector<8x32xf32>
    %411 = vector.extract_strided_slice %379 {offsets = [0, 32], sizes = [8, 32], strides = [1, 1]} : vector<8x128xf32> to vector<8x32xf32>
    %412 = arith.negf %411 : vector<8x32xf32>
    %413 = math.exp %412 : vector<8x32xf32>
    %cst_104 = arith.constant 1.000000e+00 : f32
    %414 = vector.broadcast %cst_104 : f32 to vector<8x32xf32>
    %415 = arith.addf %414, %413 : vector<8x32xf32>
    %416 = arith.divf %414, %415 : vector<8x32xf32>
    %417 = vector.extract_strided_slice %379 {offsets = [0, 64], sizes = [8, 32], strides = [1, 1]} : vector<8x128xf32> to vector<8x32xf32>
    %418 = math.tanh %417 : vector<8x32xf32>
    %419 = vector.extract_strided_slice %379 {offsets = [0, 96], sizes = [8, 32], strides = [1, 1]} : vector<8x128xf32> to vector<8x32xf32>
    %420 = arith.negf %419 : vector<8x32xf32>
    %421 = math.exp %420 : vector<8x32xf32>
    %cst_105 = arith.constant 1.000000e+00 : f32
    %422 = vector.broadcast %cst_105 : f32 to vector<8x32xf32>
    %423 = arith.addf %422, %421 : vector<8x32xf32>
    %424 = arith.divf %422, %423 : vector<8x32xf32>
    %425 = arith.mulf %416, %367 : vector<8x32xf32>
    %426 = arith.mulf %410, %418 : vector<8x32xf32>
    %427 = arith.addf %425, %426 : vector<8x32xf32>
    %428 = math.tanh %427 : vector<8x32xf32>
    %429 = arith.mulf %424, %428 : vector<8x32xf32>
    %c48_106 = arith.constant 48 : index
    %c0_107 = arith.constant 0 : index
    %430 = vector.load %arg12[%c48_106, %c0_107] : memref<64x32xf32, #tpu.memory_space<vmem>>, vector<8x32xf32>
    tpu.vector_store %arg12[%c48_106, %c0_107], %404 {strides = array<i32>} : memref<64x32xf32, #tpu.memory_space<vmem>>, vector<8x32xf32>,
    %c8_108 = arith.constant 8 : index
    %c0_109 = arith.constant 0 : index
    %431 = vector.load %arg13[%c8_108, %c0_109] : memref<64x32xf32, #tpu.memory_space<vmem>>, vector<8x32xf32>
    tpu.vector_store %arg13[%c8_108, %c0_109], %429 {strides = array<i32>} : memref<64x32xf32, #tpu.memory_space<vmem>>, vector<8x32xf32>,
    %432 = tpu.concatenate %404, %429 in 1 : vector<8x32xf32>, vector<8x32xf32> -> vector<8x64xf32>
    %cst_110 = arith.constant dense<0.000000e+00> : vector<8x256xf32>
    %433 = tpu.matmul %432, %10, %cst_110 {dimension_numbers = #tpu.dot_dimension_numbers<[1], [0], [0], [1], [0, 0, 1, 1], [], []>} : vector<8x64xf32>, vector<64x256xf32>, vector<8x256xf32> -> vector<8x256xf32>
    %c56_111 = arith.constant 56 : index
    %c0_112 = arith.constant 0 : index
    %434 = vector.load %arg10[%c56_111, %c0_112] : memref<64x128xf32, #tpu.memory_space<vmem>>, vector<8x128xf32>
    %435 = vector.extract_strided_slice %433 {offsets = [0, 0], sizes = [8, 128], strides = [1, 1]} : vector<8x256xf32> to vector<8x128xf32>
    %436 = arith.addf %434, %435 : vector<8x128xf32>
    %c0_113 = arith.constant 0 : index
    %c0_114 = arith.constant 0 : index
    %437 = vector.load %arg11[%c0_113, %c0_114] : memref<64x128xf32, #tpu.memory_space<vmem>>, vector<8x128xf32>
    %438 = vector.extract_strided_slice %433 {offsets = [0, 128], sizes = [8, 128], strides = [1, 1]} : vector<8x256xf32> to vector<8x128xf32>
    %439 = arith.addf %437, %438 : vector<8x128xf32>
    %440 = vector.extract_strided_slice %436 {offsets = [0, 0], sizes = [8, 32], strides = [1, 1]} : vector<8x128xf32> to vector<8x32xf32>
    %441 = arith.negf %440 : vector<8x32xf32>
    %442 = math.exp %441 : vector<8x32xf32>
    %cst_115 = arith.constant 1.000000e+00 : f32
    %443 = vector.broadcast %cst_115 : f32 to vector<8x32xf32>
    %444 = arith.addf %443, %442 : vector<8x32xf32>
    %445 = arith.divf %443, %444 : vector<8x32xf32>
    %446 = vector.extract_strided_slice %436 {offsets = [0, 32], sizes = [8, 32], strides = [1, 1]} : vector<8x128xf32> to vector<8x32xf32>
    %447 = arith.negf %446 : vector<8x32xf32>
    %448 = math.exp %447 : vector<8x32xf32>
    %cst_116 = arith.constant 1.000000e+00 : f32
    %449 = vector.broadcast %cst_116 : f32 to vector<8x32xf32>
    %450 = arith.addf %449, %448 : vector<8x32xf32>
    %451 = arith.divf %449, %450 : vector<8x32xf32>
    %452 = vector.extract_strided_slice %436 {offsets = [0, 64], sizes = [8, 32], strides = [1, 1]} : vector<8x128xf32> to vector<8x32xf32>
    %453 = math.tanh %452 : vector<8x32xf32>
    %454 = vector.extract_strided_slice %436 {offsets = [0, 96], sizes = [8, 32], strides = [1, 1]} : vector<8x128xf32> to vector<8x32xf32>
    %455 = arith.negf %454 : vector<8x32xf32>
    %456 = math.exp %455 : vector<8x32xf32>
    %cst_117 = arith.constant 1.000000e+00 : f32
    %457 = vector.broadcast %cst_117 : f32 to vector<8x32xf32>
    %458 = arith.addf %457, %456 : vector<8x32xf32>
    %459 = arith.divf %457, %458 : vector<8x32xf32>
    %460 = arith.mulf %451, %402 : vector<8x32xf32>
    %461 = arith.mulf %445, %453 : vector<8x32xf32>
    %462 = arith.addf %460, %461 : vector<8x32xf32>
    %463 = math.tanh %462 : vector<8x32xf32>
    %464 = arith.mulf %459, %463 : vector<8x32xf32>
    %465 = vector.extract_strided_slice %439 {offsets = [0, 0], sizes = [8, 32], strides = [1, 1]} : vector<8x128xf32> to vector<8x32xf32>
    %466 = arith.negf %465 : vector<8x32xf32>
    %467 = math.exp %466 : vector<8x32xf32>
    %cst_118 = arith.constant 1.000000e+00 : f32
    %468 = vector.broadcast %cst_118 : f32 to vector<8x32xf32>
    %469 = arith.addf %468, %467 : vector<8x32xf32>
    %470 = arith.divf %468, %469 : vector<8x32xf32>
    %471 = vector.extract_strided_slice %439 {offsets = [0, 32], sizes = [8, 32], strides = [1, 1]} : vector<8x128xf32> to vector<8x32xf32>
    %472 = arith.negf %471 : vector<8x32xf32>
    %473 = math.exp %472 : vector<8x32xf32>
    %cst_119 = arith.constant 1.000000e+00 : f32
    %474 = vector.broadcast %cst_119 : f32 to vector<8x32xf32>
    %475 = arith.addf %474, %473 : vector<8x32xf32>
    %476 = arith.divf %474, %475 : vector<8x32xf32>
    %477 = vector.extract_strided_slice %439 {offsets = [0, 64], sizes = [8, 32], strides = [1, 1]} : vector<8x128xf32> to vector<8x32xf32>
    %478 = math.tanh %477 : vector<8x32xf32>
    %479 = vector.extract_strided_slice %439 {offsets = [0, 96], sizes = [8, 32], strides = [1, 1]} : vector<8x128xf32> to vector<8x32xf32>
    %480 = arith.negf %479 : vector<8x32xf32>
    %481 = math.exp %480 : vector<8x32xf32>
    %cst_120 = arith.constant 1.000000e+00 : f32
    %482 = vector.broadcast %cst_120 : f32 to vector<8x32xf32>
    %483 = arith.addf %482, %481 : vector<8x32xf32>
    %484 = arith.divf %482, %483 : vector<8x32xf32>
    %485 = arith.mulf %476, %427 : vector<8x32xf32>
    %486 = arith.mulf %470, %478 : vector<8x32xf32>
    %487 = arith.addf %485, %486 : vector<8x32xf32>
    %488 = math.tanh %487 : vector<8x32xf32>
    %489 = arith.mulf %484, %488 : vector<8x32xf32>
    %c56_121 = arith.constant 56 : index
    %c0_122 = arith.constant 0 : index
    %490 = vector.load %arg12[%c56_121, %c0_122] : memref<64x32xf32, #tpu.memory_space<vmem>>, vector<8x32xf32>
    tpu.vector_store %arg12[%c56_121, %c0_122], %464 {strides = array<i32>} : memref<64x32xf32, #tpu.memory_space<vmem>>, vector<8x32xf32>,
    %c0_123 = arith.constant 0 : index
    %c0_124 = arith.constant 0 : index
    %491 = vector.load %arg13[%c0_123, %c0_124] : memref<64x32xf32, #tpu.memory_space<vmem>>, vector<8x32xf32>
    tpu.vector_store %arg13[%c0_123, %c0_124], %489 {strides = array<i32>} : memref<64x32xf32, #tpu.memory_space<vmem>>, vector<8x32xf32>,
    %c0_125 = arith.constant 0 : index
    %c0_126 = arith.constant 0 : index
    %492 = vector.load %arg6[%c0_125, %c0_126] : memref<1x256xf32, #tpu.memory_space<vmem>>, vector<1x256xf32>
    %c0_127 = arith.constant 0 : index
    %c0_128 = arith.constant 0 : index
    %493 = vector.load %arg4[%c0_127, %c0_128] : memref<64x256xf32, #tpu.memory_space<vmem>>, vector<64x256xf32>
    %c0_129 = arith.constant 0 : index
    %c0_130 = arith.constant 0 : index
    %494 = vector.load %arg12[%c0_129, %c0_130] : memref<64x32xf32, #tpu.memory_space<vmem>>, vector<64x32xf32>
    %495 = vector.extract_strided_slice %493 {offsets = [0, 0], sizes = [32, 256], strides = [1, 1]} : vector<64x256xf32> to vector<32x256xf32>
    %cst_131 = arith.constant dense<0.000000e+00> : vector<64x256xf32>
    %496 = tpu.matmul %494, %495, %cst_131 {dimension_numbers = #tpu.dot_dimension_numbers<[1], [0], [0], [1], [0, 0, 1, 1], [], []>} : vector<64x32xf32>, vector<32x256xf32>, vector<64x256xf32> -> vector<64x256xf32>
    %c0_132 = arith.constant 0 : index
    %c0_133 = arith.constant 0 : index
    %497 = vector.load %arg13[%c0_132, %c0_133] : memref<64x32xf32, #tpu.memory_space<vmem>>, vector<64x32xf32>
    %498 = vector.extract_strided_slice %493 {offsets = [32, 0], sizes = [32, 256], strides = [1, 1]} : vector<64x256xf32> to vector<32x256xf32>
    %cst_134 = arith.constant dense<0.000000e+00> : vector<64x256xf32>
    %499 = tpu.matmul %497, %498, %cst_134 {dimension_numbers = #tpu.dot_dimension_numbers<[1], [0], [0], [1], [0, 0, 1, 1], [], []>} : vector<64x32xf32>, vector<32x256xf32>, vector<64x256xf32> -> vector<64x256xf32>
    %500 = arith.addf %496, %499 : vector<64x256xf32>
    %501 = vector.broadcast %492 : vector<1x256xf32> to vector<64x256xf32>
    %502 = arith.addf %500, %501 : vector<64x256xf32>
    %503 = vector.extract_strided_slice %502 {offsets = [0, 0], sizes = [64, 128], strides = [1, 1]} : vector<64x256xf32> to vector<64x128xf32>
    %c0_135 = arith.constant 0 : index
    %c0_136 = arith.constant 0 : index
    %504 = vector.load %arg10[%c0_135, %c0_136] : memref<64x128xf32, #tpu.memory_space<vmem>>, vector<64x128xf32>
    tpu.vector_store %arg10[%c0_135, %c0_136], %503 {strides = array<i32>} : memref<64x128xf32, #tpu.memory_space<vmem>>, vector<64x128xf32>,
    %505 = vector.extract_strided_slice %502 {offsets = [0, 128], sizes = [64, 128], strides = [1, 1]} : vector<64x256xf32> to vector<64x128xf32>
    %c0_137 = arith.constant 0 : index
    %c0_138 = arith.constant 0 : index
    %506 = vector.load %arg11[%c0_137, %c0_138] : memref<64x128xf32, #tpu.memory_space<vmem>>, vector<64x128xf32>
    tpu.vector_store %arg11[%c0_137, %c0_138], %505 {strides = array<i32>} : memref<64x128xf32, #tpu.memory_space<vmem>>, vector<64x128xf32>,
    %c0_139 = arith.constant 0 : index
    %c0_140 = arith.constant 0 : index
    %507 = vector.load %arg5[%c0_139, %c0_140] : memref<64x256xf32, #tpu.memory_space<vmem>>, vector<64x256xf32>
    %cst_141 = arith.constant 0.000000e+00 : f32
    %508 = vector.broadcast %cst_141 : f32 to vector<8x32xf32>
    %509 = tpu.concatenate %508, %508 in 1 : vector<8x32xf32>, vector<8x32xf32> -> vector<8x64xf32>
    %cst_142 = arith.constant dense<0.000000e+00> : vector<8x256xf32>
    %510 = tpu.matmul %509, %507, %cst_142 {dimension_numbers = #tpu.dot_dimension_numbers<[1], [0], [0], [1], [0, 0, 1, 1], [], []>} : vector<8x64xf32>, vector<64x256xf32>, vector<8x256xf32> -> vector<8x256xf32>
    %c0_143 = arith.constant 0 : index
    %c0_144 = arith.constant 0 : index
    %511 = vector.load %arg10[%c0_143, %c0_144] : memref<64x128xf32, #tpu.memory_space<vmem>>, vector<8x128xf32>
    %512 = vector.extract_strided_slice %510 {offsets = [0, 0], sizes = [8, 128], strides = [1, 1]} : vector<8x256xf32> to vector<8x128xf32>
    %513 = arith.addf %511, %512 : vector<8x128xf32>
    %c56_145 = arith.constant 56 : index
    %c0_146 = arith.constant 0 : index
    %514 = vector.load %arg11[%c56_145, %c0_146] : memref<64x128xf32, #tpu.memory_space<vmem>>, vector<8x128xf32>
    %515 = vector.extract_strided_slice %510 {offsets = [0, 128], sizes = [8, 128], strides = [1, 1]} : vector<8x256xf32> to vector<8x128xf32>
    %516 = arith.addf %514, %515 : vector<8x128xf32>
    %517 = vector.extract_strided_slice %513 {offsets = [0, 0], sizes = [8, 32], strides = [1, 1]} : vector<8x128xf32> to vector<8x32xf32>
    %518 = arith.negf %517 : vector<8x32xf32>
    %519 = math.exp %518 : vector<8x32xf32>
    %cst_147 = arith.constant 1.000000e+00 : f32
    %520 = vector.broadcast %cst_147 : f32 to vector<8x32xf32>
    %521 = arith.addf %520, %519 : vector<8x32xf32>
    %522 = arith.divf %520, %521 : vector<8x32xf32>
    %523 = vector.extract_strided_slice %513 {offsets = [0, 32], sizes = [8, 32], strides = [1, 1]} : vector<8x128xf32> to vector<8x32xf32>
    %524 = arith.negf %523 : vector<8x32xf32>
    %525 = math.exp %524 : vector<8x32xf32>
    %cst_148 = arith.constant 1.000000e+00 : f32
    %526 = vector.broadcast %cst_148 : f32 to vector<8x32xf32>
    %527 = arith.addf %526, %525 : vector<8x32xf32>
    %528 = arith.divf %526, %527 : vector<8x32xf32>
    %529 = vector.extract_strided_slice %513 {offsets = [0, 64], sizes = [8, 32], strides = [1, 1]} : vector<8x128xf32> to vector<8x32xf32>
    %530 = math.tanh %529 : vector<8x32xf32>
    %531 = vector.extract_strided_slice %513 {offsets = [0, 96], sizes = [8, 32], strides = [1, 1]} : vector<8x128xf32> to vector<8x32xf32>
    %532 = arith.negf %531 : vector<8x32xf32>
    %533 = math.exp %532 : vector<8x32xf32>
    %cst_149 = arith.constant 1.000000e+00 : f32
    %534 = vector.broadcast %cst_149 : f32 to vector<8x32xf32>
    %535 = arith.addf %534, %533 : vector<8x32xf32>
    %536 = arith.divf %534, %535 : vector<8x32xf32>
    %537 = arith.mulf %528, %508 : vector<8x32xf32>
    %538 = arith.mulf %522, %530 : vector<8x32xf32>
    %539 = arith.addf %537, %538 : vector<8x32xf32>
    %540 = math.tanh %539 : vector<8x32xf32>
    %541 = arith.mulf %536, %540 : vector<8x32xf32>
    %542 = vector.extract_strided_slice %516 {offsets = [0, 0], sizes = [8, 32], strides = [1, 1]} : vector<8x128xf32> to vector<8x32xf32>
    %543 = arith.negf %542 : vector<8x32xf32>
    %544 = math.exp %543 : vector<8x32xf32>
    %cst_150 = arith.constant 1.000000e+00 : f32
    %545 = vector.broadcast %cst_150 : f32 to vector<8x32xf32>
    %546 = arith.addf %545, %544 : vector<8x32xf32>
    %547 = arith.divf %545, %546 : vector<8x32xf32>
    %548 = vector.extract_strided_slice %516 {offsets = [0, 32], sizes = [8, 32], strides = [1, 1]} : vector<8x128xf32> to vector<8x32xf32>
    %549 = arith.negf %548 : vector<8x32xf32>
    %550 = math.exp %549 : vector<8x32xf32>
    %cst_151 = arith.constant 1.000000e+00 : f32
    %551 = vector.broadcast %cst_151 : f32 to vector<8x32xf32>
    %552 = arith.addf %551, %550 : vector<8x32xf32>
    %553 = arith.divf %551, %552 : vector<8x32xf32>
    %554 = vector.extract_strided_slice %516 {offsets = [0, 64], sizes = [8, 32], strides = [1, 1]} : vector<8x128xf32> to vector<8x32xf32>
    %555 = math.tanh %554 : vector<8x32xf32>
    %556 = vector.extract_strided_slice %516 {offsets = [0, 96], sizes = [8, 32], strides = [1, 1]} : vector<8x128xf32> to vector<8x32xf32>
    %557 = arith.negf %556 : vector<8x32xf32>
    %558 = math.exp %557 : vector<8x32xf32>
    %cst_152 = arith.constant 1.000000e+00 : f32
    %559 = vector.broadcast %cst_152 : f32 to vector<8x32xf32>
    %560 = arith.addf %559, %558 : vector<8x32xf32>
    %561 = arith.divf %559, %560 : vector<8x32xf32>
    %562 = arith.mulf %553, %508 : vector<8x32xf32>
    %563 = arith.mulf %547, %555 : vector<8x32xf32>
    %564 = arith.addf %562, %563 : vector<8x32xf32>
    %565 = math.tanh %564 : vector<8x32xf32>
    %566 = arith.mulf %561, %565 : vector<8x32xf32>
    %567 = tpu.concatenate %541, %566 in 1 : vector<8x32xf32>, vector<8x32xf32> -> vector<8x64xf32>
    %cst_153 = arith.constant dense<0.000000e+00> : vector<8x256xf32>
    %568 = tpu.matmul %567, %507, %cst_153 {dimension_numbers = #tpu.dot_dimension_numbers<[1], [0], [0], [1], [0, 0, 1, 1], [], []>} : vector<8x64xf32>, vector<64x256xf32>, vector<8x256xf32> -> vector<8x256xf32>
    %c8_154 = arith.constant 8 : index
    %c0_155 = arith.constant 0 : index
    %569 = vector.load %arg10[%c8_154, %c0_155] : memref<64x128xf32, #tpu.memory_space<vmem>>, vector<8x128xf32>
    %570 = vector.extract_strided_slice %568 {offsets = [0, 0], sizes = [8, 128], strides = [1, 1]} : vector<8x256xf32> to vector<8x128xf32>
    %571 = arith.addf %569, %570 : vector<8x128xf32>
    %c48_156 = arith.constant 48 : index
    %c0_157 = arith.constant 0 : index
    %572 = vector.load %arg11[%c48_156, %c0_157] : memref<64x128xf32, #tpu.memory_space<vmem>>, vector<8x128xf32>
    %573 = vector.extract_strided_slice %568 {offsets = [0, 128], sizes = [8, 128], strides = [1, 1]} : vector<8x256xf32> to vector<8x128xf32>
    %574 = arith.addf %572, %573 : vector<8x128xf32>
    %575 = vector.extract_strided_slice %571 {offsets = [0, 0], sizes = [8, 32], strides = [1, 1]} : vector<8x128xf32> to vector<8x32xf32>
    %576 = arith.negf %575 : vector<8x32xf32>
    %577 = math.exp %576 : vector<8x32xf32>
    %cst_158 = arith.constant 1.000000e+00 : f32
    %578 = vector.broadcast %cst_158 : f32 to vector<8x32xf32>
    %579 = arith.addf %578, %577 : vector<8x32xf32>
    %580 = arith.divf %578, %579 : vector<8x32xf32>
    %581 = vector.extract_strided_slice %571 {offsets = [0, 32], sizes = [8, 32], strides = [1, 1]} : vector<8x128xf32> to vector<8x32xf32>
    %582 = arith.negf %581 : vector<8x32xf32>
    %583 = math.exp %582 : vector<8x32xf32>
    %cst_159 = arith.constant 1.000000e+00 : f32
    %584 = vector.broadcast %cst_159 : f32 to vector<8x32xf32>
    %585 = arith.addf %584, %583 : vector<8x32xf32>
    %586 = arith.divf %584, %585 : vector<8x32xf32>
    %587 = vector.extract_strided_slice %571 {offsets = [0, 64], sizes = [8, 32], strides = [1, 1]} : vector<8x128xf32> to vector<8x32xf32>
    %588 = math.tanh %587 : vector<8x32xf32>
    %589 = vector.extract_strided_slice %571 {offsets = [0, 96], sizes = [8, 32], strides = [1, 1]} : vector<8x128xf32> to vector<8x32xf32>
    %590 = arith.negf %589 : vector<8x32xf32>
    %591 = math.exp %590 : vector<8x32xf32>
    %cst_160 = arith.constant 1.000000e+00 : f32
    %592 = vector.broadcast %cst_160 : f32 to vector<8x32xf32>
    %593 = arith.addf %592, %591 : vector<8x32xf32>
    %594 = arith.divf %592, %593 : vector<8x32xf32>
    %595 = arith.mulf %586, %539 : vector<8x32xf32>
    %596 = arith.mulf %580, %588 : vector<8x32xf32>
    %597 = arith.addf %595, %596 : vector<8x32xf32>
    %598 = math.tanh %597 : vector<8x32xf32>
    %599 = arith.mulf %594, %598 : vector<8x32xf32>
    %600 = vector.extract_strided_slice %574 {offsets = [0, 0], sizes = [8, 32], strides = [1, 1]} : vector<8x128xf32> to vector<8x32xf32>
    %601 = arith.negf %600 : vector<8x32xf32>
    %602 = math.exp %601 : vector<8x32xf32>
    %cst_161 = arith.constant 1.000000e+00 : f32
    %603 = vector.broadcast %cst_161 : f32 to vector<8x32xf32>
    %604 = arith.addf %603, %602 : vector<8x32xf32>
    %605 = arith.divf %603, %604 : vector<8x32xf32>
    %606 = vector.extract_strided_slice %574 {offsets = [0, 32], sizes = [8, 32], strides = [1, 1]} : vector<8x128xf32> to vector<8x32xf32>
    %607 = arith.negf %606 : vector<8x32xf32>
    %608 = math.exp %607 : vector<8x32xf32>
    %cst_162 = arith.constant 1.000000e+00 : f32
    %609 = vector.broadcast %cst_162 : f32 to vector<8x32xf32>
    %610 = arith.addf %609, %608 : vector<8x32xf32>
    %611 = arith.divf %609, %610 : vector<8x32xf32>
    %612 = vector.extract_strided_slice %574 {offsets = [0, 64], sizes = [8, 32], strides = [1, 1]} : vector<8x128xf32> to vector<8x32xf32>
    %613 = math.tanh %612 : vector<8x32xf32>
    %614 = vector.extract_strided_slice %574 {offsets = [0, 96], sizes = [8, 32], strides = [1, 1]} : vector<8x128xf32> to vector<8x32xf32>
    %615 = arith.negf %614 : vector<8x32xf32>
    %616 = math.exp %615 : vector<8x32xf32>
    %cst_163 = arith.constant 1.000000e+00 : f32
    %617 = vector.broadcast %cst_163 : f32 to vector<8x32xf32>
    %618 = arith.addf %617, %616 : vector<8x32xf32>
    %619 = arith.divf %617, %618 : vector<8x32xf32>
    %620 = arith.mulf %611, %564 : vector<8x32xf32>
    %621 = arith.mulf %605, %613 : vector<8x32xf32>
    %622 = arith.addf %620, %621 : vector<8x32xf32>
    %623 = math.tanh %622 : vector<8x32xf32>
    %624 = arith.mulf %619, %623 : vector<8x32xf32>
    %625 = tpu.concatenate %599, %624 in 1 : vector<8x32xf32>, vector<8x32xf32> -> vector<8x64xf32>
    %cst_164 = arith.constant dense<0.000000e+00> : vector<8x256xf32>
    %626 = tpu.matmul %625, %507, %cst_164 {dimension_numbers = #tpu.dot_dimension_numbers<[1], [0], [0], [1], [0, 0, 1, 1], [], []>} : vector<8x64xf32>, vector<64x256xf32>, vector<8x256xf32> -> vector<8x256xf32>
    %c16_165 = arith.constant 16 : index
    %c0_166 = arith.constant 0 : index
    %627 = vector.load %arg10[%c16_165, %c0_166] : memref<64x128xf32, #tpu.memory_space<vmem>>, vector<8x128xf32>
    %628 = vector.extract_strided_slice %626 {offsets = [0, 0], sizes = [8, 128], strides = [1, 1]} : vector<8x256xf32> to vector<8x128xf32>
    %629 = arith.addf %627, %628 : vector<8x128xf32>
    %c40_167 = arith.constant 40 : index
    %c0_168 = arith.constant 0 : index
    %630 = vector.load %arg11[%c40_167, %c0_168] : memref<64x128xf32, #tpu.memory_space<vmem>>, vector<8x128xf32>
    %631 = vector.extract_strided_slice %626 {offsets = [0, 128], sizes = [8, 128], strides = [1, 1]} : vector<8x256xf32> to vector<8x128xf32>
    %632 = arith.addf %630, %631 : vector<8x128xf32>
    %633 = vector.extract_strided_slice %629 {offsets = [0, 0], sizes = [8, 32], strides = [1, 1]} : vector<8x128xf32> to vector<8x32xf32>
    %634 = arith.negf %633 : vector<8x32xf32>
    %635 = math.exp %634 : vector<8x32xf32>
    %cst_169 = arith.constant 1.000000e+00 : f32
    %636 = vector.broadcast %cst_169 : f32 to vector<8x32xf32>
    %637 = arith.addf %636, %635 : vector<8x32xf32>
    %638 = arith.divf %636, %637 : vector<8x32xf32>
    %639 = vector.extract_strided_slice %629 {offsets = [0, 32], sizes = [8, 32], strides = [1, 1]} : vector<8x128xf32> to vector<8x32xf32>
    %640 = arith.negf %639 : vector<8x32xf32>
    %641 = math.exp %640 : vector<8x32xf32>
    %cst_170 = arith.constant 1.000000e+00 : f32
    %642 = vector.broadcast %cst_170 : f32 to vector<8x32xf32>
    %643 = arith.addf %642, %641 : vector<8x32xf32>
    %644 = arith.divf %642, %643 : vector<8x32xf32>
    %645 = vector.extract_strided_slice %629 {offsets = [0, 64], sizes = [8, 32], strides = [1, 1]} : vector<8x128xf32> to vector<8x32xf32>
    %646 = math.tanh %645 : vector<8x32xf32>
    %647 = vector.extract_strided_slice %629 {offsets = [0, 96], sizes = [8, 32], strides = [1, 1]} : vector<8x128xf32> to vector<8x32xf32>
    %648 = arith.negf %647 : vector<8x32xf32>
    %649 = math.exp %648 : vector<8x32xf32>
    %cst_171 = arith.constant 1.000000e+00 : f32
    %650 = vector.broadcast %cst_171 : f32 to vector<8x32xf32>
    %651 = arith.addf %650, %649 : vector<8x32xf32>
    %652 = arith.divf %650, %651 : vector<8x32xf32>
    %653 = arith.mulf %644, %597 : vector<8x32xf32>
    %654 = arith.mulf %638, %646 : vector<8x32xf32>
    %655 = arith.addf %653, %654 : vector<8x32xf32>
    %656 = math.tanh %655 : vector<8x32xf32>
    %657 = arith.mulf %652, %656 : vector<8x32xf32>
    %658 = vector.extract_strided_slice %632 {offsets = [0, 0], sizes = [8, 32], strides = [1, 1]} : vector<8x128xf32> to vector<8x32xf32>
    %659 = arith.negf %658 : vector<8x32xf32>
    %660 = math.exp %659 : vector<8x32xf32>
    %cst_172 = arith.constant 1.000000e+00 : f32
    %661 = vector.broadcast %cst_172 : f32 to vector<8x32xf32>
    %662 = arith.addf %661, %660 : vector<8x32xf32>
    %663 = arith.divf %661, %662 : vector<8x32xf32>
    %664 = vector.extract_strided_slice %632 {offsets = [0, 32], sizes = [8, 32], strides = [1, 1]} : vector<8x128xf32> to vector<8x32xf32>
    %665 = arith.negf %664 : vector<8x32xf32>
    %666 = math.exp %665 : vector<8x32xf32>
    %cst_173 = arith.constant 1.000000e+00 : f32
    %667 = vector.broadcast %cst_173 : f32 to vector<8x32xf32>
    %668 = arith.addf %667, %666 : vector<8x32xf32>
    %669 = arith.divf %667, %668 : vector<8x32xf32>
    %670 = vector.extract_strided_slice %632 {offsets = [0, 64], sizes = [8, 32], strides = [1, 1]} : vector<8x128xf32> to vector<8x32xf32>
    %671 = math.tanh %670 : vector<8x32xf32>
    %672 = vector.extract_strided_slice %632 {offsets = [0, 96], sizes = [8, 32], strides = [1, 1]} : vector<8x128xf32> to vector<8x32xf32>
    %673 = arith.negf %672 : vector<8x32xf32>
    %674 = math.exp %673 : vector<8x32xf32>
    %cst_174 = arith.constant 1.000000e+00 : f32
    %675 = vector.broadcast %cst_174 : f32 to vector<8x32xf32>
    %676 = arith.addf %675, %674 : vector<8x32xf32>
    %677 = arith.divf %675, %676 : vector<8x32xf32>
    %678 = arith.mulf %669, %622 : vector<8x32xf32>
    %679 = arith.mulf %663, %671 : vector<8x32xf32>
    %680 = arith.addf %678, %679 : vector<8x32xf32>
    %681 = math.tanh %680 : vector<8x32xf32>
    %682 = arith.mulf %677, %681 : vector<8x32xf32>
    %683 = tpu.concatenate %657, %682 in 1 : vector<8x32xf32>, vector<8x32xf32> -> vector<8x64xf32>
    %cst_175 = arith.constant dense<0.000000e+00> : vector<8x256xf32>
    %684 = tpu.matmul %683, %507, %cst_175 {dimension_numbers = #tpu.dot_dimension_numbers<[1], [0], [0], [1], [0, 0, 1, 1], [], []>} : vector<8x64xf32>, vector<64x256xf32>, vector<8x256xf32> -> vector<8x256xf32>
    %c24_176 = arith.constant 24 : index
    %c0_177 = arith.constant 0 : index
    %685 = vector.load %arg10[%c24_176, %c0_177] : memref<64x128xf32, #tpu.memory_space<vmem>>, vector<8x128xf32>
    %686 = vector.extract_strided_slice %684 {offsets = [0, 0], sizes = [8, 128], strides = [1, 1]} : vector<8x256xf32> to vector<8x128xf32>
    %687 = arith.addf %685, %686 : vector<8x128xf32>
    %c32_178 = arith.constant 32 : index
    %c0_179 = arith.constant 0 : index
    %688 = vector.load %arg11[%c32_178, %c0_179] : memref<64x128xf32, #tpu.memory_space<vmem>>, vector<8x128xf32>
    %689 = vector.extract_strided_slice %684 {offsets = [0, 128], sizes = [8, 128], strides = [1, 1]} : vector<8x256xf32> to vector<8x128xf32>
    %690 = arith.addf %688, %689 : vector<8x128xf32>
    %691 = vector.extract_strided_slice %687 {offsets = [0, 0], sizes = [8, 32], strides = [1, 1]} : vector<8x128xf32> to vector<8x32xf32>
    %692 = arith.negf %691 : vector<8x32xf32>
    %693 = math.exp %692 : vector<8x32xf32>
    %cst_180 = arith.constant 1.000000e+00 : f32
    %694 = vector.broadcast %cst_180 : f32 to vector<8x32xf32>
    %695 = arith.addf %694, %693 : vector<8x32xf32>
    %696 = arith.divf %694, %695 : vector<8x32xf32>
    %697 = vector.extract_strided_slice %687 {offsets = [0, 32], sizes = [8, 32], strides = [1, 1]} : vector<8x128xf32> to vector<8x32xf32>
    %698 = arith.negf %697 : vector<8x32xf32>
    %699 = math.exp %698 : vector<8x32xf32>
    %cst_181 = arith.constant 1.000000e+00 : f32
    %700 = vector.broadcast %cst_181 : f32 to vector<8x32xf32>
    %701 = arith.addf %700, %699 : vector<8x32xf32>
    %702 = arith.divf %700, %701 : vector<8x32xf32>
    %703 = vector.extract_strided_slice %687 {offsets = [0, 64], sizes = [8, 32], strides = [1, 1]} : vector<8x128xf32> to vector<8x32xf32>
    %704 = math.tanh %703 : vector<8x32xf32>
    %705 = vector.extract_strided_slice %687 {offsets = [0, 96], sizes = [8, 32], strides = [1, 1]} : vector<8x128xf32> to vector<8x32xf32>
    %706 = arith.negf %705 : vector<8x32xf32>
    %707 = math.exp %706 : vector<8x32xf32>
    %cst_182 = arith.constant 1.000000e+00 : f32
    %708 = vector.broadcast %cst_182 : f32 to vector<8x32xf32>
    %709 = arith.addf %708, %707 : vector<8x32xf32>
    %710 = arith.divf %708, %709 : vector<8x32xf32>
    %711 = arith.mulf %702, %655 : vector<8x32xf32>
    %712 = arith.mulf %696, %704 : vector<8x32xf32>
    %713 = arith.addf %711, %712 : vector<8x32xf32>
    %714 = math.tanh %713 : vector<8x32xf32>
    %715 = arith.mulf %710, %714 : vector<8x32xf32>
    %716 = vector.extract_strided_slice %690 {offsets = [0, 0], sizes = [8, 32], strides = [1, 1]} : vector<8x128xf32> to vector<8x32xf32>
    %717 = arith.negf %716 : vector<8x32xf32>
    %718 = math.exp %717 : vector<8x32xf32>
    %cst_183 = arith.constant 1.000000e+00 : f32
    %719 = vector.broadcast %cst_183 : f32 to vector<8x32xf32>
    %720 = arith.addf %719, %718 : vector<8x32xf32>
    %721 = arith.divf %719, %720 : vector<8x32xf32>
    %722 = vector.extract_strided_slice %690 {offsets = [0, 32], sizes = [8, 32], strides = [1, 1]} : vector<8x128xf32> to vector<8x32xf32>
    %723 = arith.negf %722 : vector<8x32xf32>
    %724 = math.exp %723 : vector<8x32xf32>
    %cst_184 = arith.constant 1.000000e+00 : f32
    %725 = vector.broadcast %cst_184 : f32 to vector<8x32xf32>
    %726 = arith.addf %725, %724 : vector<8x32xf32>
    %727 = arith.divf %725, %726 : vector<8x32xf32>
    %728 = vector.extract_strided_slice %690 {offsets = [0, 64], sizes = [8, 32], strides = [1, 1]} : vector<8x128xf32> to vector<8x32xf32>
    %729 = math.tanh %728 : vector<8x32xf32>
    %730 = vector.extract_strided_slice %690 {offsets = [0, 96], sizes = [8, 32], strides = [1, 1]} : vector<8x128xf32> to vector<8x32xf32>
    %731 = arith.negf %730 : vector<8x32xf32>
    %732 = math.exp %731 : vector<8x32xf32>
    %cst_185 = arith.constant 1.000000e+00 : f32
    %733 = vector.broadcast %cst_185 : f32 to vector<8x32xf32>
    %734 = arith.addf %733, %732 : vector<8x32xf32>
    %735 = arith.divf %733, %734 : vector<8x32xf32>
    %736 = arith.mulf %727, %680 : vector<8x32xf32>
    %737 = arith.mulf %721, %729 : vector<8x32xf32>
    %738 = arith.addf %736, %737 : vector<8x32xf32>
    %739 = math.tanh %738 : vector<8x32xf32>
    %740 = arith.mulf %735, %739 : vector<8x32xf32>
    %741 = tpu.concatenate %715, %740 in 1 : vector<8x32xf32>, vector<8x32xf32> -> vector<8x64xf32>
    %cst_186 = arith.constant dense<0.000000e+00> : vector<8x256xf32>
    %742 = tpu.matmul %741, %507, %cst_186 {dimension_numbers = #tpu.dot_dimension_numbers<[1], [0], [0], [1], [0, 0, 1, 1], [], []>} : vector<8x64xf32>, vector<64x256xf32>, vector<8x256xf32> -> vector<8x256xf32>
    %c32_187 = arith.constant 32 : index
    %c0_188 = arith.constant 0 : index
    %743 = vector.load %arg10[%c32_187, %c0_188] : memref<64x128xf32, #tpu.memory_space<vmem>>, vector<8x128xf32>
    %744 = vector.extract_strided_slice %742 {offsets = [0, 0], sizes = [8, 128], strides = [1, 1]} : vector<8x256xf32> to vector<8x128xf32>
    %745 = arith.addf %743, %744 : vector<8x128xf32>
    %c24_189 = arith.constant 24 : index
    %c0_190 = arith.constant 0 : index
    %746 = vector.load %arg11[%c24_189, %c0_190] : memref<64x128xf32, #tpu.memory_space<vmem>>, vector<8x128xf32>
    %747 = vector.extract_strided_slice %742 {offsets = [0, 128], sizes = [8, 128], strides = [1, 1]} : vector<8x256xf32> to vector<8x128xf32>
    %748 = arith.addf %746, %747 : vector<8x128xf32>
    %749 = vector.extract_strided_slice %745 {offsets = [0, 0], sizes = [8, 32], strides = [1, 1]} : vector<8x128xf32> to vector<8x32xf32>
    %750 = arith.negf %749 : vector<8x32xf32>
    %751 = math.exp %750 : vector<8x32xf32>
    %cst_191 = arith.constant 1.000000e+00 : f32
    %752 = vector.broadcast %cst_191 : f32 to vector<8x32xf32>
    %753 = arith.addf %752, %751 : vector<8x32xf32>
    %754 = arith.divf %752, %753 : vector<8x32xf32>
    %755 = vector.extract_strided_slice %745 {offsets = [0, 32], sizes = [8, 32], strides = [1, 1]} : vector<8x128xf32> to vector<8x32xf32>
    %756 = arith.negf %755 : vector<8x32xf32>
    %757 = math.exp %756 : vector<8x32xf32>
    %cst_192 = arith.constant 1.000000e+00 : f32
    %758 = vector.broadcast %cst_192 : f32 to vector<8x32xf32>
    %759 = arith.addf %758, %757 : vector<8x32xf32>
    %760 = arith.divf %758, %759 : vector<8x32xf32>
    %761 = vector.extract_strided_slice %745 {offsets = [0, 64], sizes = [8, 32], strides = [1, 1]} : vector<8x128xf32> to vector<8x32xf32>
    %762 = math.tanh %761 : vector<8x32xf32>
    %763 = vector.extract_strided_slice %745 {offsets = [0, 96], sizes = [8, 32], strides = [1, 1]} : vector<8x128xf32> to vector<8x32xf32>
    %764 = arith.negf %763 : vector<8x32xf32>
    %765 = math.exp %764 : vector<8x32xf32>
    %cst_193 = arith.constant 1.000000e+00 : f32
    %766 = vector.broadcast %cst_193 : f32 to vector<8x32xf32>
    %767 = arith.addf %766, %765 : vector<8x32xf32>
    %768 = arith.divf %766, %767 : vector<8x32xf32>
    %769 = arith.mulf %760, %713 : vector<8x32xf32>
    %770 = arith.mulf %754, %762 : vector<8x32xf32>
    %771 = arith.addf %769, %770 : vector<8x32xf32>
    %772 = math.tanh %771 : vector<8x32xf32>
    %773 = arith.mulf %768, %772 : vector<8x32xf32>
    %774 = vector.extract_strided_slice %748 {offsets = [0, 0], sizes = [8, 32], strides = [1, 1]} : vector<8x128xf32> to vector<8x32xf32>
    %775 = arith.negf %774 : vector<8x32xf32>
    %776 = math.exp %775 : vector<8x32xf32>
    %cst_194 = arith.constant 1.000000e+00 : f32
    %777 = vector.broadcast %cst_194 : f32 to vector<8x32xf32>
    %778 = arith.addf %777, %776 : vector<8x32xf32>
    %779 = arith.divf %777, %778 : vector<8x32xf32>
    %780 = vector.extract_strided_slice %748 {offsets = [0, 32], sizes = [8, 32], strides = [1, 1]} : vector<8x128xf32> to vector<8x32xf32>
    %781 = arith.negf %780 : vector<8x32xf32>
    %782 = math.exp %781 : vector<8x32xf32>
    %cst_195 = arith.constant 1.000000e+00 : f32
    %783 = vector.broadcast %cst_195 : f32 to vector<8x32xf32>
    %784 = arith.addf %783, %782 : vector<8x32xf32>
    %785 = arith.divf %783, %784 : vector<8x32xf32>
    %786 = vector.extract_strided_slice %748 {offsets = [0, 64], sizes = [8, 32], strides = [1, 1]} : vector<8x128xf32> to vector<8x32xf32>
    %787 = math.tanh %786 : vector<8x32xf32>
    %788 = vector.extract_strided_slice %748 {offsets = [0, 96], sizes = [8, 32], strides = [1, 1]} : vector<8x128xf32> to vector<8x32xf32>
    %789 = arith.negf %788 : vector<8x32xf32>
    %790 = math.exp %789 : vector<8x32xf32>
    %cst_196 = arith.constant 1.000000e+00 : f32
    %791 = vector.broadcast %cst_196 : f32 to vector<8x32xf32>
    %792 = arith.addf %791, %790 : vector<8x32xf32>
    %793 = arith.divf %791, %792 : vector<8x32xf32>
    %794 = arith.mulf %785, %738 : vector<8x32xf32>
    %795 = arith.mulf %779, %787 : vector<8x32xf32>
    %796 = arith.addf %794, %795 : vector<8x32xf32>
    %797 = math.tanh %796 : vector<8x32xf32>
    %798 = arith.mulf %793, %797 : vector<8x32xf32>
    %799 = tpu.concatenate %773, %798 in 1 : vector<8x32xf32>, vector<8x32xf32> -> vector<8x64xf32>
    %cst_197 = arith.constant dense<0.000000e+00> : vector<8x256xf32>
    %800 = tpu.matmul %799, %507, %cst_197 {dimension_numbers = #tpu.dot_dimension_numbers<[1], [0], [0], [1], [0, 0, 1, 1], [], []>} : vector<8x64xf32>, vector<64x256xf32>, vector<8x256xf32> -> vector<8x256xf32>
    %c40_198 = arith.constant 40 : index
    %c0_199 = arith.constant 0 : index
    %801 = vector.load %arg10[%c40_198, %c0_199] : memref<64x128xf32, #tpu.memory_space<vmem>>, vector<8x128xf32>
    %802 = vector.extract_strided_slice %800 {offsets = [0, 0], sizes = [8, 128], strides = [1, 1]} : vector<8x256xf32> to vector<8x128xf32>
    %803 = arith.addf %801, %802 : vector<8x128xf32>
    %c16_200 = arith.constant 16 : index
    %c0_201 = arith.constant 0 : index
    %804 = vector.load %arg11[%c16_200, %c0_201] : memref<64x128xf32, #tpu.memory_space<vmem>>, vector<8x128xf32>
    %805 = vector.extract_strided_slice %800 {offsets = [0, 128], sizes = [8, 128], strides = [1, 1]} : vector<8x256xf32> to vector<8x128xf32>
    %806 = arith.addf %804, %805 : vector<8x128xf32>
    %807 = vector.extract_strided_slice %803 {offsets = [0, 0], sizes = [8, 32], strides = [1, 1]} : vector<8x128xf32> to vector<8x32xf32>
    %808 = arith.negf %807 : vector<8x32xf32>
    %809 = math.exp %808 : vector<8x32xf32>
    %cst_202 = arith.constant 1.000000e+00 : f32
    %810 = vector.broadcast %cst_202 : f32 to vector<8x32xf32>
    %811 = arith.addf %810, %809 : vector<8x32xf32>
    %812 = arith.divf %810, %811 : vector<8x32xf32>
    %813 = vector.extract_strided_slice %803 {offsets = [0, 32], sizes = [8, 32], strides = [1, 1]} : vector<8x128xf32> to vector<8x32xf32>
    %814 = arith.negf %813 : vector<8x32xf32>
    %815 = math.exp %814 : vector<8x32xf32>
    %cst_203 = arith.constant 1.000000e+00 : f32
    %816 = vector.broadcast %cst_203 : f32 to vector<8x32xf32>
    %817 = arith.addf %816, %815 : vector<8x32xf32>
    %818 = arith.divf %816, %817 : vector<8x32xf32>
    %819 = vector.extract_strided_slice %803 {offsets = [0, 64], sizes = [8, 32], strides = [1, 1]} : vector<8x128xf32> to vector<8x32xf32>
    %820 = math.tanh %819 : vector<8x32xf32>
    %821 = vector.extract_strided_slice %803 {offsets = [0, 96], sizes = [8, 32], strides = [1, 1]} : vector<8x128xf32> to vector<8x32xf32>
    %822 = arith.negf %821 : vector<8x32xf32>
    %823 = math.exp %822 : vector<8x32xf32>
    %cst_204 = arith.constant 1.000000e+00 : f32
    %824 = vector.broadcast %cst_204 : f32 to vector<8x32xf32>
    %825 = arith.addf %824, %823 : vector<8x32xf32>
    %826 = arith.divf %824, %825 : vector<8x32xf32>
    %827 = arith.mulf %818, %771 : vector<8x32xf32>
    %828 = arith.mulf %812, %820 : vector<8x32xf32>
    %829 = arith.addf %827, %828 : vector<8x32xf32>
    %830 = math.tanh %829 : vector<8x32xf32>
    %831 = arith.mulf %826, %830 : vector<8x32xf32>
    %832 = vector.extract_strided_slice %806 {offsets = [0, 0], sizes = [8, 32], strides = [1, 1]} : vector<8x128xf32> to vector<8x32xf32>
    %833 = arith.negf %832 : vector<8x32xf32>
    %834 = math.exp %833 : vector<8x32xf32>
    %cst_205 = arith.constant 1.000000e+00 : f32
    %835 = vector.broadcast %cst_205 : f32 to vector<8x32xf32>
    %836 = arith.addf %835, %834 : vector<8x32xf32>
    %837 = arith.divf %835, %836 : vector<8x32xf32>
    %838 = vector.extract_strided_slice %806 {offsets = [0, 32], sizes = [8, 32], strides = [1, 1]} : vector<8x128xf32> to vector<8x32xf32>
    %839 = arith.negf %838 : vector<8x32xf32>
    %840 = math.exp %839 : vector<8x32xf32>
    %cst_206 = arith.constant 1.000000e+00 : f32
    %841 = vector.broadcast %cst_206 : f32 to vector<8x32xf32>
    %842 = arith.addf %841, %840 : vector<8x32xf32>
    %843 = arith.divf %841, %842 : vector<8x32xf32>
    %844 = vector.extract_strided_slice %806 {offsets = [0, 64], sizes = [8, 32], strides = [1, 1]} : vector<8x128xf32> to vector<8x32xf32>
    %845 = math.tanh %844 : vector<8x32xf32>
    %846 = vector.extract_strided_slice %806 {offsets = [0, 96], sizes = [8, 32], strides = [1, 1]} : vector<8x128xf32> to vector<8x32xf32>
    %847 = arith.negf %846 : vector<8x32xf32>
    %848 = math.exp %847 : vector<8x32xf32>
    %cst_207 = arith.constant 1.000000e+00 : f32
    %849 = vector.broadcast %cst_207 : f32 to vector<8x32xf32>
    %850 = arith.addf %849, %848 : vector<8x32xf32>
    %851 = arith.divf %849, %850 : vector<8x32xf32>
    %852 = arith.mulf %843, %796 : vector<8x32xf32>
    %853 = arith.mulf %837, %845 : vector<8x32xf32>
    %854 = arith.addf %852, %853 : vector<8x32xf32>
    %855 = math.tanh %854 : vector<8x32xf32>
    %856 = arith.mulf %851, %855 : vector<8x32xf32>
    %857 = tpu.concatenate %831, %856 in 1 : vector<8x32xf32>, vector<8x32xf32> -> vector<8x64xf32>
    %cst_208 = arith.constant dense<0.000000e+00> : vector<8x256xf32>
    %858 = tpu.matmul %857, %507, %cst_208 {dimension_numbers = #tpu.dot_dimension_numbers<[1], [0], [0], [1], [0, 0, 1, 1], [], []>} : vector<8x64xf32>, vector<64x256xf32>, vector<8x256xf32> -> vector<8x256xf32>
    %c48_209 = arith.constant 48 : index
    %c0_210 = arith.constant 0 : index
    %859 = vector.load %arg10[%c48_209, %c0_210] : memref<64x128xf32, #tpu.memory_space<vmem>>, vector<8x128xf32>
    %860 = vector.extract_strided_slice %858 {offsets = [0, 0], sizes = [8, 128], strides = [1, 1]} : vector<8x256xf32> to vector<8x128xf32>
    %861 = arith.addf %859, %860 : vector<8x128xf32>
    %c8_211 = arith.constant 8 : index
    %c0_212 = arith.constant 0 : index
    %862 = vector.load %arg11[%c8_211, %c0_212] : memref<64x128xf32, #tpu.memory_space<vmem>>, vector<8x128xf32>
    %863 = vector.extract_strided_slice %858 {offsets = [0, 128], sizes = [8, 128], strides = [1, 1]} : vector<8x256xf32> to vector<8x128xf32>
    %864 = arith.addf %862, %863 : vector<8x128xf32>
    %865 = vector.extract_strided_slice %861 {offsets = [0, 0], sizes = [8, 32], strides = [1, 1]} : vector<8x128xf32> to vector<8x32xf32>
    %866 = arith.negf %865 : vector<8x32xf32>
    %867 = math.exp %866 : vector<8x32xf32>
    %cst_213 = arith.constant 1.000000e+00 : f32
    %868 = vector.broadcast %cst_213 : f32 to vector<8x32xf32>
    %869 = arith.addf %868, %867 : vector<8x32xf32>
    %870 = arith.divf %868, %869 : vector<8x32xf32>
    %871 = vector.extract_strided_slice %861 {offsets = [0, 32], sizes = [8, 32], strides = [1, 1]} : vector<8x128xf32> to vector<8x32xf32>
    %872 = arith.negf %871 : vector<8x32xf32>
    %873 = math.exp %872 : vector<8x32xf32>
    %cst_214 = arith.constant 1.000000e+00 : f32
    %874 = vector.broadcast %cst_214 : f32 to vector<8x32xf32>
    %875 = arith.addf %874, %873 : vector<8x32xf32>
    %876 = arith.divf %874, %875 : vector<8x32xf32>
    %877 = vector.extract_strided_slice %861 {offsets = [0, 64], sizes = [8, 32], strides = [1, 1]} : vector<8x128xf32> to vector<8x32xf32>
    %878 = math.tanh %877 : vector<8x32xf32>
    %879 = vector.extract_strided_slice %861 {offsets = [0, 96], sizes = [8, 32], strides = [1, 1]} : vector<8x128xf32> to vector<8x32xf32>
    %880 = arith.negf %879 : vector<8x32xf32>
    %881 = math.exp %880 : vector<8x32xf32>
    %cst_215 = arith.constant 1.000000e+00 : f32
    %882 = vector.broadcast %cst_215 : f32 to vector<8x32xf32>
    %883 = arith.addf %882, %881 : vector<8x32xf32>
    %884 = arith.divf %882, %883 : vector<8x32xf32>
    %885 = arith.mulf %876, %829 : vector<8x32xf32>
    %886 = arith.mulf %870, %878 : vector<8x32xf32>
    %887 = arith.addf %885, %886 : vector<8x32xf32>
    %888 = math.tanh %887 : vector<8x32xf32>
    %889 = arith.mulf %884, %888 : vector<8x32xf32>
    %890 = vector.extract_strided_slice %864 {offsets = [0, 0], sizes = [8, 32], strides = [1, 1]} : vector<8x128xf32> to vector<8x32xf32>
    %891 = arith.negf %890 : vector<8x32xf32>
    %892 = math.exp %891 : vector<8x32xf32>
    %cst_216 = arith.constant 1.000000e+00 : f32
    %893 = vector.broadcast %cst_216 : f32 to vector<8x32xf32>
    %894 = arith.addf %893, %892 : vector<8x32xf32>
    %895 = arith.divf %893, %894 : vector<8x32xf32>
    %896 = vector.extract_strided_slice %864 {offsets = [0, 32], sizes = [8, 32], strides = [1, 1]} : vector<8x128xf32> to vector<8x32xf32>
    %897 = arith.negf %896 : vector<8x32xf32>
    %898 = math.exp %897 : vector<8x32xf32>
    %cst_217 = arith.constant 1.000000e+00 : f32
    %899 = vector.broadcast %cst_217 : f32 to vector<8x32xf32>
    %900 = arith.addf %899, %898 : vector<8x32xf32>
    %901 = arith.divf %899, %900 : vector<8x32xf32>
    %902 = vector.extract_strided_slice %864 {offsets = [0, 64], sizes = [8, 32], strides = [1, 1]} : vector<8x128xf32> to vector<8x32xf32>
    %903 = math.tanh %902 : vector<8x32xf32>
    %904 = vector.extract_strided_slice %864 {offsets = [0, 96], sizes = [8, 32], strides = [1, 1]} : vector<8x128xf32> to vector<8x32xf32>
    %905 = arith.negf %904 : vector<8x32xf32>
    %906 = math.exp %905 : vector<8x32xf32>
    %cst_218 = arith.constant 1.000000e+00 : f32
    %907 = vector.broadcast %cst_218 : f32 to vector<8x32xf32>
    %908 = arith.addf %907, %906 : vector<8x32xf32>
    %909 = arith.divf %907, %908 : vector<8x32xf32>
    %910 = arith.mulf %901, %854 : vector<8x32xf32>
    %911 = arith.mulf %895, %903 : vector<8x32xf32>
    %912 = arith.addf %910, %911 : vector<8x32xf32>
    %913 = math.tanh %912 : vector<8x32xf32>
    %914 = arith.mulf %909, %913 : vector<8x32xf32>
    %915 = tpu.concatenate %889, %914 in 1 : vector<8x32xf32>, vector<8x32xf32> -> vector<8x64xf32>
    %cst_219 = arith.constant dense<0.000000e+00> : vector<8x256xf32>
    %916 = tpu.matmul %915, %507, %cst_219 {dimension_numbers = #tpu.dot_dimension_numbers<[1], [0], [0], [1], [0, 0, 1, 1], [], []>} : vector<8x64xf32>, vector<64x256xf32>, vector<8x256xf32> -> vector<8x256xf32>
    %c56_220 = arith.constant 56 : index
    %c0_221 = arith.constant 0 : index
    %917 = vector.load %arg10[%c56_220, %c0_221] : memref<64x128xf32, #tpu.memory_space<vmem>>, vector<8x128xf32>
    %918 = vector.extract_strided_slice %916 {offsets = [0, 0], sizes = [8, 128], strides = [1, 1]} : vector<8x256xf32> to vector<8x128xf32>
    %919 = arith.addf %917, %918 : vector<8x128xf32>
    %920 = vector.extract_strided_slice %919 {offsets = [0, 0], sizes = [8, 32], strides = [1, 1]} : vector<8x128xf32> to vector<8x32xf32>
    %921 = arith.negf %920 : vector<8x32xf32>
    %922 = math.exp %921 : vector<8x32xf32>
    %cst_222 = arith.constant 1.000000e+00 : f32
    %923 = vector.broadcast %cst_222 : f32 to vector<8x32xf32>
    %924 = arith.addf %923, %922 : vector<8x32xf32>
    %925 = arith.divf %923, %924 : vector<8x32xf32>
    %926 = vector.extract_strided_slice %919 {offsets = [0, 32], sizes = [8, 32], strides = [1, 1]} : vector<8x128xf32> to vector<8x32xf32>
    %927 = arith.negf %926 : vector<8x32xf32>
    %928 = math.exp %927 : vector<8x32xf32>
    %cst_223 = arith.constant 1.000000e+00 : f32
    %929 = vector.broadcast %cst_223 : f32 to vector<8x32xf32>
    %930 = arith.addf %929, %928 : vector<8x32xf32>
    %931 = arith.divf %929, %930 : vector<8x32xf32>
    %932 = vector.extract_strided_slice %919 {offsets = [0, 64], sizes = [8, 32], strides = [1, 1]} : vector<8x128xf32> to vector<8x32xf32>
    %933 = math.tanh %932 : vector<8x32xf32>
    %934 = vector.extract_strided_slice %919 {offsets = [0, 96], sizes = [8, 32], strides = [1, 1]} : vector<8x128xf32> to vector<8x32xf32>
    %935 = arith.negf %934 : vector<8x32xf32>
    %936 = math.exp %935 : vector<8x32xf32>
    %cst_224 = arith.constant 1.000000e+00 : f32
    %937 = vector.broadcast %cst_224 : f32 to vector<8x32xf32>
    %938 = arith.addf %937, %936 : vector<8x32xf32>
    %939 = arith.divf %937, %938 : vector<8x32xf32>
    %940 = arith.mulf %931, %887 : vector<8x32xf32>
    %941 = arith.mulf %925, %933 : vector<8x32xf32>
    %942 = arith.addf %940, %941 : vector<8x32xf32>
    %943 = math.tanh %942 : vector<8x32xf32>
    %944 = arith.mulf %939, %943 : vector<8x32xf32>
    %c0_225 = arith.constant 0 : index
    %c0_226 = arith.constant 0 : index
    %945 = vector.load %arg7[%c0_225, %c0_226] : memref<64x1xf32, #tpu.memory_space<vmem>>, vector<64x1xf32>
    %946 = vector.extract_strided_slice %945 {offsets = [0, 0], sizes = [32, 1], strides = [1, 1]} : vector<64x1xf32> to vector<32x1xf32>
    %cst_227 = arith.constant dense<0.000000e+00> : vector<8x1xf32>
    %947 = tpu.matmul %944, %946, %cst_227 {dimension_numbers = #tpu.dot_dimension_numbers<[1], [0], [0], [1], [0, 0, 1, 1], [], []>} : vector<8x32xf32>, vector<32x1xf32>, vector<8x1xf32> -> vector<8x1xf32>
    %948 = vector.extract_strided_slice %945 {offsets = [32, 0], sizes = [32, 1], strides = [1, 1]} : vector<64x1xf32> to vector<32x1xf32>
    %cst_228 = arith.constant dense<0.000000e+00> : vector<8x1xf32>
    %949 = tpu.matmul %566, %948, %cst_228 {dimension_numbers = #tpu.dot_dimension_numbers<[1], [0], [0], [1], [0, 0, 1, 1], [], []>} : vector<8x32xf32>, vector<32x1xf32>, vector<8x1xf32> -> vector<8x1xf32>
    %950 = arith.addf %947, %949 : vector<8x1xf32>
    %c0_229 = arith.constant 0 : index
    %c0_230 = arith.constant 0 : index
    %951 = vector.load %arg8[%c0_229, %c0_230] : memref<1x1xf32, #tpu.memory_space<vmem>>, vector<1x1xf32>
    %952 = vector.broadcast %951 : vector<1x1xf32> to vector<8x1xf32>
    %953 = arith.addf %950, %952 : vector<8x1xf32>
    %c0_231 = arith.constant 0 : index
    %c0_232 = arith.constant 0 : index
    %954 = vector.load %arg9[%c0_231, %c0_232] : memref<8x1xf32, #tpu.memory_space<vmem>>, vector<8x1xf32>
    tpu.vector_store %arg9[%c0_231, %c0_232], %953 {strides = array<i32>} : memref<8x1xf32, #tpu.memory_space<vmem>>, vector<8x1xf32>,
    return
  }
}

</mosaic_0001>

<llo_original>
// kernel: rnn_base_forward.1
$region0: #{rnn_base_forward.1}
  #allocation0 [shape = 'u32[]', space=smem, size = 0x4, offset = 0x4, fixed_abs, tag = 'smem constant byte address 0x4 - core index']
  #allocation1 [shape = 'u32[144,128]{1,0:T(1,128)}', space=vmem, size = 0x12000, scoped, tag = 'internal scratch']
  #allocation2 [shape = 'f32[64,128]{1,0:T(8,128)}', space=vmem, size = 0x8000, scoped, tag = 'scratch operand']
  #allocation3 [shape = 'f32[64,128]{1,0:T(8,128)}', space=vmem, size = 0x8000, scoped, tag = 'scratch operand']
  #allocation4 [shape = 'f32[64,32]{1,0:T(8,128)}', space=vmem, size = 0x8000, scoped, tag = 'scratch operand']
  #allocation5 [shape = 'f32[64,32]{1,0:T(8,128)}', space=vmem, size = 0x8000, scoped, tag = 'scratch operand']
  #allocation6 [shape = 'f32[1,1]{1,0:T(1,128)S(1)}', space=vmem, size = 0x200, scoped, tag = 'scoped memory for rnn_base_forward.1']
  %s0 = inlined_call_operand.vmem [shape: f32[64,4], index: 0, kind: input, shape index: {}]
  %s1 = inlined_call_operand.vmem [shape: f32[4,256], index: 1, kind: input, shape index: {}]
  %s2 = inlined_call_operand.vmem [shape: f32[64,256], index: 2, kind: input, shape index: {}]
  %s3 = inlined_call_operand.vmem [shape: f32[1,256], index: 3, kind: input, shape index: {}]
  %s4 = inlined_call_operand.vmem [shape: f32[64,256], index: 4, kind: input, shape index: {}]
  %s5 = inlined_call_operand.vmem [shape: f32[64,256], index: 5, kind: input, shape index: {}]
  %s6 = inlined_call_operand.vmem [shape: f32[1,256], index: 6, kind: input, shape index: {}]
  %s7 = inlined_call_operand.vmem [shape: f32[64,1], index: 7, kind: input, shape index: {}]
  %s8 = inlined_call_operand.<no memory space> [shape: f32[1,1], index: 8, kind: input, shape index: {}]
  %s9 = inlined_call_operand.vmem [shape: f32[8,1], index: 9, kind: output, shape index: {}]
  %s10 = sld [smem:[#allocation0]]
  $region46: #{rnn_base_forward.1} parent=0
    _
  %s12 = ssub.s32 1, %s10
  %s13 = scalar_select 0, %s12, %s10
  %v14 = vstv %s8
  %15 = vst [vmem:[#allocation6] sm:$0x1] %v14
  // Predicated region
  $region2: #{rnn_base_forward.1} parent=0 // pred_check
    _
  $region3: #{rnn_base_forward.1} parent=0 // pred_check_branch
    %17 = sbr.rel (0) target = $region5
  $region4: #{rnn_base_forward.1} parent=0 // pred_region
    _
  $region5: #{rnn_base_forward.1} parent=0 // pred_fallthru
    _
  // Predicated region
  $region6: #{rnn_base_forward.1} parent=0 // pred_check
    _
  $region7: #{rnn_base_forward.1} parent=0 // pred_check_branch
    %19 = sbr.rel (0) target = $region9
  $region8: #{rnn_base_forward.1} parent=0 // pred_region
    _
  $region9: #{rnn_base_forward.1} parent=0 // pred_fallthru
    _
  // Predicated region
  $region10: #{rnn_base_forward.1} parent=0 // pred_check
    _
  $region11: #{rnn_base_forward.1} parent=0 // pred_check_branch
    %21 = sbr.rel (0) target = $region13
  $region12: #{rnn_base_forward.1} parent=0 // pred_region
    _
  $region13: #{rnn_base_forward.1} parent=0 // pred_fallthru
    _
  // Predicated region
  $region14: #{rnn_base_forward.1} parent=0 // pred_check
    _
  $region15: #{rnn_base_forward.1} parent=0 // pred_check_branch
    %23 = sbr.rel (0) target = $region17
  $region16: #{rnn_base_forward.1} parent=0 // pred_region
    _
  $region17: #{rnn_base_forward.1} parent=0 // pred_fallthru
    _
  // Predicated region
  $region18: #{rnn_base_forward.1} parent=0 // pred_check
    _
  $region19: #{rnn_base_forward.1} parent=0 // pred_check_branch
    %25 = sbr.rel (0) target = $region21
  $region20: #{rnn_base_forward.1} parent=0 // pred_region
    _
  $region21: #{rnn_base_forward.1} parent=0 // pred_fallthru
    _
  // Predicated region
  $region22: #{rnn_base_forward.1} parent=0 // pred_check
    _
  $region23: #{rnn_base_forward.1} parent=0 // pred_check_branch
    %27 = sbr.rel (0) target = $region25
  $region24: #{rnn_base_forward.1} parent=0 // pred_region
    _
  $region25: #{rnn_base_forward.1} parent=0 // pred_fallthru
    _
  // Predicated region
  $region26: #{rnn_base_forward.1} parent=0 // pred_check
    _
  $region27: #{rnn_base_forward.1} parent=0 // pred_check_branch
    %29 = sbr.rel (0) target = $region29
  $region28: #{rnn_base_forward.1} parent=0 // pred_region
    _
  $region29: #{rnn_base_forward.1} parent=0 // pred_fallthru
    _
  // Predicated region
  $region30: #{rnn_base_forward.1} parent=0 // pred_check
    _
  $region31: #{rnn_base_forward.1} parent=0 // pred_check_branch
    %31 = sbr.rel (0) target = $region33
  $region32: #{rnn_base_forward.1} parent=0 // pred_region
    _
  $region33: #{rnn_base_forward.1} parent=0 // pred_fallthru
    _
  // Predicated region
  $region34: #{rnn_base_forward.1} parent=0 // pred_check
    _
  $region35: #{rnn_base_forward.1} parent=0 // pred_check_branch
    %33 = sbr.rel (0) target = $region37
  $region36: #{rnn_base_forward.1} parent=0 // pred_region
    _
  $region37: #{rnn_base_forward.1} parent=0 // pred_fallthru
    _
  %v34 = vld [vmem:[%s3] sm:$0x3]
  %v35 = vld [vmem:[%s0] sm:$0xff]
  %v36 = vld [vmem:[%s0 + $0x8] sm:$0xff]
  %v37 = vld [vmem:[%s0 + $0x10] sm:$0xff]
  %v38 = vld [vmem:[%s0 + $0x18] sm:$0xff]
  %v39 = vld [vmem:[%s0 + $0x20] sm:$0xff]
  %v40 = vld [vmem:[%s0 + $0x28] sm:$0xff]
  %v41 = vld [vmem:[%s0 + $0x30] sm:$0xff]
  %v42 = vld [vmem:[%s0 + $0x38] sm:$0xff]
  %v43 = vld [vmem:[%s1] sm:$0xff]
  %v45 = vlaneseq
  %v46 = vshrl.u32 %v45, 7
  %v47 = vsub.s32 0, %v46
  %v48 = vrot.slane %v34, %v47
  %v49 = vlaneseq
  %v50 = vshrl.u32 %v49, 7
  %v51 = vsub.s32 1, %v50
  %v52 = vrot.slane %v34, %v51
  %v56 = vcombine.high %v43, %v43
  %vm57 = vcmask 31744
  %v59 = vsel %vm57, %v35, 0
  %v62 = vsel %vm57, %v36, 0
  %v65 = vsel %vm57, %v37, 0
  %v68 = vsel %vm57, %v38, 0
  %v71 = vsel %vm57, %v39, 0
  %v74 = vsel %vm57, %v40, 0
  %v77 = vsel %vm57, %v41, 0
  %v80 = vsel %vm57, %v42, 0
  %vm82 = vcmask 1043456
  %v83 = vsel %vm82, %v43, 0
  %v85 = vsel %vm82, %v56, 0
  %87 = vmatprep.subr.mxu0 %v85
  %88 = vmatpush1.msra.mxu0 %v83
  %89 = vmatprep.subr.mxu0 0.0
  %90 = vmatpush1.msra.mxu0 0.0
  %91 = vmatprep.subr.mxu0 0.0
  %92 = vmatpush1.msra.mxu0 0.0
  %93 = vmatprep.subr.mxu0 0.0
  %94 = vmatpush1.msra.mxu0 0.0
  %95 = vmatprep.subr.mxu0 0.0
  %96 = vmatpush1.msra.mxu0 0.0
  %97 = vmatprep.subr.mxu0 0.0
  %98 = vmatpush1.msra.mxu0 0.0
  %99 = vmatprep.subr.mxu0 0.0
  %100 = vmatpush1.msra.mxu0 0.0
  %101 = vmatprep.subr.mxu0 0.0
  %102 = vmatpush1.msra.mxu0 0.0
  %103 = vmatprep.subr.mxu0 0.0
  %104 = vmatpush1.msra.mxu0 0.0
  %105 = vmatprep.subr.mxu0 0.0
  %106 = vmatpush1.msra.mxu0 0.0
  %107 = vmatprep.subr.mxu0 0.0
  %108 = vmatpush1.msra.mxu0 0.0
  %109 = vmatprep.subr.mxu0 0.0
  %110 = vmatpush1.msra.mxu0 0.0
  %111 = vmatprep.subr.mxu0 0.0
  %112 = vmatpush1.msra.mxu0 0.0
  %113 = vmatprep.subr.mxu0 0.0
  %114 = vmatpush1.msra.mxu0 0.0
  %115 = vmatprep.subr.mxu0 0.0
  %116 = vmatpush1.msra.mxu0 0.0
  %117 = vmatprep.subr.mxu0 0.0
  %118 = vmatpush1.msra.mxu0 0.0
  %119 = vmatprep.subr.mxu0 0.0
  %120 = vmatpush1.msra.mxu0 0.0
  %121 = vmatprep.subr.mxu0 0.0
  %122 = vmatpush1.msra.mxu0 0.0
  %123 = vmatprep.subr.mxu0 0.0
  %124 = vmatpush1.msra.mxu0 0.0
  %125 = vmatprep.subr.mxu0 0.0
  %126 = vmatpush1.msra.mxu0 0.0
  %127 = vmatprep.subr.mxu0 0.0
  %128 = vmatpush1.msra.mxu0 0.0
  %129 = vmatprep.subr.mxu0 0.0
  %130 = vmatpush1.msra.mxu0 0.0
  %131 = vmatprep.subr.mxu0 0.0
  %132 = vmatpush1.msra.mxu0 0.0
  %133 = vmatprep.subr.mxu0 0.0
  %134 = vmatpush1.msra.mxu0 0.0
  %135 = vmatprep.subr.mxu0 0.0
  %136 = vmatpush1.msra.mxu0 0.0
  %137 = vmatprep.subr.mxu0 0.0
  %138 = vmatpush1.msra.mxu0 0.0
  %139 = vmatprep.subr.mxu0 0.0
  %140 = vmatpush1.msra.mxu0 0.0
  %141 = vmatprep.subr.mxu0 0.0
  %142 = vmatpush1.msra.mxu0 0.0
  %143 = vmatprep.subr.mxu0 0.0
  %144 = vmatpush1.msra.mxu0 0.0
  %145 = vmatprep.subr.mxu0 0.0
  %146 = vmatpush1.msra.mxu0 0.0
  %147 = vmatprep.subr.mxu0 0.0
  %148 = vmatpush1.msra.mxu0 0.0
  %149 = vmatprep.subr.mxu0 0.0
  %150 = vmatpush1.msra.mxu0 0.0
  %151 = vmatprep.mubr.f32.mxu0 0.0
  %152 = vmatmul.mubr.f32.gmra.mrb[0].mxu0 %v59
  %v153 = vpop.f32.mrb[0].mxu0
  %v154 = vadd.f32 %v48, %v153
  %v155 = vpop.f32.mrb[0].mxu0
  %v156 = vadd.f32 %v52, %v155
  %157 = vmatprep.mubr.f32.mxu0 0.0
  %158 = vmatmul.mubr.f32.gmra.mrb[0].mxu0 %v62
  %v159 = vpop.f32.mrb[0].mxu0
  %v160 = vadd.f32 %v48, %v159
  %v161 = vpop.f32.mrb[0].mxu0
  %v162 = vadd.f32 %v52, %v161
  %163 = vmatprep.mubr.f32.mxu0 0.0
  %164 = vmatmul.mubr.f32.gmra.mrb[0].mxu0 %v65
  %v165 = vpop.f32.mrb[0].mxu0
  %v166 = vadd.f32 %v48, %v165
  %v167 = vpop.f32.mrb[0].mxu0
  %v168 = vadd.f32 %v52, %v167
  %169 = vmatprep.mubr.f32.mxu0 0.0
  %170 = vmatmul.mubr.f32.gmra.mrb[0].mxu0 %v68
  %v171 = vpop.f32.mrb[0].mxu0
  %v172 = vadd.f32 %v48, %v171
  %v173 = vpop.f32.mrb[0].mxu0
  %v174 = vadd.f32 %v52, %v173
  %175 = vmatprep.mubr.f32.mxu0 0.0
  %176 = vmatmul.mubr.f32.gmra.mrb[0].mxu0 %v71
  %v177 = vpop.f32.mrb[0].mxu0
  %v178 = vadd.f32 %v48, %v177
  %v179 = vpop.f32.mrb[0].mxu0
  %v180 = vadd.f32 %v52, %v179
  %181 = vmatprep.mubr.f32.mxu0 0.0
  %182 = vmatmul.mubr.f32.gmra.mrb[0].mxu0 %v74
  %v183 = vpop.f32.mrb[0].mxu0
  %v184 = vadd.f32 %v48, %v183
  %v185 = vpop.f32.mrb[0].mxu0
  %v186 = vadd.f32 %v52, %v185
  %187 = vmatprep.mubr.f32.mxu0 0.0
  %188 = vmatmul.mubr.f32.gmra.mrb[0].mxu0 %v77
  %v189 = vpop.f32.mrb[0].mxu0
  %v190 = vadd.f32 %v48, %v189
  %v191 = vpop.f32.mrb[0].mxu0
  %v192 = vadd.f32 %v52, %v191
  %193 = vmatprep.mubr.f32.mxu0 0.0
  %194 = vmatmul.mubr.f32.gmra.mrb[0].mxu0 %v80
  %v195 = vpop.f32.mrb[0].mxu0
  %v196 = vadd.f32 %v48, %v195
  %v197 = vpop.f32.mrb[0].mxu0
  %v198 = vadd.f32 %v52, %v197
  %199 = vdwg.mxu0
  %200 = vst [vmem:[#allocation2] sm:$0xff] %v154
  %201 = vst [vmem:[#allocation2 + $0x8] sm:$0xff] %v160
  %202 = vst [vmem:[#allocation2 + $0x10] sm:$0xff] %v166
  %203 = vst [vmem:[#allocation2 + $0x18] sm:$0xff] %v172
  %204 = vst [vmem:[#allocation2 + $0x20] sm:$0xff] %v178
  %205 = vst [vmem:[#allocation2 + $0x28] sm:$0xff] %v184
  %206 = vst [vmem:[#allocation2 + $0x30] sm:$0xff] %v190
  %207 = vst [vmem:[#allocation2 + $0x38] sm:$0xff] %v196
  %208 = vst [vmem:[#allocation3] sm:$0xff] %v156
  %209 = vst [vmem:[#allocation3 + $0x8] sm:$0xff] %v162
  %210 = vst [vmem:[#allocation3 + $0x10] sm:$0xff] %v168
  %211 = vst [vmem:[#allocation3 + $0x18] sm:$0xff] %v174
  %212 = vst [vmem:[#allocation3 + $0x20] sm:$0xff] %v180
  %213 = vst [vmem:[#allocation3 + $0x28] sm:$0xff] %v186
  %214 = vst [vmem:[#allocation3 + $0x30] sm:$0xff] %v192
  %215 = vst [vmem:[#allocation3 + $0x38] sm:$0xff] %v198
  %v216 = vld [vmem:[%s2] sm:$0xff]
  %v217 = vld [vmem:[%s2 + $0x8] sm:$0xff]
  %v218 = vld [vmem:[%s2 + $0x10] sm:$0xff]
  %v219 = vld [vmem:[%s2 + $0x18] sm:$0xff]
  %v220 = vld [vmem:[%s2 + $0x20] sm:$0xff]
  %v221 = vld [vmem:[%s2 + $0x28] sm:$0xff]
  %v222 = vld [vmem:[%s2 + $0x30] sm:$0xff]
  %v223 = vld [vmem:[%s2 + $0x38] sm:$0xff]
  %v224 = vld [vmem:[%s2 + $0x40] sm:$0xff]
  %v225 = vld [vmem:[%s2 + $0x48] sm:$0xff]
  %v226 = vld [vmem:[%s2 + $0x50] sm:$0xff]
  %v227 = vld [vmem:[%s2 + $0x58] sm:$0xff]
  %v228 = vld [vmem:[%s2 + $0x60] sm:$0xff]
  %v229 = vld [vmem:[%s2 + $0x68] sm:$0xff]
  %v230 = vld [vmem:[%s2 + $0x70] sm:$0xff]
  %v231 = vld [vmem:[%s2 + $0x78] sm:$0xff]
  %vm232 = vcmask 523264
  %v234 = vsel %vm232, 0.0, 0
  %236 = vmatprep.subr.mxu0 %v217
  %237 = vmatpush1.msra.mxu0 %v216
  %238 = vmatprep.subr.mxu0 %v219
  %239 = vmatpush1.msra.mxu0 %v218
  %240 = vmatprep.subr.mxu0 %v221
  %241 = vmatpush1.msra.mxu0 %v220
  %242 = vmatprep.subr.mxu0 %v223
  %243 = vmatpush1.msra.mxu0 %v222
  %244 = vmatprep.subr.mxu0 %v225
  %245 = vmatpush1.msra.mxu0 %v224
  %246 = vmatprep.subr.mxu0 %v227
  %247 = vmatpush1.msra.mxu0 %v226
  %248 = vmatprep.subr.mxu0 %v229
  %249 = vmatpush1.msra.mxu0 %v228
  %250 = vmatprep.subr.mxu0 %v231
  %251 = vmatpush1.msra.mxu0 %v230
  %252 = vmatprep.subr.mxu0 0.0
  %253 = vmatpush1.msra.mxu0 0.0
  %254 = vmatprep.subr.mxu0 0.0
  %255 = vmatpush1.msra.mxu0 0.0
  %256 = vmatprep.subr.mxu0 0.0
  %257 = vmatpush1.msra.mxu0 0.0
  %258 = vmatprep.subr.mxu0 0.0
  %259 = vmatpush1.msra.mxu0 0.0
  %260 = vmatprep.subr.mxu0 0.0
  %261 = vmatpush1.msra.mxu0 0.0
  %262 = vmatprep.subr.mxu0 0.0
  %263 = vmatpush1.msra.mxu0 0.0
  %264 = vmatprep.subr.mxu0 0.0
  %265 = vmatpush1.msra.mxu0 0.0
  %266 = vmatprep.subr.mxu0 0.0
  %267 = vmatpush1.msra.mxu0 0.0
  %268 = vmatprep.subr.mxu0 0.0
  %269 = vmatpush1.msra.mxu0 0.0
  %270 = vmatprep.subr.mxu0 0.0
  %271 = vmatpush1.msra.mxu0 0.0
  %272 = vmatprep.subr.mxu0 0.0
  %273 = vmatpush1.msra.mxu0 0.0
  %274 = vmatprep.subr.mxu0 0.0
  %275 = vmatpush1.msra.mxu0 0.0
  %276 = vmatprep.subr.mxu0 0.0
  %277 = vmatpush1.msra.mxu0 0.0
  %278 = vmatprep.subr.mxu0 0.0
  %279 = vmatpush1.msra.mxu0 0.0
  %280 = vmatprep.subr.mxu0 0.0
  %281 = vmatpush1.msra.mxu0 0.0
  %282 = vmatprep.subr.mxu0 0.0
  %283 = vmatpush1.msra.mxu0 0.0
  %284 = vmatprep.subr.mxu0 0.0
  %285 = vmatpush1.msra.mxu0 0.0
  %286 = vmatprep.subr.mxu0 0.0
  %287 = vmatpush1.msra.mxu0 0.0
  %288 = vmatprep.subr.mxu0 0.0
  %289 = vmatpush1.msra.mxu0 0.0
  %290 = vmatprep.subr.mxu0 0.0
  %291 = vmatpush1.msra.mxu0 0.0
  %292 = vmatprep.subr.mxu0 0.0
  %293 = vmatpush1.msra.mxu0 0.0
  %294 = vmatprep.subr.mxu0 0.0
  %295 = vmatpush1.msra.mxu0 0.0
  %296 = vmatprep.subr.mxu0 0.0
  %297 = vmatpush1.msra.mxu0 0.0
  %298 = vmatprep.subr.mxu0 0.0
  %299 = vmatpush1.msra.mxu0 0.0
  %300 = vmatprep.mubr.f32.mxu0 0.0
  %301 = vmatmul.mubr.f32.gmra.mrb[0].mxu0 %v234
  %v302 = vpop.f32.mrb[0].mxu0
  %v303 = vadd.f32 0.0, %v302
  %v304 = vpop.f32.mrb[0].mxu0
  %v305 = vadd.f32 0.0, %v304
  %306 = vdwg.mxu0
  %v307 = vld [vmem:[#allocation2] sm:$0xff]
  %v308 = vadd.f32 %v307, %v303
  %v309 = vld [vmem:[#allocation3 + $0x38] sm:$0xff]
  %v310 = vadd.f32 %v309, %v305
  %v311 = vxor.u32 %v308, 2147483648
  %v312 = vmul.f32 %v311, 1.442695
  %v313 = vpow.pop %v312
  %v314 = vadd.f32 %v313, 1.0
  %v315 = vrcp.pop %v314
  %v316 = vmul.f32 1.0, %v315
  %v317 = vtanh.pop %v308
  %v318 = vmul.f32 %v316, 0.0
  %320 = vrot.lane.b32.xlu0 %v317, 64
  %v321 = vpop.permute.xlu0 %320
  %v323 = vmul.f32 %v316, %v321
  %325 = vrot.lane.b32.xlu0 %v323, 32
  %v326 = vpop.permute.xlu0 %325
  %v328 = vadd.f32 %v318, %v326
  %v329 = vtanh.pop %v328
  %331 = vrot.lane.b32.xlu0 %v329, 64
  %v332 = vpop.permute.xlu0 %331
  %v334 = vmul.f32 %v316, %v332
  %v335 = vxor.u32 %v310, 2147483648
  %v336 = vmul.f32 %v335, 1.442695
  %v337 = vpow.pop %v336
  %v338 = vadd.f32 %v337, 1.0
  %v339 = vrcp.pop %v338
  %v340 = vmul.f32 1.0, %v339
  %v341 = vtanh.pop %v310
  %v342 = vmul.f32 %v340, 0.0
  %344 = vrot.lane.b32.xlu0 %v341, 64
  %v345 = vpop.permute.xlu0 %344
  %v347 = vmul.f32 %v340, %v345
  %349 = vrot.lane.b32.xlu0 %v347, 32
  %v350 = vpop.permute.xlu0 %349
  %v352 = vadd.f32 %v342, %v350
  %v353 = vtanh.pop %v352
  %355 = vrot.lane.b32.xlu0 %v353, 64
  %v356 = vpop.permute.xlu0 %355
  %v358 = vmul.f32 %v340, %v356
  %360 = vrot.lane.b32.xlu0 %v334, 32
  %v361 = vpop.permute.xlu0 %360
  %vm363 = vcmask 261120
  %364 = vst.msk [vmem:[#allocation4] sm:$0xff] %vm363, %v361
  %366 = vrot.lane.b32.xlu0 %v358, 32
  %v367 = vpop.permute.xlu0 %366
  %369 = vst.msk [vmem:[#allocation5 + $0x38] sm:$0xff] %vm363, %v367
  %370 = vrot.lane.b32.xlu0 %v358, 64
  %v371 = vpop.permute.xlu0 %370
  %v373 = vsel %vm363, %v361, %v371
  %v375 = vsel %vm232, %v373, 0
  %377 = vmatprep.subr.mxu0 %v217
  %378 = vmatpush1.msra.mxu0 %v216
  %379 = vmatprep.subr.mxu0 %v219
  %380 = vmatpush1.msra.mxu0 %v218
  %381 = vmatprep.subr.mxu0 %v221
  %382 = vmatpush1.msra.mxu0 %v220
  %383 = vmatprep.subr.mxu0 %v223
  %384 = vmatpush1.msra.mxu0 %v222
  %385 = vmatprep.subr.mxu0 %v225
  %386 = vmatpush1.msra.mxu0 %v224
  %387 = vmatprep.subr.mxu0 %v227
  %388 = vmatpush1.msra.mxu0 %v226
  %389 = vmatprep.subr.mxu0 %v229
  %390 = vmatpush1.msra.mxu0 %v228
  %391 = vmatprep.subr.mxu0 %v231
  %392 = vmatpush1.msra.mxu0 %v230
  %393 = vmatprep.subr.mxu0 0.0
  %394 = vmatpush1.msra.mxu0 0.0
  %395 = vmatprep.subr.mxu0 0.0
  %396 = vmatpush1.msra.mxu0 0.0
  %397 = vmatprep.subr.mxu0 0.0
  %398 = vmatpush1.msra.mxu0 0.0
  %399 = vmatprep.subr.mxu0 0.0
  %400 = vmatpush1.msra.mxu0 0.0
  %401 = vmatprep.subr.mxu0 0.0
  %402 = vmatpush1.msra.mxu0 0.0
  %403 = vmatprep.subr.mxu0 0.0
  %404 = vmatpush1.msra.mxu0 0.0
  %405 = vmatprep.subr.mxu0 0.0
  %406 = vmatpush1.msra.mxu0 0.0
  %407 = vmatprep.subr.mxu0 0.0
  %408 = vmatpush1.msra.mxu0 0.0
  %409 = vmatprep.subr.mxu0 0.0
  %410 = vmatpush1.msra.mxu0 0.0
  %411 = vmatprep.subr.mxu0 0.0
  %412 = vmatpush1.msra.mxu0 0.0
  %413 = vmatprep.subr.mxu0 0.0
  %414 = vmatpush1.msra.mxu0 0.0
  %415 = vmatprep.subr.mxu0 0.0
  %416 = vmatpush1.msra.mxu0 0.0
  %417 = vmatprep.subr.mxu0 0.0
  %418 = vmatpush1.msra.mxu0 0.0
  %419 = vmatprep.subr.mxu0 0.0
  %420 = vmatpush1.msra.mxu0 0.0
  %421 = vmatprep.subr.mxu0 0.0
  %422 = vmatpush1.msra.mxu0 0.0
  %423 = vmatprep.subr.mxu0 0.0
  %424 = vmatpush1.msra.mxu0 0.0
  %425 = vmatprep.subr.mxu0 0.0
  %426 = vmatpush1.msra.mxu0 0.0
  %427 = vmatprep.subr.mxu0 0.0
  %428 = vmatpush1.msra.mxu0 0.0
  %429 = vmatprep.subr.mxu0 0.0
  %430 = vmatpush1.msra.mxu0 0.0
  %431 = vmatprep.subr.mxu0 0.0
  %432 = vmatpush1.msra.mxu0 0.0
  %433 = vmatprep.subr.mxu0 0.0
  %434 = vmatpush1.msra.mxu0 0.0
  %435 = vmatprep.subr.mxu0 0.0
  %436 = vmatpush1.msra.mxu0 0.0
  %437 = vmatprep.subr.mxu0 0.0
  %438 = vmatpush1.msra.mxu0 0.0
  %439 = vmatprep.subr.mxu0 0.0
  %440 = vmatpush1.msra.mxu0 0.0
  %441 = vmatprep.mubr.f32.mxu0 0.0
  %442 = vmatmul.mubr.f32.gmra.mrb[0].mxu0 %v375
  %v443 = vpop.f32.mrb[0].mxu0
  %v444 = vadd.f32 0.0, %v443
  %v445 = vpop.f32.mrb[0].mxu0
  %v446 = vadd.f32 0.0, %v445
  %447 = vdwg.mxu0
  %v448 = vld [vmem:[#allocation2 + $0x8] sm:$0xff]
  %v449 = vadd.f32 %v448, %v444
  %v450 = vld [vmem:[#allocation3 + $0x30] sm:$0xff]
  %v451 = vadd.f32 %v450, %v446
  %v452 = vxor.u32 %v449, 2147483648
  %v453 = vmul.f32 %v452, 1.442695
  %v454 = vpow.pop %v453
  %v455 = vadd.f32 %v454, 1.0
  %v456 = vrcp.pop %v455
  %v457 = vmul.f32 1.0, %v456
  %v458 = vtanh.pop %v449
  %v459 = vmul.f32 %v457, %v328
  %461 = vrot.lane.b32.xlu0 %v458, 64
  %v462 = vpop.permute.xlu0 %461
  %v464 = vmul.f32 %v457, %v462
  %466 = vrot.lane.b32.xlu0 %v464, 32
  %v467 = vpop.permute.xlu0 %466
  %v469 = vadd.f32 %v459, %v467
  %v470 = vtanh.pop %v469
  %472 = vrot.lane.b32.xlu0 %v470, 64
  %v473 = vpop.permute.xlu0 %472
  %v475 = vmul.f32 %v457, %v473
  %v476 = vxor.u32 %v451, 2147483648
  %v477 = vmul.f32 %v476, 1.442695
  %v478 = vpow.pop %v477
  %v479 = vadd.f32 %v478, 1.0
  %v480 = vrcp.pop %v479
  %v481 = vmul.f32 1.0, %v480
  %v482 = vtanh.pop %v451
  %v483 = vmul.f32 %v481, %v352
  %485 = vrot.lane.b32.xlu0 %v482, 64
  %v486 = vpop.permute.xlu0 %485
  %v488 = vmul.f32 %v481, %v486
  %490 = vrot.lane.b32.xlu0 %v488, 32
  %v491 = vpop.permute.xlu0 %490
  %v493 = vadd.f32 %v483, %v491
  %v494 = vtanh.pop %v493
  %496 = vrot.lane.b32.xlu0 %v494, 64
  %v497 = vpop.permute.xlu0 %496
  %v499 = vmul.f32 %v481, %v497
  %501 = vrot.lane.b32.xlu0 %v475, 32
  %v502 = vpop.permute.xlu0 %501
  %504 = vst.msk [vmem:[#allocation4 + $0x8] sm:$0xff] %vm363, %v502
  %506 = vrot.lane.b32.xlu0 %v499, 32
  %v507 = vpop.permute.xlu0 %506
  %509 = vst.msk [vmem:[#allocation5 + $0x30] sm:$0xff] %vm363, %v507
  %510 = vrot.lane.b32.xlu0 %v499, 64
  %v511 = vpop.permute.xlu0 %510
  %v513 = vsel %vm363, %v502, %v511
  %v515 = vsel %vm232, %v513, 0
  %517 = vmatprep.subr.mxu0 %v217
  %518 = vmatpush1.msra.mxu0 %v216
  %519 = vmatprep.subr.mxu0 %v219
  %520 = vmatpush1.msra.mxu0 %v218
  %521 = vmatprep.subr.mxu0 %v221
  %522 = vmatpush1.msra.mxu0 %v220
  %523 = vmatprep.subr.mxu0 %v223
  %524 = vmatpush1.msra.mxu0 %v222
  %525 = vmatprep.subr.mxu0 %v225
  %526 = vmatpush1.msra.mxu0 %v224
  %527 = vmatprep.subr.mxu0 %v227
  %528 = vmatpush1.msra.mxu0 %v226
  %529 = vmatprep.subr.mxu0 %v229
  %530 = vmatpush1.msra.mxu0 %v228
  %531 = vmatprep.subr.mxu0 %v231
  %532 = vmatpush1.msra.mxu0 %v230
  %533 = vmatprep.subr.mxu0 0.0
  %534 = vmatpush1.msra.mxu0 0.0
  %535 = vmatprep.subr.mxu0 0.0
  %536 = vmatpush1.msra.mxu0 0.0
  %537 = vmatprep.subr.mxu0 0.0
  %538 = vmatpush1.msra.mxu0 0.0
  %539 = vmatprep.subr.mxu0 0.0
  %540 = vmatpush1.msra.mxu0 0.0
  %541 = vmatprep.subr.mxu0 0.0
  %542 = vmatpush1.msra.mxu0 0.0
  %543 = vmatprep.subr.mxu0 0.0
  %544 = vmatpush1.msra.mxu0 0.0
  %545 = vmatprep.subr.mxu0 0.0
  %546 = vmatpush1.msra.mxu0 0.0
  %547 = vmatprep.subr.mxu0 0.0
  %548 = vmatpush1.msra.mxu0 0.0
  %549 = vmatprep.subr.mxu0 0.0
  %550 = vmatpush1.msra.mxu0 0.0
  %551 = vmatprep.subr.mxu0 0.0
  %552 = vmatpush1.msra.mxu0 0.0
  %553 = vmatprep.subr.mxu0 0.0
  %554 = vmatpush1.msra.mxu0 0.0
  %555 = vmatprep.subr.mxu0 0.0
  %556 = vmatpush1.msra.mxu0 0.0
  %557 = vmatprep.subr.mxu0 0.0
  %558 = vmatpush1.msra.mxu0 0.0
  %559 = vmatprep.subr.mxu0 0.0
  %560 = vmatpush1.msra.mxu0 0.0
  %561 = vmatprep.subr.mxu0 0.0
  %562 = vmatpush1.msra.mxu0 0.0
  %563 = vmatprep.subr.mxu0 0.0
  %564 = vmatpush1.msra.mxu0 0.0
  %565 = vmatprep.subr.mxu0 0.0
  %566 = vmatpush1.msra.mxu0 0.0
  %567 = vmatprep.subr.mxu0 0.0
  %568 = vmatpush1.msra.mxu0 0.0
  %569 = vmatprep.subr.mxu0 0.0
  %570 = vmatpush1.msra.mxu0 0.0
  %571 = vmatprep.subr.mxu0 0.0
  %572 = vmatpush1.msra.mxu0 0.0
  %573 = vmatprep.subr.mxu0 0.0
  %574 = vmatpush1.msra.mxu0 0.0
  %575 = vmatprep.subr.mxu0 0.0
  %576 = vmatpush1.msra.mxu0 0.0
  %577 = vmatprep.subr.mxu0 0.0
  %578 = vmatpush1.msra.mxu0 0.0
  %579 = vmatprep.subr.mxu0 0.0
  %580 = vmatpush1.msra.mxu0 0.0
  %581 = vmatprep.mubr.f32.mxu0 0.0
  %582 = vmatmul.mubr.f32.gmra.mrb[0].mxu0 %v515
  %v583 = vpop.f32.mrb[0].mxu0
  %v584 = vadd.f32 0.0, %v583
  %v585 = vpop.f32.mrb[0].mxu0
  %v586 = vadd.f32 0.0, %v585
  %587 = vdwg.mxu0
  %v588 = vld [vmem:[#allocation2 + $0x10] sm:$0xff]
  %v589 = vadd.f32 %v588, %v584
  %v590 = vld [vmem:[#allocation3 + $0x28] sm:$0xff]
  %v591 = vadd.f32 %v590, %v586
  %v592 = vxor.u32 %v589, 2147483648
  %v593 = vmul.f32 %v592, 1.442695
  %v594 = vpow.pop %v593
  %v595 = vadd.f32 %v594, 1.0
  %v596 = vrcp.pop %v595
  %v597 = vmul.f32 1.0, %v596
  %v598 = vtanh.pop %v589
  %v599 = vmul.f32 %v597, %v469
  %601 = vrot.lane.b32.xlu0 %v598, 64
  %v602 = vpop.permute.xlu0 %601
  %v604 = vmul.f32 %v597, %v602
  %606 = vrot.lane.b32.xlu0 %v604, 32
  %v607 = vpop.permute.xlu0 %606
  %v609 = vadd.f32 %v599, %v607
  %v610 = vtanh.pop %v609
  %612 = vrot.lane.b32.xlu0 %v610, 64
  %v613 = vpop.permute.xlu0 %612
  %v615 = vmul.f32 %v597, %v613
  %v616 = vxor.u32 %v591, 2147483648
  %v617 = vmul.f32 %v616, 1.442695
  %v618 = vpow.pop %v617
  %v619 = vadd.f32 %v618, 1.0
  %v620 = vrcp.pop %v619
  %v621 = vmul.f32 1.0, %v620
  %v622 = vtanh.pop %v591
  %v623 = vmul.f32 %v621, %v493
  %625 = vrot.lane.b32.xlu0 %v622, 64
  %v626 = vpop.permute.xlu0 %625
  %v628 = vmul.f32 %v621, %v626
  %630 = vrot.lane.b32.xlu0 %v628, 32
  %v631 = vpop.permute.xlu0 %630
  %v633 = vadd.f32 %v623, %v631
  %v634 = vtanh.pop %v633
  %636 = vrot.lane.b32.xlu0 %v634, 64
  %v637 = vpop.permute.xlu0 %636
  %v639 = vmul.f32 %v621, %v637
  %641 = vrot.lane.b32.xlu0 %v615, 32
  %v642 = vpop.permute.xlu0 %641
  %644 = vst.msk [vmem:[#allocation4 + $0x10] sm:$0xff] %vm363, %v642
  %646 = vrot.lane.b32.xlu0 %v639, 32
  %v647 = vpop.permute.xlu0 %646
  %649 = vst.msk [vmem:[#allocation5 + $0x28] sm:$0xff] %vm363, %v647
  %650 = vrot.lane.b32.xlu0 %v639, 64
  %v651 = vpop.permute.xlu0 %650
  %v653 = vsel %vm363, %v642, %v651
  %v655 = vsel %vm232, %v653, 0
  %657 = vmatprep.subr.mxu0 %v217
  %658 = vmatpush1.msra.mxu0 %v216
  %659 = vmatprep.subr.mxu0 %v219
  %660 = vmatpush1.msra.mxu0 %v218
  %661 = vmatprep.subr.mxu0 %v221
  %662 = vmatpush1.msra.mxu0 %v220
  %663 = vmatprep.subr.mxu0 %v223
  %664 = vmatpush1.msra.mxu0 %v222
  %665 = vmatprep.subr.mxu0 %v225
  %666 = vmatpush1.msra.mxu0 %v224
  %667 = vmatprep.subr.mxu0 %v227
  %668 = vmatpush1.msra.mxu0 %v226
  %669 = vmatprep.subr.mxu0 %v229
  %670 = vmatpush1.msra.mxu0 %v228
  %671 = vmatprep.subr.mxu0 %v231
  %672 = vmatpush1.msra.mxu0 %v230
  %673 = vmatprep.subr.mxu0 0.0
  %674 = vmatpush1.msra.mxu0 0.0
  %675 = vmatprep.subr.mxu0 0.0
  %676 = vmatpush1.msra.mxu0 0.0
  %677 = vmatprep.subr.mxu0 0.0
  %678 = vmatpush1.msra.mxu0 0.0
  %679 = vmatprep.subr.mxu0 0.0
  %680 = vmatpush1.msra.mxu0 0.0
  %681 = vmatprep.subr.mxu0 0.0
  %682 = vmatpush1.msra.mxu0 0.0
  %683 = vmatprep.subr.mxu0 0.0
  %684 = vmatpush1.msra.mxu0 0.0
  %685 = vmatprep.subr.mxu0 0.0
  %686 = vmatpush1.msra.mxu0 0.0
  %687 = vmatprep.subr.mxu0 0.0
  %688 = vmatpush1.msra.mxu0 0.0
  %689 = vmatprep.subr.mxu0 0.0
  %690 = vmatpush1.msra.mxu0 0.0
  %691 = vmatprep.subr.mxu0 0.0
  %692 = vmatpush1.msra.mxu0 0.0
  %693 = vmatprep.subr.mxu0 0.0
  %694 = vmatpush1.msra.mxu0 0.0
  %695 = vmatprep.subr.mxu0 0.0
  %696 = vmatpush1.msra.mxu0 0.0
  %697 = vmatprep.subr.mxu0 0.0
  %698 = vmatpush1.msra.mxu0 0.0
  %699 = vmatprep.subr.mxu0 0.0
  %700 = vmatpush1.msra.mxu0 0.0
  %701 = vmatprep.subr.mxu0 0.0
  %702 = vmatpush1.msra.mxu0 0.0
  %703 = vmatprep.subr.mxu0 0.0
  %704 = vmatpush1.msra.mxu0 0.0
  %705 = vmatprep.subr.mxu0 0.0
  %706 = vmatpush1.msra.mxu0 0.0
  %707 = vmatprep.subr.mxu0 0.0
  %708 = vmatpush1.msra.mxu0 0.0
  %709 = vmatprep.subr.mxu0 0.0
  %710 = vmatpush1.msra.mxu0 0.0
  %711 = vmatprep.subr.mxu0 0.0
  %712 = vmatpush1.msra.mxu0 0.0
  %713 = vmatprep.subr.mxu0 0.0
  %714 = vmatpush1.msra.mxu0 0.0
  %715 = vmatprep.subr.mxu0 0.0
  %716 = vmatpush1.msra.mxu0 0.0
  %717 = vmatprep.subr.mxu0 0.0
  %718 = vmatpush1.msra.mxu0 0.0
  %719 = vmatprep.subr.mxu0 0.0
  %720 = vmatpush1.msra.mxu0 0.0
  %721 = vmatprep.mubr.f32.mxu0 0.0
  %722 = vmatmul.mubr.f32.gmra.mrb[0].mxu0 %v655
  %v723 = vpop.f32.mrb[0].mxu0
  %v724 = vadd.f32 0.0, %v723
  %v725 = vpop.f32.mrb[0].mxu0
  %v726 = vadd.f32 0.0, %v725
  %727 = vdwg.mxu0
  %v728 = vld [vmem:[#allocation2 + $0x18] sm:$0xff]
  %v729 = vadd.f32 %v728, %v724
  %v730 = vld [vmem:[#allocation3 + $0x20] sm:$0xff]
  %v731 = vadd.f32 %v730, %v726
  %v732 = vxor.u32 %v729, 2147483648
  %v733 = vmul.f32 %v732, 1.442695
  %v734 = vpow.pop %v733
  %v735 = vadd.f32 %v734, 1.0
  %v736 = vrcp.pop %v735
  %v737 = vmul.f32 1.0, %v736
  %v738 = vtanh.pop %v729
  %v739 = vmul.f32 %v737, %v609
  %741 = vrot.lane.b32.xlu0 %v738, 64
  %v742 = vpop.permute.xlu0 %741
  %v744 = vmul.f32 %v737, %v742
  %746 = vrot.lane.b32.xlu0 %v744, 32
  %v747 = vpop.permute.xlu0 %746
  %v749 = vadd.f32 %v739, %v747
  %v750 = vtanh.pop %v749
  %752 = vrot.lane.b32.xlu0 %v750, 64
  %v753 = vpop.permute.xlu0 %752
  %v755 = vmul.f32 %v737, %v753
  %v756 = vxor.u32 %v731, 2147483648
  %v757 = vmul.f32 %v756, 1.442695
  %v758 = vpow.pop %v757
  %v759 = vadd.f32 %v758, 1.0
  %v760 = vrcp.pop %v759
  %v761 = vmul.f32 1.0, %v760
  %v762 = vtanh.pop %v731
  %v763 = vmul.f32 %v761, %v633
  %765 = vrot.lane.b32.xlu0 %v762, 64
  %v766 = vpop.permute.xlu0 %765
  %v768 = vmul.f32 %v761, %v766
  %770 = vrot.lane.b32.xlu0 %v768, 32
  %v771 = vpop.permute.xlu0 %770
  %v773 = vadd.f32 %v763, %v771
  %v774 = vtanh.pop %v773
  %776 = vrot.lane.b32.xlu0 %v774, 64
  %v777 = vpop.permute.xlu0 %776
  %v779 = vmul.f32 %v761, %v777
  %781 = vrot.lane.b32.xlu0 %v755, 32
  %v782 = vpop.permute.xlu0 %781
  %784 = vst.msk [vmem:[#allocation4 + $0x18] sm:$0xff] %vm363, %v782
  %786 = vrot.lane.b32.xlu0 %v779, 32
  %v787 = vpop.permute.xlu0 %786
  %789 = vst.msk [vmem:[#allocation5 + $0x20] sm:$0xff] %vm363, %v787
  %790 = vrot.lane.b32.xlu0 %v779, 64
  %v791 = vpop.permute.xlu0 %790
  %v793 = vsel %vm363, %v782, %v791
  %v795 = vsel %vm232, %v793, 0
  %797 = vmatprep.subr.mxu0 %v217
  %798 = vmatpush1.msra.mxu0 %v216
  %799 = vmatprep.subr.mxu0 %v219
  %800 = vmatpush1.msra.mxu0 %v218
  %801 = vmatprep.subr.mxu0 %v221
  %802 = vmatpush1.msra.mxu0 %v220
  %803 = vmatprep.subr.mxu0 %v223
  %804 = vmatpush1.msra.mxu0 %v222
  %805 = vmatprep.subr.mxu0 %v225
  %806 = vmatpush1.msra.mxu0 %v224
  %807 = vmatprep.subr.mxu0 %v227
  %808 = vmatpush1.msra.mxu0 %v226
  %809 = vmatprep.subr.mxu0 %v229
  %810 = vmatpush1.msra.mxu0 %v228
  %811 = vmatprep.subr.mxu0 %v231
  %812 = vmatpush1.msra.mxu0 %v230
  %813 = vmatprep.subr.mxu0 0.0
  %814 = vmatpush1.msra.mxu0 0.0
  %815 = vmatprep.subr.mxu0 0.0
  %816 = vmatpush1.msra.mxu0 0.0
  %817 = vmatprep.subr.mxu0 0.0
  %818 = vmatpush1.msra.mxu0 0.0
  %819 = vmatprep.subr.mxu0 0.0
  %820 = vmatpush1.msra.mxu0 0.0
  %821 = vmatprep.subr.mxu0 0.0
  %822 = vmatpush1.msra.mxu0 0.0
  %823 = vmatprep.subr.mxu0 0.0
  %824 = vmatpush1.msra.mxu0 0.0
  %825 = vmatprep.subr.mxu0 0.0
  %826 = vmatpush1.msra.mxu0 0.0
  %827 = vmatprep.subr.mxu0 0.0
  %828 = vmatpush1.msra.mxu0 0.0
  %829 = vmatprep.subr.mxu0 0.0
  %830 = vmatpush1.msra.mxu0 0.0
  %831 = vmatprep.subr.mxu0 0.0
  %832 = vmatpush1.msra.mxu0 0.0
  %833 = vmatprep.subr.mxu0 0.0
  %834 = vmatpush1.msra.mxu0 0.0
  %835 = vmatprep.subr.mxu0 0.0
  %836 = vmatpush1.msra.mxu0 0.0
  %837 = vmatprep.subr.mxu0 0.0
  %838 = vmatpush1.msra.mxu0 0.0
  %839 = vmatprep.subr.mxu0 0.0
  %840 = vmatpush1.msra.mxu0 0.0
  %841 = vmatprep.subr.mxu0 0.0
  %842 = vmatpush1.msra.mxu0 0.0
  %843 = vmatprep.subr.mxu0 0.0
  %844 = vmatpush1.msra.mxu0 0.0
  %845 = vmatprep.subr.mxu0 0.0
  %846 = vmatpush1.msra.mxu0 0.0
  %847 = vmatprep.subr.mxu0 0.0
  %848 = vmatpush1.msra.mxu0 0.0
  %849 = vmatprep.subr.mxu0 0.0
  %850 = vmatpush1.msra.mxu0 0.0
  %851 = vmatprep.subr.mxu0 0.0
  %852 = vmatpush1.msra.mxu0 0.0
  %853 = vmatprep.subr.mxu0 0.0
  %854 = vmatpush1.msra.mxu0 0.0
  %855 = vmatprep.subr.mxu0 0.0
  %856 = vmatpush1.msra.mxu0 0.0
  %857 = vmatprep.subr.mxu0 0.0
  %858 = vmatpush1.msra.mxu0 0.0
  %859 = vmatprep.subr.mxu0 0.0
  %860 = vmatpush1.msra.mxu0 0.0
  %861 = vmatprep.mubr.f32.mxu0 0.0
  %862 = vmatmul.mubr.f32.gmra.mrb[0].mxu0 %v795
  %v863 = vpop.f32.mrb[0].mxu0
  %v864 = vadd.f32 0.0, %v863
  %v865 = vpop.f32.mrb[0].mxu0
  %v866 = vadd.f32 0.0, %v865
  %867 = vdwg.mxu0
  %v868 = vld [vmem:[#allocation2 + $0x20] sm:$0xff]
  %v869 = vadd.f32 %v868, %v864
  %v870 = vld [vmem:[#allocation3 + $0x18] sm:$0xff]
  %v871 = vadd.f32 %v870, %v866
  %v872 = vxor.u32 %v869, 2147483648
  %v873 = vmul.f32 %v872, 1.442695
  %v874 = vpow.pop %v873
  %v875 = vadd.f32 %v874, 1.0
  %v876 = vrcp.pop %v875
  %v877 = vmul.f32 1.0, %v876
  %v878 = vtanh.pop %v869
  %v879 = vmul.f32 %v877, %v749
  %881 = vrot.lane.b32.xlu0 %v878, 64
  %v882 = vpop.permute.xlu0 %881
  %v884 = vmul.f32 %v877, %v882
  %886 = vrot.lane.b32.xlu0 %v884, 32
  %v887 = vpop.permute.xlu0 %886
  %v889 = vadd.f32 %v879, %v887
  %v890 = vtanh.pop %v889
  %892 = vrot.lane.b32.xlu0 %v890, 64
  %v893 = vpop.permute.xlu0 %892
  %v895 = vmul.f32 %v877, %v893
  %v896 = vxor.u32 %v871, 2147483648
  %v897 = vmul.f32 %v896, 1.442695
  %v898 = vpow.pop %v897
  %v899 = vadd.f32 %v898, 1.0
  %v900 = vrcp.pop %v899
  %v901 = vmul.f32 1.0, %v900
  %v902 = vtanh.pop %v871
  %v903 = vmul.f32 %v901, %v773
  %905 = vrot.lane.b32.xlu0 %v902, 64
  %v906 = vpop.permute.xlu0 %905
  %v908 = vmul.f32 %v901, %v906
  %910 = vrot.lane.b32.xlu0 %v908, 32
  %v911 = vpop.permute.xlu0 %910
  %v913 = vadd.f32 %v903, %v911
  %v914 = vtanh.pop %v913
  %916 = vrot.lane.b32.xlu0 %v914, 64
  %v917 = vpop.permute.xlu0 %916
  %v919 = vmul.f32 %v901, %v917
  %921 = vrot.lane.b32.xlu0 %v895, 32
  %v922 = vpop.permute.xlu0 %921
  %924 = vst.msk [vmem:[#allocation4 + $0x20] sm:$0xff] %vm363, %v922
  %926 = vrot.lane.b32.xlu0 %v919, 32
  %v927 = vpop.permute.xlu0 %926
  %929 = vst.msk [vmem:[#allocation5 + $0x18] sm:$0xff] %vm363, %v927
  %930 = vrot.lane.b32.xlu0 %v919, 64
  %v931 = vpop.permute.xlu0 %930
  %v933 = vsel %vm363, %v922, %v931
  %v935 = vsel %vm232, %v933, 0
  %937 = vmatprep.subr.mxu0 %v217
  %938 = vmatpush1.msra.mxu0 %v216
  %939 = vmatprep.subr.mxu0 %v219
  %940 = vmatpush1.msra.mxu0 %v218
  %941 = vmatprep.subr.mxu0 %v221
  %942 = vmatpush1.msra.mxu0 %v220
  %943 = vmatprep.subr.mxu0 %v223
  %944 = vmatpush1.msra.mxu0 %v222
  %945 = vmatprep.subr.mxu0 %v225
  %946 = vmatpush1.msra.mxu0 %v224
  %947 = vmatprep.subr.mxu0 %v227
  %948 = vmatpush1.msra.mxu0 %v226
  %949 = vmatprep.subr.mxu0 %v229
  %950 = vmatpush1.msra.mxu0 %v228
  %951 = vmatprep.subr.mxu0 %v231
  %952 = vmatpush1.msra.mxu0 %v230
  %953 = vmatprep.subr.mxu0 0.0
  %954 = vmatpush1.msra.mxu0 0.0
  %955 = vmatprep.subr.mxu0 0.0
  %956 = vmatpush1.msra.mxu0 0.0
  %957 = vmatprep.subr.mxu0 0.0
  %958 = vmatpush1.msra.mxu0 0.0
  %959 = vmatprep.subr.mxu0 0.0
  %960 = vmatpush1.msra.mxu0 0.0
  %961 = vmatprep.subr.mxu0 0.0
  %962 = vmatpush1.msra.mxu0 0.0
  %963 = vmatprep.subr.mxu0 0.0
  %964 = vmatpush1.msra.mxu0 0.0
  %965 = vmatprep.subr.mxu0 0.0
  %966 = vmatpush1.msra.mxu0 0.0
  %967 = vmatprep.subr.mxu0 0.0
  %968 = vmatpush1.msra.mxu0 0.0
  %969 = vmatprep.subr.mxu0 0.0
  %970 = vmatpush1.msra.mxu0 0.0
  %971 = vmatprep.subr.mxu0 0.0
  %972 = vmatpush1.msra.mxu0 0.0
  %973 = vmatprep.subr.mxu0 0.0
  %974 = vmatpush1.msra.mxu0 0.0
  %975 = vmatprep.subr.mxu0 0.0
  %976 = vmatpush1.msra.mxu0 0.0
  %977 = vmatprep.subr.mxu0 0.0
  %978 = vmatpush1.msra.mxu0 0.0
  %979 = vmatprep.subr.mxu0 0.0
  %980 = vmatpush1.msra.mxu0 0.0
  %981 = vmatprep.subr.mxu0 0.0
  %982 = vmatpush1.msra.mxu0 0.0
  %983 = vmatprep.subr.mxu0 0.0
  %984 = vmatpush1.msra.mxu0 0.0
  %985 = vmatprep.subr.mxu0 0.0
  %986 = vmatpush1.msra.mxu0 0.0
  %987 = vmatprep.subr.mxu0 0.0
  %988 = vmatpush1.msra.mxu0 0.0
  %989 = vmatprep.subr.mxu0 0.0
  %990 = vmatpush1.msra.mxu0 0.0
  %991 = vmatprep.subr.mxu0 0.0
  %992 = vmatpush1.msra.mxu0 0.0
  %993 = vmatprep.subr.mxu0 0.0
  %994 = vmatpush1.msra.mxu0 0.0
  %995 = vmatprep.subr.mxu0 0.0
  %996 = vmatpush1.msra.mxu0 0.0
  %997 = vmatprep.subr.mxu0 0.0
  %998 = vmatpush1.msra.mxu0 0.0
  %999 = vmatprep.subr.mxu0 0.0
  %1000 = vmatpush1.msra.mxu0 0.0
  %1001 = vmatprep.mubr.f32.mxu0 0.0
  %1002 = vmatmul.mubr.f32.gmra.mrb[0].mxu0 %v935
  %v1003 = vpop.f32.mrb[0].mxu0
  %v1004 = vadd.f32 0.0, %v1003
  %v1005 = vpop.f32.mrb[0].mxu0
  %v1006 = vadd.f32 0.0, %v1005
  %1007 = vdwg.mxu0
  %v1008 = vld [vmem:[#allocation2 + $0x28] sm:$0xff]
  %v1009 = vadd.f32 %v1008, %v1004
  %v1010 = vld [vmem:[#allocation3 + $0x10] sm:$0xff]
  %v1011 = vadd.f32 %v1010, %v1006
  %v1012 = vxor.u32 %v1009, 2147483648
  %v1013 = vmul.f32 %v1012, 1.442695
  %v1014 = vpow.pop %v1013
  %v1015 = vadd.f32 %v1014, 1.0
  %v1016 = vrcp.pop %v1015
  %v1017 = vmul.f32 1.0, %v1016
  %v1018 = vtanh.pop %v1009
  %v1019 = vmul.f32 %v1017, %v889
  %1021 = vrot.lane.b32.xlu0 %v1018, 64
  %v1022 = vpop.permute.xlu0 %1021
  %v1024 = vmul.f32 %v1017, %v1022
  %1026 = vrot.lane.b32.xlu0 %v1024, 32
  %v1027 = vpop.permute.xlu0 %1026
  %v1029 = vadd.f32 %v1019, %v1027
  %v1030 = vtanh.pop %v1029
  %1032 = vrot.lane.b32.xlu0 %v1030, 64
  %v1033 = vpop.permute.xlu0 %1032
  %v1035 = vmul.f32 %v1017, %v1033
  %v1036 = vxor.u32 %v1011, 2147483648
  %v1037 = vmul.f32 %v1036, 1.442695
  %v1038 = vpow.pop %v1037
  %v1039 = vadd.f32 %v1038, 1.0
  %v1040 = vrcp.pop %v1039
  %v1041 = vmul.f32 1.0, %v1040
  %v1042 = vtanh.pop %v1011
  %v1043 = vmul.f32 %v1041, %v913
  %1045 = vrot.lane.b32.xlu0 %v1042, 64
  %v1046 = vpop.permute.xlu0 %1045
  %v1048 = vmul.f32 %v1041, %v1046
  %1050 = vrot.lane.b32.xlu0 %v1048, 32
  %v1051 = vpop.permute.xlu0 %1050
  %v1053 = vadd.f32 %v1043, %v1051
  %v1054 = vtanh.pop %v1053
  %1056 = vrot.lane.b32.xlu0 %v1054, 64
  %v1057 = vpop.permute.xlu0 %1056
  %v1059 = vmul.f32 %v1041, %v1057
  %1061 = vrot.lane.b32.xlu0 %v1035, 32
  %v1062 = vpop.permute.xlu0 %1061
  %1064 = vst.msk [vmem:[#allocation4 + $0x28] sm:$0xff] %vm363, %v1062
  %1066 = vrot.lane.b32.xlu0 %v1059, 32
  %v1067 = vpop.permute.xlu0 %1066
  %1069 = vst.msk [vmem:[#allocation5 + $0x10] sm:$0xff] %vm363, %v1067
  %1070 = vrot.lane.b32.xlu0 %v1059, 64
  %v1071 = vpop.permute.xlu0 %1070
  %v1073 = vsel %vm363, %v1062, %v1071
  %v1075 = vsel %vm232, %v1073, 0
  %1077 = vmatprep.subr.mxu0 %v217
  %1078 = vmatpush1.msra.mxu0 %v216
  %1079 = vmatprep.subr.mxu0 %v219
  %1080 = vmatpush1.msra.mxu0 %v218
  %1081 = vmatprep.subr.mxu0 %v221
  %1082 = vmatpush1.msra.mxu0 %v220
  %1083 = vmatprep.subr.mxu0 %v223
  %1084 = vmatpush1.msra.mxu0 %v222
  %1085 = vmatprep.subr.mxu0 %v225
  %1086 = vmatpush1.msra.mxu0 %v224
  %1087 = vmatprep.subr.mxu0 %v227
  %1088 = vmatpush1.msra.mxu0 %v226
  %1089 = vmatprep.subr.mxu0 %v229
  %1090 = vmatpush1.msra.mxu0 %v228
  %1091 = vmatprep.subr.mxu0 %v231
  %1092 = vmatpush1.msra.mxu0 %v230
  %1093 = vmatprep.subr.mxu0 0.0
  %1094 = vmatpush1.msra.mxu0 0.0
  %1095 = vmatprep.subr.mxu0 0.0
  %1096 = vmatpush1.msra.mxu0 0.0
  %1097 = vmatprep.subr.mxu0 0.0
  %1098 = vmatpush1.msra.mxu0 0.0
  %1099 = vmatprep.subr.mxu0 0.0
  %1100 = vmatpush1.msra.mxu0 0.0
  %1101 = vmatprep.subr.mxu0 0.0
  %1102 = vmatpush1.msra.mxu0 0.0
  %1103 = vmatprep.subr.mxu0 0.0
  %1104 = vmatpush1.msra.mxu0 0.0
  %1105 = vmatprep.subr.mxu0 0.0
  %1106 = vmatpush1.msra.mxu0 0.0
  %1107 = vmatprep.subr.mxu0 0.0
  %1108 = vmatpush1.msra.mxu0 0.0
  %1109 = vmatprep.subr.mxu0 0.0
  %1110 = vmatpush1.msra.mxu0 0.0
  %1111 = vmatprep.subr.mxu0 0.0
  %1112 = vmatpush1.msra.mxu0 0.0
  %1113 = vmatprep.subr.mxu0 0.0
  %1114 = vmatpush1.msra.mxu0 0.0
  %1115 = vmatprep.subr.mxu0 0.0
  %1116 = vmatpush1.msra.mxu0 0.0
  %1117 = vmatprep.subr.mxu0 0.0
  %1118 = vmatpush1.msra.mxu0 0.0
  %1119 = vmatprep.subr.mxu0 0.0
  %1120 = vmatpush1.msra.mxu0 0.0
  %1121 = vmatprep.subr.mxu0 0.0
  %1122 = vmatpush1.msra.mxu0 0.0
  %1123 = vmatprep.subr.mxu0 0.0
  %1124 = vmatpush1.msra.mxu0 0.0
  %1125 = vmatprep.subr.mxu0 0.0
  %1126 = vmatpush1.msra.mxu0 0.0
  %1127 = vmatprep.subr.mxu0 0.0
  %1128 = vmatpush1.msra.mxu0 0.0
  %1129 = vmatprep.subr.mxu0 0.0
  %1130 = vmatpush1.msra.mxu0 0.0
  %1131 = vmatprep.subr.mxu0 0.0
  %1132 = vmatpush1.msra.mxu0 0.0
  %1133 = vmatprep.subr.mxu0 0.0
  %1134 = vmatpush1.msra.mxu0 0.0
  %1135 = vmatprep.subr.mxu0 0.0
  %1136 = vmatpush1.msra.mxu0 0.0
  %1137 = vmatprep.subr.mxu0 0.0
  %1138 = vmatpush1.msra.mxu0 0.0
  %1139 = vmatprep.subr.mxu0 0.0
  %1140 = vmatpush1.msra.mxu0 0.0
  %1141 = vmatprep.mubr.f32.mxu0 0.0
  %1142 = vmatmul.mubr.f32.gmra.mrb[0].mxu0 %v1075
  %v1143 = vpop.f32.mrb[0].mxu0
  %v1144 = vadd.f32 0.0, %v1143
  %v1145 = vpop.f32.mrb[0].mxu0
  %v1146 = vadd.f32 0.0, %v1145
  %1147 = vdwg.mxu0
  %v1148 = vld [vmem:[#allocation2 + $0x30] sm:$0xff]
  %v1149 = vadd.f32 %v1148, %v1144
  %v1150 = vld [vmem:[#allocation3 + $0x8] sm:$0xff]
  %v1151 = vadd.f32 %v1150, %v1146
  %v1152 = vxor.u32 %v1149, 2147483648
  %v1153 = vmul.f32 %v1152, 1.442695
  %v1154 = vpow.pop %v1153
  %v1155 = vadd.f32 %v1154, 1.0
  %v1156 = vrcp.pop %v1155
  %v1157 = vmul.f32 1.0, %v1156
  %v1158 = vtanh.pop %v1149
  %v1159 = vmul.f32 %v1157, %v1029
  %1161 = vrot.lane.b32.xlu0 %v1158, 64
  %v1162 = vpop.permute.xlu0 %1161
  %v1164 = vmul.f32 %v1157, %v1162
  %1166 = vrot.lane.b32.xlu0 %v1164, 32
  %v1167 = vpop.permute.xlu0 %1166
  %v1169 = vadd.f32 %v1159, %v1167
  %v1170 = vtanh.pop %v1169
  %1172 = vrot.lane.b32.xlu0 %v1170, 64
  %v1173 = vpop.permute.xlu0 %1172
  %v1175 = vmul.f32 %v1157, %v1173
  %v1176 = vxor.u32 %v1151, 2147483648
  %v1177 = vmul.f32 %v1176, 1.442695
  %v1178 = vpow.pop %v1177
  %v1179 = vadd.f32 %v1178, 1.0
  %v1180 = vrcp.pop %v1179
  %v1181 = vmul.f32 1.0, %v1180
  %v1182 = vtanh.pop %v1151
  %v1183 = vmul.f32 %v1181, %v1053
  %1185 = vrot.lane.b32.xlu0 %v1182, 64
  %v1186 = vpop.permute.xlu0 %1185
  %v1188 = vmul.f32 %v1181, %v1186
  %1190 = vrot.lane.b32.xlu0 %v1188, 32
  %v1191 = vpop.permute.xlu0 %1190
  %v1193 = vadd.f32 %v1183, %v1191
  %v1194 = vtanh.pop %v1193
  %1196 = vrot.lane.b32.xlu0 %v1194, 64
  %v1197 = vpop.permute.xlu0 %1196
  %v1199 = vmul.f32 %v1181, %v1197
  %1201 = vrot.lane.b32.xlu0 %v1175, 32
  %v1202 = vpop.permute.xlu0 %1201
  %1204 = vst.msk [vmem:[#allocation4 + $0x30] sm:$0xff] %vm363, %v1202
  %1206 = vrot.lane.b32.xlu0 %v1199, 32
  %v1207 = vpop.permute.xlu0 %1206
  %1209 = vst.msk [vmem:[#allocation5 + $0x8] sm:$0xff] %vm363, %v1207
  %1210 = vrot.lane.b32.xlu0 %v1199, 64
  %v1211 = vpop.permute.xlu0 %1210
  %v1213 = vsel %vm363, %v1202, %v1211
  %v1215 = vsel %vm232, %v1213, 0
  %1217 = vmatprep.subr.mxu0 %v217
  %1218 = vmatpush1.msra.mxu0 %v216
  %1219 = vmatprep.subr.mxu0 %v219
  %1220 = vmatpush1.msra.mxu0 %v218
  %1221 = vmatprep.subr.mxu0 %v221
  %1222 = vmatpush1.msra.mxu0 %v220
  %1223 = vmatprep.subr.mxu0 %v223
  %1224 = vmatpush1.msra.mxu0 %v222
  %1225 = vmatprep.subr.mxu0 %v225
  %1226 = vmatpush1.msra.mxu0 %v224
  %1227 = vmatprep.subr.mxu0 %v227
  %1228 = vmatpush1.msra.mxu0 %v226
  %1229 = vmatprep.subr.mxu0 %v229
  %1230 = vmatpush1.msra.mxu0 %v228
  %1231 = vmatprep.subr.mxu0 %v231
  %1232 = vmatpush1.msra.mxu0 %v230
  %1233 = vmatprep.subr.mxu0 0.0
  %1234 = vmatpush1.msra.mxu0 0.0
  %1235 = vmatprep.subr.mxu0 0.0
  %1236 = vmatpush1.msra.mxu0 0.0
  %1237 = vmatprep.subr.mxu0 0.0
  %1238 = vmatpush1.msra.mxu0 0.0
  %1239 = vmatprep.subr.mxu0 0.0
  %1240 = vmatpush1.msra.mxu0 0.0
  %1241 = vmatprep.subr.mxu0 0.0
  %1242 = vmatpush1.msra.mxu0 0.0
  %1243 = vmatprep.subr.mxu0 0.0
  %1244 = vmatpush1.msra.mxu0 0.0
  %1245 = vmatprep.subr.mxu0 0.0
  %1246 = vmatpush1.msra.mxu0 0.0
  %1247 = vmatprep.subr.mxu0 0.0
  %1248 = vmatpush1.msra.mxu0 0.0
  %1249 = vmatprep.subr.mxu0 0.0
  %1250 = vmatpush1.msra.mxu0 0.0
  %1251 = vmatprep.subr.mxu0 0.0
  %1252 = vmatpush1.msra.mxu0 0.0
  %1253 = vmatprep.subr.mxu0 0.0
  %1254 = vmatpush1.msra.mxu0 0.0
  %1255 = vmatprep.subr.mxu0 0.0
  %1256 = vmatpush1.msra.mxu0 0.0
  %1257 = vmatprep.subr.mxu0 0.0
  %1258 = vmatpush1.msra.mxu0 0.0
  %1259 = vmatprep.subr.mxu0 0.0
  %1260 = vmatpush1.msra.mxu0 0.0
  %1261 = vmatprep.subr.mxu0 0.0
  %1262 = vmatpush1.msra.mxu0 0.0
  %1263 = vmatprep.subr.mxu0 0.0
  %1264 = vmatpush1.msra.mxu0 0.0
  %1265 = vmatprep.subr.mxu0 0.0
  %1266 = vmatpush1.msra.mxu0 0.0
  %1267 = vmatprep.subr.mxu0 0.0
  %1268 = vmatpush1.msra.mxu0 0.0
  %1269 = vmatprep.subr.mxu0 0.0
  %1270 = vmatpush1.msra.mxu0 0.0
  %1271 = vmatprep.subr.mxu0 0.0
  %1272 = vmatpush1.msra.mxu0 0.0
  %1273 = vmatprep.subr.mxu0 0.0
  %1274 = vmatpush1.msra.mxu0 0.0
  %1275 = vmatprep.subr.mxu0 0.0
  %1276 = vmatpush1.msra.mxu0 0.0
  %1277 = vmatprep.subr.mxu0 0.0
  %1278 = vmatpush1.msra.mxu0 0.0
  %1279 = vmatprep.subr.mxu0 0.0
  %1280 = vmatpush1.msra.mxu0 0.0
  %1281 = vmatprep.mubr.f32.mxu0 0.0
  %1282 = vmatmul.mubr.f32.gmra.mrb[0].mxu0 %v1215
  %v1283 = vpop.f32.mrb[0].mxu0
  %v1284 = vadd.f32 0.0, %v1283
  %v1285 = vpop.f32.mrb[0].mxu0
  %v1286 = vadd.f32 0.0, %v1285
  %1287 = vdwg.mxu0
  %v1288 = vld [vmem:[#allocation2 + $0x38] sm:$0xff]
  %v1289 = vadd.f32 %v1288, %v1284
  %v1290 = vld [vmem:[#allocation3] sm:$0xff]
  %v1291 = vadd.f32 %v1290, %v1286
  %v1292 = vxor.u32 %v1289, 2147483648
  %v1293 = vmul.f32 %v1292, 1.442695
  %v1294 = vpow.pop %v1293
  %v1295 = vadd.f32 %v1294, 1.0
  %v1296 = vrcp.pop %v1295
  %v1297 = vmul.f32 1.0, %v1296
  %v1298 = vtanh.pop %v1289
  %v1299 = vmul.f32 %v1297, %v1169
  %1301 = vrot.lane.b32.xlu0 %v1298, 64
  %v1302 = vpop.permute.xlu0 %1301
  %v1304 = vmul.f32 %v1297, %v1302
  %1306 = vrot.lane.b32.xlu0 %v1304, 32
  %v1307 = vpop.permute.xlu0 %1306
  %v1309 = vadd.f32 %v1299, %v1307
  %v1310 = vtanh.pop %v1309
  %1312 = vrot.lane.b32.xlu0 %v1310, 64
  %v1313 = vpop.permute.xlu0 %1312
  %v1315 = vmul.f32 %v1297, %v1313
  %v1316 = vxor.u32 %v1291, 2147483648
  %v1317 = vmul.f32 %v1316, 1.442695
  %v1318 = vpow.pop %v1317
  %v1319 = vadd.f32 %v1318, 1.0
  %v1320 = vrcp.pop %v1319
  %v1321 = vmul.f32 1.0, %v1320
  %v1322 = vtanh.pop %v1291
  %v1323 = vmul.f32 %v1321, %v1193
  %1325 = vrot.lane.b32.xlu0 %v1322, 64
  %v1326 = vpop.permute.xlu0 %1325
  %v1328 = vmul.f32 %v1321, %v1326
  %1330 = vrot.lane.b32.xlu0 %v1328, 32
  %v1331 = vpop.permute.xlu0 %1330
  %v1333 = vadd.f32 %v1323, %v1331
  %v1334 = vtanh.pop %v1333
  %1336 = vrot.lane.b32.xlu0 %v1334, 64
  %v1337 = vpop.permute.xlu0 %1336
  %v1339 = vmul.f32 %v1321, %v1337
  %1341 = vrot.lane.b32.xlu0 %v1315, 32
  %v1342 = vpop.permute.xlu0 %1341
  %1344 = vst.msk [vmem:[#allocation4 + $0x38] sm:$0xff] %vm363, %v1342
  %1346 = vrot.lane.b32.xlu0 %v1339, 32
  %v1347 = vpop.permute.xlu0 %1346
  %1349 = vst.msk [vmem:[#allocation5] sm:$0xff] %vm363, %v1347
  %v1350 = vld [vmem:[%s6] sm:$0x3]
  %v1351 = vld [vmem:[%s4] sm:$0xff]
  %v1352 = vld [vmem:[%s4 + $0x8] sm:$0xff]
  %v1353 = vld [vmem:[%s4 + $0x10] sm:$0xff]
  %v1354 = vld [vmem:[%s4 + $0x18] sm:$0xff]
  %v1355 = vld [vmem:[%s4 + $0x20] sm:$0xff]
  %v1356 = vld [vmem:[%s4 + $0x28] sm:$0xff]
  %v1357 = vld [vmem:[%s4 + $0x30] sm:$0xff]
  %v1358 = vld [vmem:[%s4 + $0x38] sm:$0xff]
  %v1359 = vld [vmem:[%s4 + $0x40] sm:$0xff]
  %v1360 = vld [vmem:[%s4 + $0x48] sm:$0xff]
  %v1361 = vld [vmem:[%s4 + $0x50] sm:$0xff]
  %v1362 = vld [vmem:[%s4 + $0x58] sm:$0xff]
  %v1363 = vld [vmem:[%s4 + $0x60] sm:$0xff]
  %v1364 = vld [vmem:[%s4 + $0x68] sm:$0xff]
  %v1365 = vld [vmem:[%s4 + $0x70] sm:$0xff]
  %v1366 = vld [vmem:[%s4 + $0x78] sm:$0xff]
  %v1367 = vld [vmem:[#allocation4] sm:$0xff]
  %v1368 = vld [vmem:[#allocation4 + $0x8] sm:$0xff]
  %v1369 = vld [vmem:[#allocation4 + $0x10] sm:$0xff]
  %v1370 = vld [vmem:[#allocation4 + $0x18] sm:$0xff]
  %v1371 = vld [vmem:[#allocation4 + $0x20] sm:$0xff]
  %v1372 = vld [vmem:[#allocation4 + $0x28] sm:$0xff]
  %v1373 = vld [vmem:[#allocation4 + $0x30] sm:$0xff]
  %v1374 = vld [vmem:[#allocation4 + $0x38] sm:$0xff]
  %v1375 = vld [vmem:[#allocation5] sm:$0xff]
  %v1376 = vld [vmem:[#allocation5 + $0x8] sm:$0xff]
  %v1377 = vld [vmem:[#allocation5 + $0x10] sm:$0xff]
  %v1378 = vld [vmem:[#allocation5 + $0x18] sm:$0xff]
  %v1379 = vld [vmem:[#allocation5 + $0x20] sm:$0xff]
  %v1380 = vld [vmem:[#allocation5 + $0x28] sm:$0xff]
  %v1381 = vld [vmem:[#allocation5 + $0x30] sm:$0xff]
  %v1382 = vld [vmem:[#allocation5 + $0x38] sm:$0xff]
  %v1384 = vsel %vm363, %v1375, 0
  %v1387 = vsel %vm363, %v1376, 0
  %v1390 = vsel %vm363, %v1377, 0
  %v1393 = vsel %vm363, %v1378, 0
  %v1396 = vsel %vm363, %v1379, 0
  %v1399 = vsel %vm363, %v1380, 0
  %v1402 = vsel %vm363, %v1381, 0
  %v1405 = vsel %vm363, %v1382, 0
  %1407 = vmatprep.subr.mxu0 %v1360
  %1408 = vmatpush1.msra.mxu0 %v1359
  %1409 = vmatprep.subr.mxu0 %v1362
  %1410 = vmatpush1.msra.mxu0 %v1361
  %1411 = vmatprep.subr.mxu0 %v1364
  %1412 = vmatpush1.msra.mxu0 %v1363
  %1413 = vmatprep.subr.mxu0 %v1366
  %1414 = vmatpush1.msra.mxu0 %v1365
  %1415 = vmatprep.subr.mxu0 0.0
  %1416 = vmatpush1.msra.mxu0 0.0
  %1417 = vmatprep.subr.mxu0 0.0
  %1418 = vmatpush1.msra.mxu0 0.0
  %1419 = vmatprep.subr.mxu0 0.0
  %1420 = vmatpush1.msra.mxu0 0.0
  %1421 = vmatprep.subr.mxu0 0.0
  %1422 = vmatpush1.msra.mxu0 0.0
  %1423 = vmatprep.subr.mxu0 0.0
  %1424 = vmatpush1.msra.mxu0 0.0
  %1425 = vmatprep.subr.mxu0 0.0
  %1426 = vmatpush1.msra.mxu0 0.0
  %1427 = vmatprep.subr.mxu0 0.0
  %1428 = vmatpush1.msra.mxu0 0.0
  %1429 = vmatprep.subr.mxu0 0.0
  %1430 = vmatpush1.msra.mxu0 0.0
  %1431 = vmatprep.subr.mxu0 0.0
  %1432 = vmatpush1.msra.mxu0 0.0
  %1433 = vmatprep.subr.mxu0 0.0
  %1434 = vmatpush1.msra.mxu0 0.0
  %1435 = vmatprep.subr.mxu0 0.0
  %1436 = vmatpush1.msra.mxu0 0.0
  %1437 = vmatprep.subr.mxu0 0.0
  %1438 = vmatpush1.msra.mxu0 0.0
  %1439 = vmatprep.subr.mxu0 0.0
  %1440 = vmatpush1.msra.mxu0 0.0
  %1441 = vmatprep.subr.mxu0 0.0
  %1442 = vmatpush1.msra.mxu0 0.0
  %1443 = vmatprep.subr.mxu0 0.0
  %1444 = vmatpush1.msra.mxu0 0.0
  %1445 = vmatprep.subr.mxu0 0.0
  %1446 = vmatpush1.msra.mxu0 0.0
  %1447 = vmatprep.subr.mxu0 0.0
  %1448 = vmatpush1.msra.mxu0 0.0
  %1449 = vmatprep.subr.mxu0 0.0
  %1450 = vmatpush1.msra.mxu0 0.0
  %1451 = vmatprep.subr.mxu0 0.0
  %1452 = vmatpush1.msra.mxu0 0.0
  %1453 = vmatprep.subr.mxu0 0.0
  %1454 = vmatpush1.msra.mxu0 0.0
  %1455 = vmatprep.subr.mxu0 0.0
  %1456 = vmatpush1.msra.mxu0 0.0
  %1457 = vmatprep.subr.mxu0 0.0
  %1458 = vmatpush1.msra.mxu0 0.0
  %1459 = vmatprep.subr.mxu0 0.0
  %1460 = vmatpush1.msra.mxu0 0.0
  %1461 = vmatprep.subr.mxu0 0.0
  %1462 = vmatpush1.msra.mxu0 0.0
  %1463 = vmatprep.subr.mxu0 0.0
  %1464 = vmatpush1.msra.mxu0 0.0
  %1465 = vmatprep.subr.mxu0 0.0
  %1466 = vmatpush1.msra.mxu0 0.0
  %1467 = vmatprep.subr.mxu0 0.0
  %1468 = vmatpush1.msra.mxu0 0.0
  %1469 = vmatprep.subr.mxu0 0.0
  %1470 = vmatpush1.msra.mxu0 0.0
  %1471 = vmatprep.mubr.f32.mxu0 0.0
  %1472 = vmatmul.mubr.f32.gmra.mrb[0].mxu0 %v1384
  %v1473 = vpop.f32.mrb[0].mxu0
  %v1474 = vadd.f32 0.0, %v1473
  %v1475 = vpop.f32.mrb[0].mxu0
  %v1476 = vadd.f32 0.0, %v1475
  %1477 = vmatprep.mubr.f32.mxu0 0.0
  %1478 = vmatmul.mubr.f32.gmra.mrb[0].mxu0 %v1387
  %v1479 = vpop.f32.mrb[0].mxu0
  %v1480 = vadd.f32 0.0, %v1479
  %v1481 = vpop.f32.mrb[0].mxu0
  %v1482 = vadd.f32 0.0, %v1481
  %1483 = vmatprep.mubr.f32.mxu0 0.0
  %1484 = vmatmul.mubr.f32.gmra.mrb[0].mxu0 %v1390
  %v1485 = vpop.f32.mrb[0].mxu0
  %v1486 = vadd.f32 0.0, %v1485
  %v1487 = vpop.f32.mrb[0].mxu0
  %v1488 = vadd.f32 0.0, %v1487
  %1489 = vmatprep.mubr.f32.mxu0 0.0
  %1490 = vmatmul.mubr.f32.gmra.mrb[0].mxu0 %v1393
  %v1491 = vpop.f32.mrb[0].mxu0
  %v1492 = vadd.f32 0.0, %v1491
  %v1493 = vpop.f32.mrb[0].mxu0
  %v1494 = vadd.f32 0.0, %v1493
  %1495 = vmatprep.mubr.f32.mxu0 0.0
  %1496 = vmatmul.mubr.f32.gmra.mrb[0].mxu0 %v1396
  %v1497 = vpop.f32.mrb[0].mxu0
  %v1498 = vadd.f32 0.0, %v1497
  %v1499 = vpop.f32.mrb[0].mxu0
  %v1500 = vadd.f32 0.0, %v1499
  %1501 = vmatprep.mubr.f32.mxu0 0.0
  %1502 = vmatmul.mubr.f32.gmra.mrb[0].mxu0 %v1399
  %v1503 = vpop.f32.mrb[0].mxu0
  %v1504 = vadd.f32 0.0, %v1503
  %v1505 = vpop.f32.mrb[0].mxu0
  %v1506 = vadd.f32 0.0, %v1505
  %1507 = vmatprep.mubr.f32.mxu0 0.0
  %1508 = vmatmul.mubr.f32.gmra.mrb[0].mxu0 %v1402
  %v1509 = vpop.f32.mrb[0].mxu0
  %v1510 = vadd.f32 0.0, %v1509
  %v1511 = vpop.f32.mrb[0].mxu0
  %v1512 = vadd.f32 0.0, %v1511
  %1513 = vmatprep.mubr.f32.mxu0 0.0
  %1514 = vmatmul.mubr.f32.gmra.mrb[0].mxu0 %v1405
  %v1515 = vpop.f32.mrb[0].mxu0
  %v1516 = vadd.f32 0.0, %v1515
  %v1517 = vpop.f32.mrb[0].mxu0
  %v1518 = vadd.f32 0.0, %v1517
  %1519 = vdwg.mxu0
  %v1521 = vsel %vm363, %v1367, 0
  %v1524 = vsel %vm363, %v1368, 0
  %v1527 = vsel %vm363, %v1369, 0
  %v1530 = vsel %vm363, %v1370, 0
  %v1533 = vsel %vm363, %v1371, 0
  %v1536 = vsel %vm363, %v1372, 0
  %v1539 = vsel %vm363, %v1373, 0
  %v1542 = vsel %vm363, %v1374, 0
  %1544 = vmatprep.subr.mxu0 %v1352
  %1545 = vmatpush1.msra.mxu0 %v1351
  %1546 = vmatprep.subr.mxu0 %v1354
  %1547 = vmatpush1.msra.mxu0 %v1353
  %1548 = vmatprep.subr.mxu0 %v1356
  %1549 = vmatpush1.msra.mxu0 %v1355
  %1550 = vmatprep.subr.mxu0 %v1358
  %1551 = vmatpush1.msra.mxu0 %v1357
  %1552 = vmatprep.subr.mxu0 0.0
  %1553 = vmatpush1.msra.mxu0 0.0
  %1554 = vmatprep.subr.mxu0 0.0
  %1555 = vmatpush1.msra.mxu0 0.0
  %1556 = vmatprep.subr.mxu0 0.0
  %1557 = vmatpush1.msra.mxu0 0.0
  %1558 = vmatprep.subr.mxu0 0.0
  %1559 = vmatpush1.msra.mxu0 0.0
  %1560 = vmatprep.subr.mxu0 0.0
  %1561 = vmatpush1.msra.mxu0 0.0
  %1562 = vmatprep.subr.mxu0 0.0
  %1563 = vmatpush1.msra.mxu0 0.0
  %1564 = vmatprep.subr.mxu0 0.0
  %1565 = vmatpush1.msra.mxu0 0.0
  %1566 = vmatprep.subr.mxu0 0.0
  %1567 = vmatpush1.msra.mxu0 0.0
  %1568 = vmatprep.subr.mxu0 0.0
  %1569 = vmatpush1.msra.mxu0 0.0
  %1570 = vmatprep.subr.mxu0 0.0
  %1571 = vmatpush1.msra.mxu0 0.0
  %1572 = vmatprep.subr.mxu0 0.0
  %1573 = vmatpush1.msra.mxu0 0.0
  %1574 = vmatprep.subr.mxu0 0.0
  %1575 = vmatpush1.msra.mxu0 0.0
  %1576 = vmatprep.subr.mxu0 0.0
  %1577 = vmatpush1.msra.mxu0 0.0
  %1578 = vmatprep.subr.mxu0 0.0
  %1579 = vmatpush1.msra.mxu0 0.0
  %1580 = vmatprep.subr.mxu0 0.0
  %1581 = vmatpush1.msra.mxu0 0.0
  %1582 = vmatprep.subr.mxu0 0.0
  %1583 = vmatpush1.msra.mxu0 0.0
  %1584 = vmatprep.subr.mxu0 0.0
  %1585 = vmatpush1.msra.mxu0 0.0
  %1586 = vmatprep.subr.mxu0 0.0
  %1587 = vmatpush1.msra.mxu0 0.0
  %1588 = vmatprep.subr.mxu0 0.0
  %1589 = vmatpush1.msra.mxu0 0.0
  %1590 = vmatprep.subr.mxu0 0.0
  %1591 = vmatpush1.msra.mxu0 0.0
  %1592 = vmatprep.subr.mxu0 0.0
  %1593 = vmatpush1.msra.mxu0 0.0
  %1594 = vmatprep.subr.mxu0 0.0
  %1595 = vmatpush1.msra.mxu0 0.0
  %1596 = vmatprep.subr.mxu0 0.0
  %1597 = vmatpush1.msra.mxu0 0.0
  %1598 = vmatprep.subr.mxu0 0.0
  %1599 = vmatpush1.msra.mxu0 0.0
  %1600 = vmatprep.subr.mxu0 0.0
  %1601 = vmatpush1.msra.mxu0 0.0
  %1602 = vmatprep.subr.mxu0 0.0
  %1603 = vmatpush1.msra.mxu0 0.0
  %1604 = vmatprep.subr.mxu0 0.0
  %1605 = vmatpush1.msra.mxu0 0.0
  %1606 = vmatprep.subr.mxu0 0.0
  %1607 = vmatpush1.msra.mxu0 0.0
  %1608 = vmatprep.mubr.f32.mxu0 0.0
  %1609 = vmatmul.mubr.f32.gmra.mrb[0].mxu0 %v1521
  %v1610 = vpop.f32.mrb[0].mxu0
  %v1611 = vadd.f32 %v1474, %v1610
  %v1612 = vpop.f32.mrb[0].mxu0
  %v1613 = vadd.f32 %v1476, %v1612
  %1614 = vmatprep.mubr.f32.mxu0 0.0
  %1615 = vmatmul.mubr.f32.gmra.mrb[0].mxu0 %v1524
  %v1616 = vpop.f32.mrb[0].mxu0
  %v1617 = vadd.f32 %v1480, %v1616
  %v1618 = vpop.f32.mrb[0].mxu0
  %v1619 = vadd.f32 %v1482, %v1618
  %1620 = vmatprep.mubr.f32.mxu0 0.0
  %1621 = vmatmul.mubr.f32.gmra.mrb[0].mxu0 %v1527
  %v1622 = vpop.f32.mrb[0].mxu0
  %v1623 = vadd.f32 %v1486, %v1622
  %v1624 = vpop.f32.mrb[0].mxu0
  %v1625 = vadd.f32 %v1488, %v1624
  %1626 = vmatprep.mubr.f32.mxu0 0.0
  %1627 = vmatmul.mubr.f32.gmra.mrb[0].mxu0 %v1530
  %v1628 = vpop.f32.mrb[0].mxu0
  %v1629 = vadd.f32 %v1492, %v1628
  %v1630 = vpop.f32.mrb[0].mxu0
  %v1631 = vadd.f32 %v1494, %v1630
  %1632 = vmatprep.mubr.f32.mxu0 0.0
  %1633 = vmatmul.mubr.f32.gmra.mrb[0].mxu0 %v1533
  %v1634 = vpop.f32.mrb[0].mxu0
  %v1635 = vadd.f32 %v1498, %v1634
  %v1636 = vpop.f32.mrb[0].mxu0
  %v1637 = vadd.f32 %v1500, %v1636
  %1638 = vmatprep.mubr.f32.mxu0 0.0
  %1639 = vmatmul.mubr.f32.gmra.mrb[0].mxu0 %v1536
  %v1640 = vpop.f32.mrb[0].mxu0
  %v1641 = vadd.f32 %v1504, %v1640
  %v1642 = vpop.f32.mrb[0].mxu0
  %v1643 = vadd.f32 %v1506, %v1642
  %1644 = vmatprep.mubr.f32.mxu0 0.0
  %1645 = vmatmul.mubr.f32.gmra.mrb[0].mxu0 %v1539
  %v1646 = vpop.f32.mrb[0].mxu0
  %v1647 = vadd.f32 %v1510, %v1646
  %v1648 = vpop.f32.mrb[0].mxu0
  %v1649 = vadd.f32 %v1512, %v1648
  %1650 = vmatprep.mubr.f32.mxu0 0.0
  %1651 = vmatmul.mubr.f32.gmra.mrb[0].mxu0 %v1542
  %v1652 = vpop.f32.mrb[0].mxu0
  %v1653 = vadd.f32 %v1516, %v1652
  %v1654 = vpop.f32.mrb[0].mxu0
  %v1655 = vadd.f32 %v1518, %v1654
  %1656 = vdwg.mxu0
  %v1658 = vlaneseq
  %v1659 = vshrl.u32 %v1658, 7
  %v1660 = vsub.s32 0, %v1659
  %v1661 = vrot.slane %v1350, %v1660
  %v1662 = vlaneseq
  %v1663 = vshrl.u32 %v1662, 7
  %v1664 = vsub.s32 1, %v1663
  %v1665 = vrot.slane %v1350, %v1664
  %v1668 = vadd.f32 %v1611, %v1661
  %v1669 = vadd.f32 %v1613, %v1665
  %v1670 = vadd.f32 %v1617, %v1661
  %v1671 = vadd.f32 %v1619, %v1665
  %v1672 = vadd.f32 %v1623, %v1661
  %v1673 = vadd.f32 %v1625, %v1665
  %v1674 = vadd.f32 %v1629, %v1661
  %v1675 = vadd.f32 %v1631, %v1665
  %v1676 = vadd.f32 %v1635, %v1661
  %v1677 = vadd.f32 %v1637, %v1665
  %v1678 = vadd.f32 %v1641, %v1661
  %v1679 = vadd.f32 %v1643, %v1665
  %v1680 = vadd.f32 %v1647, %v1661
  %v1681 = vadd.f32 %v1649, %v1665
  %v1682 = vadd.f32 %v1653, %v1661
  %v1683 = vadd.f32 %v1655, %v1665
  %1684 = vst [vmem:[#allocation2] sm:$0xff] %v1668
  %1685 = vst [vmem:[#allocation2 + $0x8] sm:$0xff] %v1670
  %1686 = vst [vmem:[#allocation2 + $0x10] sm:$0xff] %v1672
  %1687 = vst [vmem:[#allocation2 + $0x18] sm:$0xff] %v1674
  %1688 = vst [vmem:[#allocation2 + $0x20] sm:$0xff] %v1676
  %1689 = vst [vmem:[#allocation2 + $0x28] sm:$0xff] %v1678
  %1690 = vst [vmem:[#allocation2 + $0x30] sm:$0xff] %v1680
  %1691 = vst [vmem:[#allocation2 + $0x38] sm:$0xff] %v1682
  %1692 = vst [vmem:[#allocation3] sm:$0xff] %v1669
  %1693 = vst [vmem:[#allocation3 + $0x8] sm:$0xff] %v1671
  %1694 = vst [vmem:[#allocation3 + $0x10] sm:$0xff] %v1673
  %1695 = vst [vmem:[#allocation3 + $0x18] sm:$0xff] %v1675
  %1696 = vst [vmem:[#allocation3 + $0x20] sm:$0xff] %v1677
  %1697 = vst [vmem:[#allocation3 + $0x28] sm:$0xff] %v1679
  %1698 = vst [vmem:[#allocation3 + $0x30] sm:$0xff] %v1681
  %1699 = vst [vmem:[#allocation3 + $0x38] sm:$0xff] %v1683
  %v1700 = vld [vmem:[%s5] sm:$0xff]
  %v1701 = vld [vmem:[%s5 + $0x8] sm:$0xff]
  %v1702 = vld [vmem:[%s5 + $0x10] sm:$0xff]
  %v1703 = vld [vmem:[%s5 + $0x18] sm:$0xff]
  %v1704 = vld [vmem:[%s5 + $0x20] sm:$0xff]
  %v1705 = vld [vmem:[%s5 + $0x28] sm:$0xff]
  %v1706 = vld [vmem:[%s5 + $0x30] sm:$0xff]
  %v1707 = vld [vmem:[%s5 + $0x38] sm:$0xff]
  %v1708 = vld [vmem:[%s5 + $0x40] sm:$0xff]
  %v1709 = vld [vmem:[%s5 + $0x48] sm:$0xff]
  %v1710 = vld [vmem:[%s5 + $0x50] sm:$0xff]
  %v1711 = vld [vmem:[%s5 + $0x58] sm:$0xff]
  %v1712 = vld [vmem:[%s5 + $0x60] sm:$0xff]
  %v1713 = vld [vmem:[%s5 + $0x68] sm:$0xff]
  %v1714 = vld [vmem:[%s5 + $0x70] sm:$0xff]
  %v1715 = vld [vmem:[%s5 + $0x78] sm:$0xff]
  %1716 = vmatprep.subr.mxu0 %v1701
  %1717 = vmatpush1.msra.mxu0 %v1700
  %1718 = vmatprep.subr.mxu0 %v1703
  %1719 = vmatpush1.msra.mxu0 %v1702
  %1720 = vmatprep.subr.mxu0 %v1705
  %1721 = vmatpush1.msra.mxu0 %v1704
  %1722 = vmatprep.subr.mxu0 %v1707
  %1723 = vmatpush1.msra.mxu0 %v1706
  %1724 = vmatprep.subr.mxu0 %v1709
  %1725 = vmatpush1.msra.mxu0 %v1708
  %1726 = vmatprep.subr.mxu0 %v1711
  %1727 = vmatpush1.msra.mxu0 %v1710
  %1728 = vmatprep.subr.mxu0 %v1713
  %1729 = vmatpush1.msra.mxu0 %v1712
  %1730 = vmatprep.subr.mxu0 %v1715
  %1731 = vmatpush1.msra.mxu0 %v1714
  %1732 = vmatprep.subr.mxu0 0.0
  %1733 = vmatpush1.msra.mxu0 0.0
  %1734 = vmatprep.subr.mxu0 0.0
  %1735 = vmatpush1.msra.mxu0 0.0
  %1736 = vmatprep.subr.mxu0 0.0
  %1737 = vmatpush1.msra.mxu0 0.0
  %1738 = vmatprep.subr.mxu0 0.0
  %1739 = vmatpush1.msra.mxu0 0.0
  %1740 = vmatprep.subr.mxu0 0.0
  %1741 = vmatpush1.msra.mxu0 0.0
  %1742 = vmatprep.subr.mxu0 0.0
  %1743 = vmatpush1.msra.mxu0 0.0
  %1744 = vmatprep.subr.mxu0 0.0
  %1745 = vmatpush1.msra.mxu0 0.0
  %1746 = vmatprep.subr.mxu0 0.0
  %1747 = vmatpush1.msra.mxu0 0.0
  %1748 = vmatprep.subr.mxu0 0.0
  %1749 = vmatpush1.msra.mxu0 0.0
  %1750 = vmatprep.subr.mxu0 0.0
  %1751 = vmatpush1.msra.mxu0 0.0
  %1752 = vmatprep.subr.mxu0 0.0
  %1753 = vmatpush1.msra.mxu0 0.0
  %1754 = vmatprep.subr.mxu0 0.0
  %1755 = vmatpush1.msra.mxu0 0.0
  %1756 = vmatprep.subr.mxu0 0.0
  %1757 = vmatpush1.msra.mxu0 0.0
  %1758 = vmatprep.subr.mxu0 0.0
  %1759 = vmatpush1.msra.mxu0 0.0
  %1760 = vmatprep.subr.mxu0 0.0
  %1761 = vmatpush1.msra.mxu0 0.0
  %1762 = vmatprep.subr.mxu0 0.0
  %1763 = vmatpush1.msra.mxu0 0.0
  %1764 = vmatprep.subr.mxu0 0.0
  %1765 = vmatpush1.msra.mxu0 0.0
  %1766 = vmatprep.subr.mxu0 0.0
  %1767 = vmatpush1.msra.mxu0 0.0
  %1768 = vmatprep.subr.mxu0 0.0
  %1769 = vmatpush1.msra.mxu0 0.0
  %1770 = vmatprep.subr.mxu0 0.0
  %1771 = vmatpush1.msra.mxu0 0.0
  %1772 = vmatprep.subr.mxu0 0.0
  %1773 = vmatpush1.msra.mxu0 0.0
  %1774 = vmatprep.subr.mxu0 0.0
  %1775 = vmatpush1.msra.mxu0 0.0
  %1776 = vmatprep.subr.mxu0 0.0
  %1777 = vmatpush1.msra.mxu0 0.0
  %1778 = vmatprep.subr.mxu0 0.0
  %1779 = vmatpush1.msra.mxu0 0.0
  %1780 = vmatprep.mubr.f32.mxu0 0.0
  %1781 = vmatmul.mubr.f32.gmra.mrb[0].mxu0 %v234
  %v1782 = vpop.f32.mrb[0].mxu0
  %v1783 = vadd.f32 0.0, %v1782
  %v1784 = vpop.f32.mrb[0].mxu0
  %v1785 = vadd.f32 0.0, %v1784
  %1786 = vdwg.mxu0
  %v1787 = vld [vmem:[#allocation2] sm:$0xff]
  %v1788 = vadd.f32 %v1787, %v1783
  %v1789 = vld [vmem:[#allocation3 + $0x38] sm:$0xff]
  %v1790 = vadd.f32 %v1789, %v1785
  %v1791 = vxor.u32 %v1788, 2147483648
  %v1792 = vmul.f32 %v1791, 1.442695
  %v1793 = vpow.pop %v1792
  %v1794 = vadd.f32 %v1793, 1.0
  %v1795 = vrcp.pop %v1794
  %v1796 = vmul.f32 1.0, %v1795
  %v1797 = vtanh.pop %v1788
  %v1798 = vmul.f32 %v1796, 0.0
  %1800 = vrot.lane.b32.xlu0 %v1797, 64
  %v1801 = vpop.permute.xlu0 %1800
  %v1803 = vmul.f32 %v1796, %v1801
  %1805 = vrot.lane.b32.xlu0 %v1803, 32
  %v1806 = vpop.permute.xlu0 %1805
  %v1808 = vadd.f32 %v1798, %v1806
  %v1809 = vtanh.pop %v1808
  %1811 = vrot.lane.b32.xlu0 %v1809, 64
  %v1812 = vpop.permute.xlu0 %1811
  %v1814 = vmul.f32 %v1796, %v1812
  %v1815 = vxor.u32 %v1790, 2147483648
  %v1816 = vmul.f32 %v1815, 1.442695
  %v1817 = vpow.pop %v1816
  %v1818 = vadd.f32 %v1817, 1.0
  %v1819 = vrcp.pop %v1818
  %v1820 = vmul.f32 1.0, %v1819
  %v1821 = vtanh.pop %v1790
  %v1822 = vmul.f32 %v1820, 0.0
  %1824 = vrot.lane.b32.xlu0 %v1821, 64
  %v1825 = vpop.permute.xlu0 %1824
  %v1827 = vmul.f32 %v1820, %v1825
  %1829 = vrot.lane.b32.xlu0 %v1827, 32
  %v1830 = vpop.permute.xlu0 %1829
  %v1832 = vadd.f32 %v1822, %v1830
  %v1833 = vtanh.pop %v1832
  %1835 = vrot.lane.b32.xlu0 %v1833, 64
  %v1836 = vpop.permute.xlu0 %1835
  %v1838 = vmul.f32 %v1820, %v1836
  %1840 = vrot.lane.b32.xlu0 %v1814, 32
  %v1841 = vpop.permute.xlu0 %1840
  %1844 = vrot.lane.b32.xlu0 %v1838, 64
  %v1845 = vpop.permute.xlu0 %1844
  %v1847 = vsel %vm363, %v1841, %v1845
  %v1849 = vsel %vm232, %v1847, 0
  %1851 = vmatprep.subr.mxu0 %v1701
  %1852 = vmatpush1.msra.mxu0 %v1700
  %1853 = vmatprep.subr.mxu0 %v1703
  %1854 = vmatpush1.msra.mxu0 %v1702
  %1855 = vmatprep.subr.mxu0 %v1705
  %1856 = vmatpush1.msra.mxu0 %v1704
  %1857 = vmatprep.subr.mxu0 %v1707
  %1858 = vmatpush1.msra.mxu0 %v1706
  %1859 = vmatprep.subr.mxu0 %v1709
  %1860 = vmatpush1.msra.mxu0 %v1708
  %1861 = vmatprep.subr.mxu0 %v1711
  %1862 = vmatpush1.msra.mxu0 %v1710
  %1863 = vmatprep.subr.mxu0 %v1713
  %1864 = vmatpush1.msra.mxu0 %v1712
  %1865 = vmatprep.subr.mxu0 %v1715
  %1866 = vmatpush1.msra.mxu0 %v1714
  %1867 = vmatprep.subr.mxu0 0.0
  %1868 = vmatpush1.msra.mxu0 0.0
  %1869 = vmatprep.subr.mxu0 0.0
  %1870 = vmatpush1.msra.mxu0 0.0
  %1871 = vmatprep.subr.mxu0 0.0
  %1872 = vmatpush1.msra.mxu0 0.0
  %1873 = vmatprep.subr.mxu0 0.0
  %1874 = vmatpush1.msra.mxu0 0.0
  %1875 = vmatprep.subr.mxu0 0.0
  %1876 = vmatpush1.msra.mxu0 0.0
  %1877 = vmatprep.subr.mxu0 0.0
  %1878 = vmatpush1.msra.mxu0 0.0
  %1879 = vmatprep.subr.mxu0 0.0
  %1880 = vmatpush1.msra.mxu0 0.0
  %1881 = vmatprep.subr.mxu0 0.0
  %1882 = vmatpush1.msra.mxu0 0.0
  %1883 = vmatprep.subr.mxu0 0.0
  %1884 = vmatpush1.msra.mxu0 0.0
  %1885 = vmatprep.subr.mxu0 0.0
  %1886 = vmatpush1.msra.mxu0 0.0
  %1887 = vmatprep.subr.mxu0 0.0
  %1888 = vmatpush1.msra.mxu0 0.0
  %1889 = vmatprep.subr.mxu0 0.0
  %1890 = vmatpush1.msra.mxu0 0.0
  %1891 = vmatprep.subr.mxu0 0.0
  %1892 = vmatpush1.msra.mxu0 0.0
  %1893 = vmatprep.subr.mxu0 0.0
  %1894 = vmatpush1.msra.mxu0 0.0
  %1895 = vmatprep.subr.mxu0 0.0
  %1896 = vmatpush1.msra.mxu0 0.0
  %1897 = vmatprep.subr.mxu0 0.0
  %1898 = vmatpush1.msra.mxu0 0.0
  %1899 = vmatprep.subr.mxu0 0.0
  %1900 = vmatpush1.msra.mxu0 0.0
  %1901 = vmatprep.subr.mxu0 0.0
  %1902 = vmatpush1.msra.mxu0 0.0
  %1903 = vmatprep.subr.mxu0 0.0
  %1904 = vmatpush1.msra.mxu0 0.0
  %1905 = vmatprep.subr.mxu0 0.0
  %1906 = vmatpush1.msra.mxu0 0.0
  %1907 = vmatprep.subr.mxu0 0.0
  %1908 = vmatpush1.msra.mxu0 0.0
  %1909 = vmatprep.subr.mxu0 0.0
  %1910 = vmatpush1.msra.mxu0 0.0
  %1911 = vmatprep.subr.mxu0 0.0
  %1912 = vmatpush1.msra.mxu0 0.0
  %1913 = vmatprep.subr.mxu0 0.0
  %1914 = vmatpush1.msra.mxu0 0.0
  %1915 = vmatprep.mubr.f32.mxu0 0.0
  %1916 = vmatmul.mubr.f32.gmra.mrb[0].mxu0 %v1849
  %v1917 = vpop.f32.mrb[0].mxu0
  %v1918 = vadd.f32 0.0, %v1917
  %v1919 = vpop.f32.mrb[0].mxu0
  %v1920 = vadd.f32 0.0, %v1919
  %1921 = vdwg.mxu0
  %v1922 = vld [vmem:[#allocation2 + $0x8] sm:$0xff]
  %v1923 = vadd.f32 %v1922, %v1918
  %v1924 = vld [vmem:[#allocation3 + $0x30] sm:$0xff]
  %v1925 = vadd.f32 %v1924, %v1920
  %v1926 = vxor.u32 %v1923, 2147483648
  %v1927 = vmul.f32 %v1926, 1.442695
  %v1928 = vpow.pop %v1927
  %v1929 = vadd.f32 %v1928, 1.0
  %v1930 = vrcp.pop %v1929
  %v1931 = vmul.f32 1.0, %v1930
  %v1932 = vtanh.pop %v1923
  %v1933 = vmul.f32 %v1931, %v1808
  %1935 = vrot.lane.b32.xlu0 %v1932, 64
  %v1936 = vpop.permute.xlu0 %1935
  %v1938 = vmul.f32 %v1931, %v1936
  %1940 = vrot.lane.b32.xlu0 %v1938, 32
  %v1941 = vpop.permute.xlu0 %1940
  %v1943 = vadd.f32 %v1933, %v1941
  %v1944 = vtanh.pop %v1943
  %1946 = vrot.lane.b32.xlu0 %v1944, 64
  %v1947 = vpop.permute.xlu0 %1946
  %v1949 = vmul.f32 %v1931, %v1947
  %v1950 = vxor.u32 %v1925, 2147483648
  %v1951 = vmul.f32 %v1950, 1.442695
  %v1952 = vpow.pop %v1951
  %v1953 = vadd.f32 %v1952, 1.0
  %v1954 = vrcp.pop %v1953
  %v1955 = vmul.f32 1.0, %v1954
  %v1956 = vtanh.pop %v1925
  %v1957 = vmul.f32 %v1955, %v1832
  %1959 = vrot.lane.b32.xlu0 %v1956, 64
  %v1960 = vpop.permute.xlu0 %1959
  %v1962 = vmul.f32 %v1955, %v1960
  %1964 = vrot.lane.b32.xlu0 %v1962, 32
  %v1965 = vpop.permute.xlu0 %1964
  %v1967 = vadd.f32 %v1957, %v1965
  %v1968 = vtanh.pop %v1967
  %1970 = vrot.lane.b32.xlu0 %v1968, 64
  %v1971 = vpop.permute.xlu0 %1970
  %v1973 = vmul.f32 %v1955, %v1971
  %1975 = vrot.lane.b32.xlu0 %v1949, 32
  %v1976 = vpop.permute.xlu0 %1975
  %1979 = vrot.lane.b32.xlu0 %v1973, 64
  %v1980 = vpop.permute.xlu0 %1979
  %v1982 = vsel %vm363, %v1976, %v1980
  %v1984 = vsel %vm232, %v1982, 0
  %1986 = vmatprep.subr.mxu0 %v1701
  %1987 = vmatpush1.msra.mxu0 %v1700
  %1988 = vmatprep.subr.mxu0 %v1703
  %1989 = vmatpush1.msra.mxu0 %v1702
  %1990 = vmatprep.subr.mxu0 %v1705
  %1991 = vmatpush1.msra.mxu0 %v1704
  %1992 = vmatprep.subr.mxu0 %v1707
  %1993 = vmatpush1.msra.mxu0 %v1706
  %1994 = vmatprep.subr.mxu0 %v1709
  %1995 = vmatpush1.msra.mxu0 %v1708
  %1996 = vmatprep.subr.mxu0 %v1711
  %1997 = vmatpush1.msra.mxu0 %v1710
  %1998 = vmatprep.subr.mxu0 %v1713
  %1999 = vmatpush1.msra.mxu0 %v1712
  %2000 = vmatprep.subr.mxu0 %v1715
  %2001 = vmatpush1.msra.mxu0 %v1714
  %2002 = vmatprep.subr.mxu0 0.0
  %2003 = vmatpush1.msra.mxu0 0.0
  %2004 = vmatprep.subr.mxu0 0.0
  %2005 = vmatpush1.msra.mxu0 0.0
  %2006 = vmatprep.subr.mxu0 0.0
  %2007 = vmatpush1.msra.mxu0 0.0
  %2008 = vmatprep.subr.mxu0 0.0
  %2009 = vmatpush1.msra.mxu0 0.0
  %2010 = vmatprep.subr.mxu0 0.0
  %2011 = vmatpush1.msra.mxu0 0.0
  %2012 = vmatprep.subr.mxu0 0.0
  %2013 = vmatpush1.msra.mxu0 0.0
  %2014 = vmatprep.subr.mxu0 0.0
  %2015 = vmatpush1.msra.mxu0 0.0
  %2016 = vmatprep.subr.mxu0 0.0
  %2017 = vmatpush1.msra.mxu0 0.0
  %2018 = vmatprep.subr.mxu0 0.0
  %2019 = vmatpush1.msra.mxu0 0.0
  %2020 = vmatprep.subr.mxu0 0.0
  %2021 = vmatpush1.msra.mxu0 0.0
  %2022 = vmatprep.subr.mxu0 0.0
  %2023 = vmatpush1.msra.mxu0 0.0
  %2024 = vmatprep.subr.mxu0 0.0
  %2025 = vmatpush1.msra.mxu0 0.0
  %2026 = vmatprep.subr.mxu0 0.0
  %2027 = vmatpush1.msra.mxu0 0.0
  %2028 = vmatprep.subr.mxu0 0.0
  %2029 = vmatpush1.msra.mxu0 0.0
  %2030 = vmatprep.subr.mxu0 0.0
  %2031 = vmatpush1.msra.mxu0 0.0
  %2032 = vmatprep.subr.mxu0 0.0
  %2033 = vmatpush1.msra.mxu0 0.0
  %2034 = vmatprep.subr.mxu0 0.0
  %2035 = vmatpush1.msra.mxu0 0.0
  %2036 = vmatprep.subr.mxu0 0.0
  %2037 = vmatpush1.msra.mxu0 0.0
  %2038 = vmatprep.subr.mxu0 0.0
  %2039 = vmatpush1.msra.mxu0 0.0
  %2040 = vmatprep.subr.mxu0 0.0
  %2041 = vmatpush1.msra.mxu0 0.0
  %2042 = vmatprep.subr.mxu0 0.0
  %2043 = vmatpush1.msra.mxu0 0.0
  %2044 = vmatprep.subr.mxu0 0.0
  %2045 = vmatpush1.msra.mxu0 0.0
  %2046 = vmatprep.subr.mxu0 0.0
  %2047 = vmatpush1.msra.mxu0 0.0
  %2048 = vmatprep.subr.mxu0 0.0
  %2049 = vmatpush1.msra.mxu0 0.0
  %2050 = vmatprep.mubr.f32.mxu0 0.0
  %2051 = vmatmul.mubr.f32.gmra.mrb[0].mxu0 %v1984
  %v2052 = vpop.f32.mrb[0].mxu0
  %v2053 = vadd.f32 0.0, %v2052
  %v2054 = vpop.f32.mrb[0].mxu0
  %v2055 = vadd.f32 0.0, %v2054
  %2056 = vdwg.mxu0
  %v2057 = vld [vmem:[#allocation2 + $0x10] sm:$0xff]
  %v2058 = vadd.f32 %v2057, %v2053
  %v2059 = vld [vmem:[#allocation3 + $0x28] sm:$0xff]
  %v2060 = vadd.f32 %v2059, %v2055
  %v2061 = vxor.u32 %v2058, 2147483648
  %v2062 = vmul.f32 %v2061, 1.442695
  %v2063 = vpow.pop %v2062
  %v2064 = vadd.f32 %v2063, 1.0
  %v2065 = vrcp.pop %v2064
  %v2066 = vmul.f32 1.0, %v2065
  %v2067 = vtanh.pop %v2058
  %v2068 = vmul.f32 %v2066, %v1943
  %2070 = vrot.lane.b32.xlu0 %v2067, 64
  %v2071 = vpop.permute.xlu0 %2070
  %v2073 = vmul.f32 %v2066, %v2071
  %2075 = vrot.lane.b32.xlu0 %v2073, 32
  %v2076 = vpop.permute.xlu0 %2075
  %v2078 = vadd.f32 %v2068, %v2076
  %v2079 = vtanh.pop %v2078
  %2081 = vrot.lane.b32.xlu0 %v2079, 64
  %v2082 = vpop.permute.xlu0 %2081
  %v2084 = vmul.f32 %v2066, %v2082
  %v2085 = vxor.u32 %v2060, 2147483648
  %v2086 = vmul.f32 %v2085, 1.442695
  %v2087 = vpow.pop %v2086
  %v2088 = vadd.f32 %v2087, 1.0
  %v2089 = vrcp.pop %v2088
  %v2090 = vmul.f32 1.0, %v2089
  %v2091 = vtanh.pop %v2060
  %v2092 = vmul.f32 %v2090, %v1967
  %2094 = vrot.lane.b32.xlu0 %v2091, 64
  %v2095 = vpop.permute.xlu0 %2094
  %v2097 = vmul.f32 %v2090, %v2095
  %2099 = vrot.lane.b32.xlu0 %v2097, 32
  %v2100 = vpop.permute.xlu0 %2099
  %v2102 = vadd.f32 %v2092, %v2100
  %v2103 = vtanh.pop %v2102
  %2105 = vrot.lane.b32.xlu0 %v2103, 64
  %v2106 = vpop.permute.xlu0 %2105
  %v2108 = vmul.f32 %v2090, %v2106
  %2110 = vrot.lane.b32.xlu0 %v2084, 32
  %v2111 = vpop.permute.xlu0 %2110
  %2114 = vrot.lane.b32.xlu0 %v2108, 64
  %v2115 = vpop.permute.xlu0 %2114
  %v2117 = vsel %vm363, %v2111, %v2115
  %v2119 = vsel %vm232, %v2117, 0
  %2121 = vmatprep.subr.mxu0 %v1701
  %2122 = vmatpush1.msra.mxu0 %v1700
  %2123 = vmatprep.subr.mxu0 %v1703
  %2124 = vmatpush1.msra.mxu0 %v1702
  %2125 = vmatprep.subr.mxu0 %v1705
  %2126 = vmatpush1.msra.mxu0 %v1704
  %2127 = vmatprep.subr.mxu0 %v1707
  %2128 = vmatpush1.msra.mxu0 %v1706
  %2129 = vmatprep.subr.mxu0 %v1709
  %2130 = vmatpush1.msra.mxu0 %v1708
  %2131 = vmatprep.subr.mxu0 %v1711
  %2132 = vmatpush1.msra.mxu0 %v1710
  %2133 = vmatprep.subr.mxu0 %v1713
  %2134 = vmatpush1.msra.mxu0 %v1712
  %2135 = vmatprep.subr.mxu0 %v1715
  %2136 = vmatpush1.msra.mxu0 %v1714
  %2137 = vmatprep.subr.mxu0 0.0
  %2138 = vmatpush1.msra.mxu0 0.0
  %2139 = vmatprep.subr.mxu0 0.0
  %2140 = vmatpush1.msra.mxu0 0.0
  %2141 = vmatprep.subr.mxu0 0.0
  %2142 = vmatpush1.msra.mxu0 0.0
  %2143 = vmatprep.subr.mxu0 0.0
  %2144 = vmatpush1.msra.mxu0 0.0
  %2145 = vmatprep.subr.mxu0 0.0
  %2146 = vmatpush1.msra.mxu0 0.0
  %2147 = vmatprep.subr.mxu0 0.0
  %2148 = vmatpush1.msra.mxu0 0.0
  %2149 = vmatprep.subr.mxu0 0.0
  %2150 = vmatpush1.msra.mxu0 0.0
  %2151 = vmatprep.subr.mxu0 0.0
  %2152 = vmatpush1.msra.mxu0 0.0
  %2153 = vmatprep.subr.mxu0 0.0
  %2154 = vmatpush1.msra.mxu0 0.0
  %2155 = vmatprep.subr.mxu0 0.0
  %2156 = vmatpush1.msra.mxu0 0.0
  %2157 = vmatprep.subr.mxu0 0.0
  %2158 = vmatpush1.msra.mxu0 0.0
  %2159 = vmatprep.subr.mxu0 0.0
  %2160 = vmatpush1.msra.mxu0 0.0
  %2161 = vmatprep.subr.mxu0 0.0
  %2162 = vmatpush1.msra.mxu0 0.0
  %2163 = vmatprep.subr.mxu0 0.0
  %2164 = vmatpush1.msra.mxu0 0.0
  %2165 = vmatprep.subr.mxu0 0.0
  %2166 = vmatpush1.msra.mxu0 0.0
  %2167 = vmatprep.subr.mxu0 0.0
  %2168 = vmatpush1.msra.mxu0 0.0
  %2169 = vmatprep.subr.mxu0 0.0
  %2170 = vmatpush1.msra.mxu0 0.0
  %2171 = vmatprep.subr.mxu0 0.0
  %2172 = vmatpush1.msra.mxu0 0.0
  %2173 = vmatprep.subr.mxu0 0.0
  %2174 = vmatpush1.msra.mxu0 0.0
  %2175 = vmatprep.subr.mxu0 0.0
  %2176 = vmatpush1.msra.mxu0 0.0
  %2177 = vmatprep.subr.mxu0 0.0
  %2178 = vmatpush1.msra.mxu0 0.0
  %2179 = vmatprep.subr.mxu0 0.0
  %2180 = vmatpush1.msra.mxu0 0.0
  %2181 = vmatprep.subr.mxu0 0.0
  %2182 = vmatpush1.msra.mxu0 0.0
  %2183 = vmatprep.subr.mxu0 0.0
  %2184 = vmatpush1.msra.mxu0 0.0
  %2185 = vmatprep.mubr.f32.mxu0 0.0
  %2186 = vmatmul.mubr.f32.gmra.mrb[0].mxu0 %v2119
  %v2187 = vpop.f32.mrb[0].mxu0
  %v2188 = vadd.f32 0.0, %v2187
  %v2189 = vpop.f32.mrb[0].mxu0
  %v2190 = vadd.f32 0.0, %v2189
  %2191 = vdwg.mxu0
  %v2192 = vld [vmem:[#allocation2 + $0x18] sm:$0xff]
  %v2193 = vadd.f32 %v2192, %v2188
  %v2194 = vld [vmem:[#allocation3 + $0x20] sm:$0xff]
  %v2195 = vadd.f32 %v2194, %v2190
  %v2196 = vxor.u32 %v2193, 2147483648
  %v2197 = vmul.f32 %v2196, 1.442695
  %v2198 = vpow.pop %v2197
  %v2199 = vadd.f32 %v2198, 1.0
  %v2200 = vrcp.pop %v2199
  %v2201 = vmul.f32 1.0, %v2200
  %v2202 = vtanh.pop %v2193
  %v2203 = vmul.f32 %v2201, %v2078
  %2205 = vrot.lane.b32.xlu0 %v2202, 64
  %v2206 = vpop.permute.xlu0 %2205
  %v2208 = vmul.f32 %v2201, %v2206
  %2210 = vrot.lane.b32.xlu0 %v2208, 32
  %v2211 = vpop.permute.xlu0 %2210
  %v2213 = vadd.f32 %v2203, %v2211
  %v2214 = vtanh.pop %v2213
  %2216 = vrot.lane.b32.xlu0 %v2214, 64
  %v2217 = vpop.permute.xlu0 %2216
  %v2219 = vmul.f32 %v2201, %v2217
  %v2220 = vxor.u32 %v2195, 2147483648
  %v2221 = vmul.f32 %v2220, 1.442695
  %v2222 = vpow.pop %v2221
  %v2223 = vadd.f32 %v2222, 1.0
  %v2224 = vrcp.pop %v2223
  %v2225 = vmul.f32 1.0, %v2224
  %v2226 = vtanh.pop %v2195
  %v2227 = vmul.f32 %v2225, %v2102
  %2229 = vrot.lane.b32.xlu0 %v2226, 64
  %v2230 = vpop.permute.xlu0 %2229
  %v2232 = vmul.f32 %v2225, %v2230
  %2234 = vrot.lane.b32.xlu0 %v2232, 32
  %v2235 = vpop.permute.xlu0 %2234
  %v2237 = vadd.f32 %v2227, %v2235
  %v2238 = vtanh.pop %v2237
  %2240 = vrot.lane.b32.xlu0 %v2238, 64
  %v2241 = vpop.permute.xlu0 %2240
  %v2243 = vmul.f32 %v2225, %v2241
  %2245 = vrot.lane.b32.xlu0 %v2219, 32
  %v2246 = vpop.permute.xlu0 %2245
  %2249 = vrot.lane.b32.xlu0 %v2243, 64
  %v2250 = vpop.permute.xlu0 %2249
  %v2252 = vsel %vm363, %v2246, %v2250
  %v2254 = vsel %vm232, %v2252, 0
  %2256 = vmatprep.subr.mxu0 %v1701
  %2257 = vmatpush1.msra.mxu0 %v1700
  %2258 = vmatprep.subr.mxu0 %v1703
  %2259 = vmatpush1.msra.mxu0 %v1702
  %2260 = vmatprep.subr.mxu0 %v1705
  %2261 = vmatpush1.msra.mxu0 %v1704
  %2262 = vmatprep.subr.mxu0 %v1707
  %2263 = vmatpush1.msra.mxu0 %v1706
  %2264 = vmatprep.subr.mxu0 %v1709
  %2265 = vmatpush1.msra.mxu0 %v1708
  %2266 = vmatprep.subr.mxu0 %v1711
  %2267 = vmatpush1.msra.mxu0 %v1710
  %2268 = vmatprep.subr.mxu0 %v1713
  %2269 = vmatpush1.msra.mxu0 %v1712
  %2270 = vmatprep.subr.mxu0 %v1715
  %2271 = vmatpush1.msra.mxu0 %v1714
  %2272 = vmatprep.subr.mxu0 0.0
  %2273 = vmatpush1.msra.mxu0 0.0
  %2274 = vmatprep.subr.mxu0 0.0
  %2275 = vmatpush1.msra.mxu0 0.0
  %2276 = vmatprep.subr.mxu0 0.0
  %2277 = vmatpush1.msra.mxu0 0.0
  %2278 = vmatprep.subr.mxu0 0.0
  %2279 = vmatpush1.msra.mxu0 0.0
  %2280 = vmatprep.subr.mxu0 0.0
  %2281 = vmatpush1.msra.mxu0 0.0
  %2282 = vmatprep.subr.mxu0 0.0
  %2283 = vmatpush1.msra.mxu0 0.0
  %2284 = vmatprep.subr.mxu0 0.0
  %2285 = vmatpush1.msra.mxu0 0.0
  %2286 = vmatprep.subr.mxu0 0.0
  %2287 = vmatpush1.msra.mxu0 0.0
  %2288 = vmatprep.subr.mxu0 0.0
  %2289 = vmatpush1.msra.mxu0 0.0
  %2290 = vmatprep.subr.mxu0 0.0
  %2291 = vmatpush1.msra.mxu0 0.0
  %2292 = vmatprep.subr.mxu0 0.0
  %2293 = vmatpush1.msra.mxu0 0.0
  %2294 = vmatprep.subr.mxu0 0.0
  %2295 = vmatpush1.msra.mxu0 0.0
  %2296 = vmatprep.subr.mxu0 0.0
  %2297 = vmatpush1.msra.mxu0 0.0
  %2298 = vmatprep.subr.mxu0 0.0
  %2299 = vmatpush1.msra.mxu0 0.0
  %2300 = vmatprep.subr.mxu0 0.0
  %2301 = vmatpush1.msra.mxu0 0.0
  %2302 = vmatprep.subr.mxu0 0.0
  %2303 = vmatpush1.msra.mxu0 0.0
  %2304 = vmatprep.subr.mxu0 0.0
  %2305 = vmatpush1.msra.mxu0 0.0
  %2306 = vmatprep.subr.mxu0 0.0
  %2307 = vmatpush1.msra.mxu0 0.0
  %2308 = vmatprep.subr.mxu0 0.0
  %2309 = vmatpush1.msra.mxu0 0.0
  %2310 = vmatprep.subr.mxu0 0.0
  %2311 = vmatpush1.msra.mxu0 0.0
  %2312 = vmatprep.subr.mxu0 0.0
  %2313 = vmatpush1.msra.mxu0 0.0
  %2314 = vmatprep.subr.mxu0 0.0
  %2315 = vmatpush1.msra.mxu0 0.0
  %2316 = vmatprep.subr.mxu0 0.0
  %2317 = vmatpush1.msra.mxu0 0.0
  %2318 = vmatprep.subr.mxu0 0.0
  %2319 = vmatpush1.msra.mxu0 0.0
  %2320 = vmatprep.mubr.f32.mxu0 0.0
  %2321 = vmatmul.mubr.f32.gmra.mrb[0].mxu0 %v2254
  %v2322 = vpop.f32.mrb[0].mxu0
  %v2323 = vadd.f32 0.0, %v2322
  %v2324 = vpop.f32.mrb[0].mxu0
  %v2325 = vadd.f32 0.0, %v2324
  %2326 = vdwg.mxu0
  %v2327 = vld [vmem:[#allocation2 + $0x20] sm:$0xff]
  %v2328 = vadd.f32 %v2327, %v2323
  %v2329 = vld [vmem:[#allocation3 + $0x18] sm:$0xff]
  %v2330 = vadd.f32 %v2329, %v2325
  %v2331 = vxor.u32 %v2328, 2147483648
  %v2332 = vmul.f32 %v2331, 1.442695
  %v2333 = vpow.pop %v2332
  %v2334 = vadd.f32 %v2333, 1.0
  %v2335 = vrcp.pop %v2334
  %v2336 = vmul.f32 1.0, %v2335
  %v2337 = vtanh.pop %v2328
  %v2338 = vmul.f32 %v2336, %v2213
  %2340 = vrot.lane.b32.xlu0 %v2337, 64
  %v2341 = vpop.permute.xlu0 %2340
  %v2343 = vmul.f32 %v2336, %v2341
  %2345 = vrot.lane.b32.xlu0 %v2343, 32
  %v2346 = vpop.permute.xlu0 %2345
  %v2348 = vadd.f32 %v2338, %v2346
  %v2349 = vtanh.pop %v2348
  %2351 = vrot.lane.b32.xlu0 %v2349, 64
  %v2352 = vpop.permute.xlu0 %2351
  %v2354 = vmul.f32 %v2336, %v2352
  %v2355 = vxor.u32 %v2330, 2147483648
  %v2356 = vmul.f32 %v2355, 1.442695
  %v2357 = vpow.pop %v2356
  %v2358 = vadd.f32 %v2357, 1.0
  %v2359 = vrcp.pop %v2358
  %v2360 = vmul.f32 1.0, %v2359
  %v2361 = vtanh.pop %v2330
  %v2362 = vmul.f32 %v2360, %v2237
  %2364 = vrot.lane.b32.xlu0 %v2361, 64
  %v2365 = vpop.permute.xlu0 %2364
  %v2367 = vmul.f32 %v2360, %v2365
  %2369 = vrot.lane.b32.xlu0 %v2367, 32
  %v2370 = vpop.permute.xlu0 %2369
  %v2372 = vadd.f32 %v2362, %v2370
  %v2373 = vtanh.pop %v2372
  %2375 = vrot.lane.b32.xlu0 %v2373, 64
  %v2376 = vpop.permute.xlu0 %2375
  %v2378 = vmul.f32 %v2360, %v2376
  %2380 = vrot.lane.b32.xlu0 %v2354, 32
  %v2381 = vpop.permute.xlu0 %2380
  %2384 = vrot.lane.b32.xlu0 %v2378, 64
  %v2385 = vpop.permute.xlu0 %2384
  %v2387 = vsel %vm363, %v2381, %v2385
  %v2389 = vsel %vm232, %v2387, 0
  %2391 = vmatprep.subr.mxu0 %v1701
  %2392 = vmatpush1.msra.mxu0 %v1700
  %2393 = vmatprep.subr.mxu0 %v1703
  %2394 = vmatpush1.msra.mxu0 %v1702
  %2395 = vmatprep.subr.mxu0 %v1705
  %2396 = vmatpush1.msra.mxu0 %v1704
  %2397 = vmatprep.subr.mxu0 %v1707
  %2398 = vmatpush1.msra.mxu0 %v1706
  %2399 = vmatprep.subr.mxu0 %v1709
  %2400 = vmatpush1.msra.mxu0 %v1708
  %2401 = vmatprep.subr.mxu0 %v1711
  %2402 = vmatpush1.msra.mxu0 %v1710
  %2403 = vmatprep.subr.mxu0 %v1713
  %2404 = vmatpush1.msra.mxu0 %v1712
  %2405 = vmatprep.subr.mxu0 %v1715
  %2406 = vmatpush1.msra.mxu0 %v1714
  %2407 = vmatprep.subr.mxu0 0.0
  %2408 = vmatpush1.msra.mxu0 0.0
  %2409 = vmatprep.subr.mxu0 0.0
  %2410 = vmatpush1.msra.mxu0 0.0
  %2411 = vmatprep.subr.mxu0 0.0
  %2412 = vmatpush1.msra.mxu0 0.0
  %2413 = vmatprep.subr.mxu0 0.0
  %2414 = vmatpush1.msra.mxu0 0.0
  %2415 = vmatprep.subr.mxu0 0.0
  %2416 = vmatpush1.msra.mxu0 0.0
  %2417 = vmatprep.subr.mxu0 0.0
  %2418 = vmatpush1.msra.mxu0 0.0
  %2419 = vmatprep.subr.mxu0 0.0
  %2420 = vmatpush1.msra.mxu0 0.0
  %2421 = vmatprep.subr.mxu0 0.0
  %2422 = vmatpush1.msra.mxu0 0.0
  %2423 = vmatprep.subr.mxu0 0.0
  %2424 = vmatpush1.msra.mxu0 0.0
  %2425 = vmatprep.subr.mxu0 0.0
  %2426 = vmatpush1.msra.mxu0 0.0
  %2427 = vmatprep.subr.mxu0 0.0
  %2428 = vmatpush1.msra.mxu0 0.0
  %2429 = vmatprep.subr.mxu0 0.0
  %2430 = vmatpush1.msra.mxu0 0.0
  %2431 = vmatprep.subr.mxu0 0.0
  %2432 = vmatpush1.msra.mxu0 0.0
  %2433 = vmatprep.subr.mxu0 0.0
  %2434 = vmatpush1.msra.mxu0 0.0
  %2435 = vmatprep.subr.mxu0 0.0
  %2436 = vmatpush1.msra.mxu0 0.0
  %2437 = vmatprep.subr.mxu0 0.0
  %2438 = vmatpush1.msra.mxu0 0.0
  %2439 = vmatprep.subr.mxu0 0.0
  %2440 = vmatpush1.msra.mxu0 0.0
  %2441 = vmatprep.subr.mxu0 0.0
  %2442 = vmatpush1.msra.mxu0 0.0
  %2443 = vmatprep.subr.mxu0 0.0
  %2444 = vmatpush1.msra.mxu0 0.0
  %2445 = vmatprep.subr.mxu0 0.0
  %2446 = vmatpush1.msra.mxu0 0.0
  %2447 = vmatprep.subr.mxu0 0.0
  %2448 = vmatpush1.msra.mxu0 0.0
  %2449 = vmatprep.subr.mxu0 0.0
  %2450 = vmatpush1.msra.mxu0 0.0
  %2451 = vmatprep.subr.mxu0 0.0
  %2452 = vmatpush1.msra.mxu0 0.0
  %2453 = vmatprep.subr.mxu0 0.0
  %2454 = vmatpush1.msra.mxu0 0.0
  %2455 = vmatprep.mubr.f32.mxu0 0.0
  %2456 = vmatmul.mubr.f32.gmra.mrb[0].mxu0 %v2389
  %v2457 = vpop.f32.mrb[0].mxu0
  %v2458 = vadd.f32 0.0, %v2457
  %v2459 = vpop.f32.mrb[0].mxu0
  %v2460 = vadd.f32 0.0, %v2459
  %2461 = vdwg.mxu0
  %v2462 = vld [vmem:[#allocation2 + $0x28] sm:$0xff]
  %v2463 = vadd.f32 %v2462, %v2458
  %v2464 = vld [vmem:[#allocation3 + $0x10] sm:$0xff]
  %v2465 = vadd.f32 %v2464, %v2460
  %v2466 = vxor.u32 %v2463, 2147483648
  %v2467 = vmul.f32 %v2466, 1.442695
  %v2468 = vpow.pop %v2467
  %v2469 = vadd.f32 %v2468, 1.0
  %v2470 = vrcp.pop %v2469
  %v2471 = vmul.f32 1.0, %v2470
  %v2472 = vtanh.pop %v2463
  %v2473 = vmul.f32 %v2471, %v2348
  %2475 = vrot.lane.b32.xlu0 %v2472, 64
  %v2476 = vpop.permute.xlu0 %2475
  %v2478 = vmul.f32 %v2471, %v2476
  %2480 = vrot.lane.b32.xlu0 %v2478, 32
  %v2481 = vpop.permute.xlu0 %2480
  %v2483 = vadd.f32 %v2473, %v2481
  %v2484 = vtanh.pop %v2483
  %2486 = vrot.lane.b32.xlu0 %v2484, 64
  %v2487 = vpop.permute.xlu0 %2486
  %v2489 = vmul.f32 %v2471, %v2487
  %v2490 = vxor.u32 %v2465, 2147483648
  %v2491 = vmul.f32 %v2490, 1.442695
  %v2492 = vpow.pop %v2491
  %v2493 = vadd.f32 %v2492, 1.0
  %v2494 = vrcp.pop %v2493
  %v2495 = vmul.f32 1.0, %v2494
  %v2496 = vtanh.pop %v2465
  %v2497 = vmul.f32 %v2495, %v2372
  %2499 = vrot.lane.b32.xlu0 %v2496, 64
  %v2500 = vpop.permute.xlu0 %2499
  %v2502 = vmul.f32 %v2495, %v2500
  %2504 = vrot.lane.b32.xlu0 %v2502, 32
  %v2505 = vpop.permute.xlu0 %2504
  %v2507 = vadd.f32 %v2497, %v2505
  %v2508 = vtanh.pop %v2507
  %2510 = vrot.lane.b32.xlu0 %v2508, 64
  %v2511 = vpop.permute.xlu0 %2510
  %v2513 = vmul.f32 %v2495, %v2511
  %2515 = vrot.lane.b32.xlu0 %v2489, 32
  %v2516 = vpop.permute.xlu0 %2515
  %2519 = vrot.lane.b32.xlu0 %v2513, 64
  %v2520 = vpop.permute.xlu0 %2519
  %v2522 = vsel %vm363, %v2516, %v2520
  %v2524 = vsel %vm232, %v2522, 0
  %2526 = vmatprep.subr.mxu0 %v1701
  %2527 = vmatpush1.msra.mxu0 %v1700
  %2528 = vmatprep.subr.mxu0 %v1703
  %2529 = vmatpush1.msra.mxu0 %v1702
  %2530 = vmatprep.subr.mxu0 %v1705
  %2531 = vmatpush1.msra.mxu0 %v1704
  %2532 = vmatprep.subr.mxu0 %v1707
  %2533 = vmatpush1.msra.mxu0 %v1706
  %2534 = vmatprep.subr.mxu0 %v1709
  %2535 = vmatpush1.msra.mxu0 %v1708
  %2536 = vmatprep.subr.mxu0 %v1711
  %2537 = vmatpush1.msra.mxu0 %v1710
  %2538 = vmatprep.subr.mxu0 %v1713
  %2539 = vmatpush1.msra.mxu0 %v1712
  %2540 = vmatprep.subr.mxu0 %v1715
  %2541 = vmatpush1.msra.mxu0 %v1714
  %2542 = vmatprep.subr.mxu0 0.0
  %2543 = vmatpush1.msra.mxu0 0.0
  %2544 = vmatprep.subr.mxu0 0.0
  %2545 = vmatpush1.msra.mxu0 0.0
  %2546 = vmatprep.subr.mxu0 0.0
  %2547 = vmatpush1.msra.mxu0 0.0
  %2548 = vmatprep.subr.mxu0 0.0
  %2549 = vmatpush1.msra.mxu0 0.0
  %2550 = vmatprep.subr.mxu0 0.0
  %2551 = vmatpush1.msra.mxu0 0.0
  %2552 = vmatprep.subr.mxu0 0.0
  %2553 = vmatpush1.msra.mxu0 0.0
  %2554 = vmatprep.subr.mxu0 0.0
  %2555 = vmatpush1.msra.mxu0 0.0
  %2556 = vmatprep.subr.mxu0 0.0
  %2557 = vmatpush1.msra.mxu0 0.0
  %2558 = vmatprep.subr.mxu0 0.0
  %2559 = vmatpush1.msra.mxu0 0.0
  %2560 = vmatprep.subr.mxu0 0.0
  %2561 = vmatpush1.msra.mxu0 0.0
  %2562 = vmatprep.subr.mxu0 0.0
  %2563 = vmatpush1.msra.mxu0 0.0
  %2564 = vmatprep.subr.mxu0 0.0
  %2565 = vmatpush1.msra.mxu0 0.0
  %2566 = vmatprep.subr.mxu0 0.0
  %2567 = vmatpush1.msra.mxu0 0.0
  %2568 = vmatprep.subr.mxu0 0.0
  %2569 = vmatpush1.msra.mxu0 0.0
  %2570 = vmatprep.subr.mxu0 0.0
  %2571 = vmatpush1.msra.mxu0 0.0
  %2572 = vmatprep.subr.mxu0 0.0
  %2573 = vmatpush1.msra.mxu0 0.0
  %2574 = vmatprep.subr.mxu0 0.0
  %2575 = vmatpush1.msra.mxu0 0.0
  %2576 = vmatprep.subr.mxu0 0.0
  %2577 = vmatpush1.msra.mxu0 0.0
  %2578 = vmatprep.subr.mxu0 0.0
  %2579 = vmatpush1.msra.mxu0 0.0
  %2580 = vmatprep.subr.mxu0 0.0
  %2581 = vmatpush1.msra.mxu0 0.0
  %2582 = vmatprep.subr.mxu0 0.0
  %2583 = vmatpush1.msra.mxu0 0.0
  %2584 = vmatprep.subr.mxu0 0.0
  %2585 = vmatpush1.msra.mxu0 0.0
  %2586 = vmatprep.subr.mxu0 0.0
  %2587 = vmatpush1.msra.mxu0 0.0
  %2588 = vmatprep.subr.mxu0 0.0
  %2589 = vmatpush1.msra.mxu0 0.0
  %2590 = vmatprep.mubr.f32.mxu0 0.0
  %2591 = vmatmul.mubr.f32.gmra.mrb[0].mxu0 %v2524
  %v2592 = vpop.f32.mrb[0].mxu0
  %v2593 = vadd.f32 0.0, %v2592
  %v2594 = vpop.f32.mrb[0].mxu0
  %v2595 = vadd.f32 0.0, %v2594
  %2596 = vdwg.mxu0
  %v2597 = vld [vmem:[#allocation2 + $0x30] sm:$0xff]
  %v2598 = vadd.f32 %v2597, %v2593
  %v2599 = vld [vmem:[#allocation3 + $0x8] sm:$0xff]
  %v2600 = vadd.f32 %v2599, %v2595
  %v2601 = vxor.u32 %v2598, 2147483648
  %v2602 = vmul.f32 %v2601, 1.442695
  %v2603 = vpow.pop %v2602
  %v2604 = vadd.f32 %v2603, 1.0
  %v2605 = vrcp.pop %v2604
  %v2606 = vmul.f32 1.0, %v2605
  %v2607 = vtanh.pop %v2598
  %v2608 = vmul.f32 %v2606, %v2483
  %2610 = vrot.lane.b32.xlu0 %v2607, 64
  %v2611 = vpop.permute.xlu0 %2610
  %v2613 = vmul.f32 %v2606, %v2611
  %2615 = vrot.lane.b32.xlu0 %v2613, 32
  %v2616 = vpop.permute.xlu0 %2615
  %v2618 = vadd.f32 %v2608, %v2616
  %v2619 = vtanh.pop %v2618
  %2621 = vrot.lane.b32.xlu0 %v2619, 64
  %v2622 = vpop.permute.xlu0 %2621
  %v2624 = vmul.f32 %v2606, %v2622
  %v2625 = vxor.u32 %v2600, 2147483648
  %v2626 = vmul.f32 %v2625, 1.442695
  %v2627 = vpow.pop %v2626
  %v2628 = vadd.f32 %v2627, 1.0
  %v2629 = vrcp.pop %v2628
  %v2630 = vmul.f32 1.0, %v2629
  %v2631 = vtanh.pop %v2600
  %v2632 = vmul.f32 %v2630, %v2507
  %2634 = vrot.lane.b32.xlu0 %v2631, 64
  %v2635 = vpop.permute.xlu0 %2634
  %v2637 = vmul.f32 %v2630, %v2635
  %2639 = vrot.lane.b32.xlu0 %v2637, 32
  %v2640 = vpop.permute.xlu0 %2639
  %v2642 = vadd.f32 %v2632, %v2640
  %v2643 = vtanh.pop %v2642
  %2645 = vrot.lane.b32.xlu0 %v2643, 64
  %v2646 = vpop.permute.xlu0 %2645
  %v2648 = vmul.f32 %v2630, %v2646
  %2650 = vrot.lane.b32.xlu0 %v2624, 32
  %v2651 = vpop.permute.xlu0 %2650
  %2654 = vrot.lane.b32.xlu0 %v2648, 64
  %v2655 = vpop.permute.xlu0 %2654
  %v2657 = vsel %vm363, %v2651, %v2655
  %v2659 = vsel %vm232, %v2657, 0
  %2661 = vmatprep.subr.mxu0 %v1701
  %2662 = vmatpush1.msra.mxu0 %v1700
  %2663 = vmatprep.subr.mxu0 %v1703
  %2664 = vmatpush1.msra.mxu0 %v1702
  %2665 = vmatprep.subr.mxu0 %v1705
  %2666 = vmatpush1.msra.mxu0 %v1704
  %2667 = vmatprep.subr.mxu0 %v1707
  %2668 = vmatpush1.msra.mxu0 %v1706
  %2669 = vmatprep.subr.mxu0 %v1709
  %2670 = vmatpush1.msra.mxu0 %v1708
  %2671 = vmatprep.subr.mxu0 %v1711
  %2672 = vmatpush1.msra.mxu0 %v1710
  %2673 = vmatprep.subr.mxu0 %v1713
  %2674 = vmatpush1.msra.mxu0 %v1712
  %2675 = vmatprep.subr.mxu0 %v1715
  %2676 = vmatpush1.msra.mxu0 %v1714
  %2677 = vmatprep.subr.mxu0 0.0
  %2678 = vmatpush1.msra.mxu0 0.0
  %2679 = vmatprep.subr.mxu0 0.0
  %2680 = vmatpush1.msra.mxu0 0.0
  %2681 = vmatprep.subr.mxu0 0.0
  %2682 = vmatpush1.msra.mxu0 0.0
  %2683 = vmatprep.subr.mxu0 0.0
  %2684 = vmatpush1.msra.mxu0 0.0
  %2685 = vmatprep.subr.mxu0 0.0
  %2686 = vmatpush1.msra.mxu0 0.0
  %2687 = vmatprep.subr.mxu0 0.0
  %2688 = vmatpush1.msra.mxu0 0.0
  %2689 = vmatprep.subr.mxu0 0.0
  %2690 = vmatpush1.msra.mxu0 0.0
  %2691 = vmatprep.subr.mxu0 0.0
  %2692 = vmatpush1.msra.mxu0 0.0
  %2693 = vmatprep.subr.mxu0 0.0
  %2694 = vmatpush1.msra.mxu0 0.0
  %2695 = vmatprep.subr.mxu0 0.0
  %2696 = vmatpush1.msra.mxu0 0.0
  %2697 = vmatprep.subr.mxu0 0.0
  %2698 = vmatpush1.msra.mxu0 0.0
  %2699 = vmatprep.subr.mxu0 0.0
  %2700 = vmatpush1.msra.mxu0 0.0
  %2701 = vmatprep.subr.mxu0 0.0
  %2702 = vmatpush1.msra.mxu0 0.0
  %2703 = vmatprep.subr.mxu0 0.0
  %2704 = vmatpush1.msra.mxu0 0.0
  %2705 = vmatprep.subr.mxu0 0.0
  %2706 = vmatpush1.msra.mxu0 0.0
  %2707 = vmatprep.subr.mxu0 0.0
  %2708 = vmatpush1.msra.mxu0 0.0
  %2709 = vmatprep.subr.mxu0 0.0
  %2710 = vmatpush1.msra.mxu0 0.0
  %2711 = vmatprep.subr.mxu0 0.0
  %2712 = vmatpush1.msra.mxu0 0.0
  %2713 = vmatprep.subr.mxu0 0.0
  %2714 = vmatpush1.msra.mxu0 0.0
  %2715 = vmatprep.subr.mxu0 0.0
  %2716 = vmatpush1.msra.mxu0 0.0
  %2717 = vmatprep.subr.mxu0 0.0
  %2718 = vmatpush1.msra.mxu0 0.0
  %2719 = vmatprep.subr.mxu0 0.0
  %2720 = vmatpush1.msra.mxu0 0.0
  %2721 = vmatprep.subr.mxu0 0.0
  %2722 = vmatpush1.msra.mxu0 0.0
  %2723 = vmatprep.subr.mxu0 0.0
  %2724 = vmatpush1.msra.mxu0 0.0
  %2725 = vmatprep.mubr.f32.mxu0 0.0
  %2726 = vmatmul.mubr.f32.gmra.mrb[0].mxu0 %v2659
  %v2727 = vpop.f32.mrb[0].mxu0
  %v2728 = vadd.f32 0.0, %v2727
  %v2729 = vpop.f32.mrb[0].mxu0
  %2730 = vdwg.mxu0
  %v2731 = vld [vmem:[#allocation2 + $0x38] sm:$0xff]
  %v2732 = vadd.f32 %v2731, %v2728
  %v2733 = vxor.u32 %v2732, 2147483648
  %v2734 = vmul.f32 %v2733, 1.442695
  %v2735 = vpow.pop %v2734
  %v2736 = vadd.f32 %v2735, 1.0
  %v2737 = vrcp.pop %v2736
  %v2738 = vmul.f32 1.0, %v2737
  %v2739 = vtanh.pop %v2732
  %v2740 = vmul.f32 %v2738, %v2618
  %2742 = vrot.lane.b32.xlu0 %v2739, 64
  %v2743 = vpop.permute.xlu0 %2742
  %v2745 = vmul.f32 %v2738, %v2743
  %2747 = vrot.lane.b32.xlu0 %v2745, 32
  %v2748 = vpop.permute.xlu0 %2747
  %v2750 = vadd.f32 %v2740, %v2748
  %v2751 = vtanh.pop %v2750
  %2753 = vrot.lane.b32.xlu0 %v2751, 64
  %v2754 = vpop.permute.xlu0 %2753
  %v2756 = vmul.f32 %v2738, %v2754
  %v2757 = vld [vmem:[%s7] sm:$0xff]
  %v2758 = vld [vmem:[%s7 + $0x8] sm:$0xff]
  %v2759 = vld [vmem:[%s7 + $0x10] sm:$0xff]
  %v2760 = vld [vmem:[%s7 + $0x18] sm:$0xff]
  %v2761 = vld [vmem:[%s7 + $0x20] sm:$0xff]
  %v2762 = vld [vmem:[%s7 + $0x28] sm:$0xff]
  %v2763 = vld [vmem:[%s7 + $0x30] sm:$0xff]
  %v2764 = vld [vmem:[%s7 + $0x38] sm:$0xff]
  %2765 = vrot.lane.b32.xlu0 %v1838, 32
  %v2766 = vpop.permute.xlu0 %2765
  %v2767 = vsel %vm363, %v2766, 0
  %2769 = vmatprep.subr.mxu0 0.0
  %2770 = vmatpush1.msra.mxu0 %v2761
  %2771 = vmatprep.subr.mxu0 0.0
  %2772 = vmatpush1.msra.mxu0 %v2762
  %2773 = vmatprep.subr.mxu0 0.0
  %2774 = vmatpush1.msra.mxu0 %v2763
  %2775 = vmatprep.subr.mxu0 0.0
  %2776 = vmatpush1.msra.mxu0 %v2764
  %2777 = vmatprep.subr.mxu0 0.0
  %2778 = vmatpush1.msra.mxu0 0.0
  %2779 = vmatprep.subr.mxu0 0.0
  %2780 = vmatpush1.msra.mxu0 0.0
  %2781 = vmatprep.subr.mxu0 0.0
  %2782 = vmatpush1.msra.mxu0 0.0
  %2783 = vmatprep.subr.mxu0 0.0
  %2784 = vmatpush1.msra.mxu0 0.0
  %2785 = vmatprep.subr.mxu0 0.0
  %2786 = vmatpush1.msra.mxu0 0.0
  %2787 = vmatprep.subr.mxu0 0.0
  %2788 = vmatpush1.msra.mxu0 0.0
  %2789 = vmatprep.subr.mxu0 0.0
  %2790 = vmatpush1.msra.mxu0 0.0
  %2791 = vmatprep.subr.mxu0 0.0
  %2792 = vmatpush1.msra.mxu0 0.0
  %2793 = vmatprep.subr.mxu0 0.0
  %2794 = vmatpush1.msra.mxu0 0.0
  %2795 = vmatprep.subr.mxu0 0.0
  %2796 = vmatpush1.msra.mxu0 0.0
  %2797 = vmatprep.subr.mxu0 0.0
  %2798 = vmatpush1.msra.mxu0 0.0
  %2799 = vmatprep.subr.mxu0 0.0
  %2800 = vmatpush1.msra.mxu0 0.0
  %2801 = vmatprep.subr.mxu0 0.0
  %2802 = vmatpush1.msra.mxu0 0.0
  %2803 = vmatprep.subr.mxu0 0.0
  %2804 = vmatpush1.msra.mxu0 0.0
  %2805 = vmatprep.subr.mxu0 0.0
  %2806 = vmatpush1.msra.mxu0 0.0
  %2807 = vmatprep.subr.mxu0 0.0
  %2808 = vmatpush1.msra.mxu0 0.0
  %2809 = vmatprep.subr.mxu0 0.0
  %2810 = vmatpush1.msra.mxu0 0.0
  %2811 = vmatprep.subr.mxu0 0.0
  %2812 = vmatpush1.msra.mxu0 0.0
  %2813 = vmatprep.subr.mxu0 0.0
  %2814 = vmatpush1.msra.mxu0 0.0
  %2815 = vmatprep.subr.mxu0 0.0
  %2816 = vmatpush1.msra.mxu0 0.0
  %2817 = vmatprep.subr.mxu0 0.0
  %2818 = vmatpush1.msra.mxu0 0.0
  %2819 = vmatprep.subr.mxu0 0.0
  %2820 = vmatpush1.msra.mxu0 0.0
  %2821 = vmatprep.subr.mxu0 0.0
  %2822 = vmatpush1.msra.mxu0 0.0
  %2823 = vmatprep.subr.mxu0 0.0
  %2824 = vmatpush1.msra.mxu0 0.0
  %2825 = vmatprep.subr.mxu0 0.0
  %2826 = vmatpush1.msra.mxu0 0.0
  %2827 = vmatprep.subr.mxu0 0.0
  %2828 = vmatpush1.msra.mxu0 0.0
  %2829 = vmatprep.subr.mxu0 0.0
  %2830 = vmatpush1.msra.mxu0 0.0
  %2831 = vmatprep.subr.mxu0 0.0
  %2832 = vmatpush1.msra.mxu0 0.0
  %2833 = vmatprep.mubr.f32.mxu0 0.0
  %2834 = vmatmul.mubr.f32.gmra.mrb[0].mxu0 %v2767
  %v2835 = vpop.f32.mrb[0].mxu0
  %v2836 = vadd.f32 0.0, %v2835
  %v2837 = vpop.f32.mrb[0].mxu0
  %2838 = vdwg.mxu0
  %2840 = vrot.lane.b32.xlu0 %v2756, 32
  %v2841 = vpop.permute.xlu0 %2840
  %v2842 = vsel %vm363, %v2841, 0
  %2844 = vmatprep.subr.mxu0 0.0
  %2845 = vmatpush1.msra.mxu0 %v2757
  %2846 = vmatprep.subr.mxu0 0.0
  %2847 = vmatpush1.msra.mxu0 %v2758
  %2848 = vmatprep.subr.mxu0 0.0
  %2849 = vmatpush1.msra.mxu0 %v2759
  %2850 = vmatprep.subr.mxu0 0.0
  %2851 = vmatpush1.msra.mxu0 %v2760
  %2852 = vmatprep.subr.mxu0 0.0
  %2853 = vmatpush1.msra.mxu0 0.0
  %2854 = vmatprep.subr.mxu0 0.0
  %2855 = vmatpush1.msra.mxu0 0.0
  %2856 = vmatprep.subr.mxu0 0.0
  %2857 = vmatpush1.msra.mxu0 0.0
  %2858 = vmatprep.subr.mxu0 0.0
  %2859 = vmatpush1.msra.mxu0 0.0
  %2860 = vmatprep.subr.mxu0 0.0
  %2861 = vmatpush1.msra.mxu0 0.0
  %2862 = vmatprep.subr.mxu0 0.0
  %2863 = vmatpush1.msra.mxu0 0.0
  %2864 = vmatprep.subr.mxu0 0.0
  %2865 = vmatpush1.msra.mxu0 0.0
  %2866 = vmatprep.subr.mxu0 0.0
  %2867 = vmatpush1.msra.mxu0 0.0
  %2868 = vmatprep.subr.mxu0 0.0
  %2869 = vmatpush1.msra.mxu0 0.0
  %2870 = vmatprep.subr.mxu0 0.0
  %2871 = vmatpush1.msra.mxu0 0.0
  %2872 = vmatprep.subr.mxu0 0.0
  %2873 = vmatpush1.msra.mxu0 0.0
  %2874 = vmatprep.subr.mxu0 0.0
  %2875 = vmatpush1.msra.mxu0 0.0
  %2876 = vmatprep.subr.mxu0 0.0
  %2877 = vmatpush1.msra.mxu0 0.0
  %2878 = vmatprep.subr.mxu0 0.0
  %2879 = vmatpush1.msra.mxu0 0.0
  %2880 = vmatprep.subr.mxu0 0.0
  %2881 = vmatpush1.msra.mxu0 0.0
  %2882 = vmatprep.subr.mxu0 0.0
  %2883 = vmatpush1.msra.mxu0 0.0
  %2884 = vmatprep.subr.mxu0 0.0
  %2885 = vmatpush1.msra.mxu0 0.0
  %2886 = vmatprep.subr.mxu0 0.0
  %2887 = vmatpush1.msra.mxu0 0.0
  %2888 = vmatprep.subr.mxu0 0.0
  %2889 = vmatpush1.msra.mxu0 0.0
  %2890 = vmatprep.subr.mxu0 0.0
  %2891 = vmatpush1.msra.mxu0 0.0
  %2892 = vmatprep.subr.mxu0 0.0
  %2893 = vmatpush1.msra.mxu0 0.0
  %2894 = vmatprep.subr.mxu0 0.0
  %2895 = vmatpush1.msra.mxu0 0.0
  %2896 = vmatprep.subr.mxu0 0.0
  %2897 = vmatpush1.msra.mxu0 0.0
  %2898 = vmatprep.subr.mxu0 0.0
  %2899 = vmatpush1.msra.mxu0 0.0
  %2900 = vmatprep.subr.mxu0 0.0
  %2901 = vmatpush1.msra.mxu0 0.0
  %2902 = vmatprep.subr.mxu0 0.0
  %2903 = vmatpush1.msra.mxu0 0.0
  %2904 = vmatprep.subr.mxu0 0.0
  %2905 = vmatpush1.msra.mxu0 0.0
  %2906 = vmatprep.subr.mxu0 0.0
  %2907 = vmatpush1.msra.mxu0 0.0
  %2908 = vmatprep.mubr.f32.mxu0 0.0
  %2909 = vmatmul.mubr.f32.gmra.mrb[0].mxu0 %v2842
  %v2910 = vpop.f32.mrb[0].mxu0
  %v2911 = vadd.f32 %v2836, %v2910
  %v2912 = vpop.f32.mrb[0].mxu0
  %2913 = vdwg.mxu0
  %v2914 = vld [vmem:[#allocation6] sm:$0x1]
  %v2916 = vlaneseq
  %v2917 = vshrl.u32 %v2916, 7
  %v2918 = vsub.s32 0, %v2917
  %v2919 = vrot.slane %v2914, %v2918
  %v2921 = vadd.f32 %v2911, %v2919
  %vm2922 = vcmask 7168
  %2923 = vst.msk [vmem:[%s9] sm:$0xff] %vm2922, %v2921
  // Predicated region
  $region38: #{rnn_base_forward.1} parent=0 // pred_check
    _
  $region39: #{rnn_base_forward.1} parent=0 // pred_check_branch
    %2925 = sbr.rel (0) target = $region41
  $region40: #{rnn_base_forward.1} parent=0 // pred_region
    _
  $region41: #{rnn_base_forward.1} parent=0 // pred_fallthru
    _
  // Predicated region
  $region42: #{rnn_base_forward.1} parent=0 // pred_check
    _
  $region43: #{rnn_base_forward.1} parent=0 // pred_check_branch
    %2927 = sbr.rel (0) target = $region45
  $region44: #{rnn_base_forward.1} parent=0 // pred_region
    _
  $region45: #{rnn_base_forward.1} parent=0 // pred_fallthru
    _

</llo_original>
